<compile_context>
chip_gen: v7x
topology: tpu7x:2x2x1
jax: 0.10.0
libtpu: 0.0.40
codegen_flags: <defaults>
</compile_context>

<pallas_src>
import functools

import jax
import jax.numpy as jnp
from jax.experimental import pallas as pl
from jax.experimental.pallas import tpu as pltpu


def _layer_norm(x, g, b, eps=1e-5):
    mu = jnp.mean(x, axis=-1, keepdims=True)
    var = jnp.mean((x - mu) ** 2, axis=-1, keepdims=True)
    return (x - mu) * jax.lax.rsqrt(var + eps) * g + b


def _transformer_block_kernel(x_ref,
                              g1, b1, g2, b2, g3, b3, g4, b4,
                              wq_ref, wk_ref, wv_ref, wo_ref,
                              w1_ref, w2_ref,
                              out_ref,
                              k_scr, v_scr,
                              *, n_heads, q_block, approx_recip):
    qt = pl.program_id(1)
    f32 = jnp.float32
    cd = wq_ref.dtype                      # MXU operand dtype (bf16 by default)

    L = x_ref.shape[1]
    E = x_ref.shape[2]
    hd = E // n_heads
    Lq = q_block

    # ---- K/V once per batch (qt == 0); scratch persists across the sequential qt axis.
    @pl.when(qt == 0)
    def _():
        h_all = _layer_norm(x_ref[0], g1[...], b1[...]).astype(cd)          # (L, E)
        k = jnp.dot(h_all, wk_ref[...], preferred_element_type=f32)         # (L, E)
        v = jnp.dot(h_all, wv_ref[...], preferred_element_type=f32)
        # cast before the head transpose -> half the XLU relayout traffic
        k_scr[...] = jnp.transpose(k.astype(cd).reshape(L, n_heads, hd), (1, 0, 2))
        v_scr[...] = jnp.transpose(v.astype(cd).reshape(L, n_heads, hd), (1, 0, 2))

    # ---- query tile (also the residual), sliced from the resident full-L block ----
    q_start = pl.multiple_of(qt * q_block, q_block)
    xq = x_ref[0, pl.ds(q_start, q_block), :]                                # (Lq, E) f32
    hq = _layer_norm(xq, g1[...], b1[...]).astype(cd)
    # 1/sqrt(head_dim) is folded into wq on the host.
    q = jnp.dot(hq, wq_ref[...], preferred_element_type=f32)                 # (Lq, E)
    q3 = jnp.transpose(q.astype(cd).reshape(Lq, n_heads, hd), (1, 0, 2))     # (H, Lq, hd)

    # ---- flash-style online softmax over causal KV tiles (kv_block == q_block) ----
    def attend(k_t, v_t, m_i, l_i, acc, mask=None):
        s = jnp.einsum('hqd,hkd->hqk', q3, k_t, preferred_element_type=f32)  # (H,Lq,kb)
        if mask is not None:
            s = jnp.where(mask, s, jnp.float32(-1e30))
        m_new = jnp.maximum(m_i, s.max(-1, keepdims=True))
        alpha = jnp.exp(m_i - m_new)
        p = jnp.exp(s - m_new)
        l_new = alpha * l_i + p.sum(-1, keepdims=True)
        acc_new = alpha * acc + jnp.einsum('hqk,hkd->hqd', p.astype(cd), v_t,
                                           preferred_element_type=f32)
        return m_new, l_new, acc_new

    def kv_step(t, carry):
        m_i, l_i, acc = carry
        start = pl.multiple_of(t * q_block, q_block)
        k_t = k_scr[:, pl.ds(start, q_block), :]
        v_t = v_scr[:, pl.ds(start, q_block), :]
        return attend(k_t, v_t, m_i, l_i, acc)          # fully-visible tile: no mask

    m_i = jnp.full((n_heads, Lq, 1), -jnp.inf, f32)
    l_i = jnp.zeros((n_heads, Lq, 1), f32)
    acc = jnp.zeros((n_heads, Lq, hd), f32)
    # only tiles strictly before the diagonal — causal tile skipping.
    m_i, l_i, acc = jax.lax.fori_loop(0, qt, kv_step, (m_i, l_i, acc))

    # diagonal tile with the triangular mask
    k_d = k_scr[:, pl.ds(q_start, q_block), :]
    v_d = v_scr[:, pl.ds(q_start, q_block), :]
    row = jax.lax.broadcasted_iota(jnp.int32, (Lq, Lq), 0)
    col = jax.lax.broadcasted_iota(jnp.int32, (Lq, Lq), 1)
    m_i, l_i, acc = attend(k_d, v_d, m_i, l_i, acc, mask=(col <= row)[None, :, :])

    if approx_recip:
        ctx = acc * pl.reciprocal(l_i, approx=True)      # bf16 path: EUP vrcp
    else:
        ctx = acc / l_i                                  # f32 validation path: exact

    # output projection: cast then relayout (H,Lq,hd)->(Lq,E), one full-depth MXU dot
    ctx2d = jnp.transpose(ctx.astype(cd), (1, 0, 2)).reshape(Lq, E)
    attn = jnp.dot(ctx2d, wo_ref[...], preferred_element_type=f32)           # (Lq, E)

    # ---- residual + post-attention LayerNorm ----
    x2 = xq + _layer_norm(attn, g2[...], b2[...])

    # ---- MLP: Linear -> SwiGLU -> LayerNorm -> Linear (dropout p=0 identity) ----
    m = _layer_norm(x2, g3[...], b3[...]).astype(cd)
    u = jnp.dot(m, w1_ref[...], preferred_element_type=f32)                  # (Lq, 2H)
    Hm = w2_ref.shape[0]
    a_half, gate = u[:, :Hm], u[:, Hm:]
    sw = (gate * jax.nn.sigmoid(gate)) * a_half                              # silu(gate)*a
    sw = _layer_norm(sw, g4[...], b4[...]).astype(cd)
    mlp = jnp.dot(sw, w2_ref[...], preferred_element_type=f32)               # (Lq, E)

    out_ref[0] = (x2 + mlp).astype(out_ref.dtype)


def transformer_block(x, params, n_heads, *, q_block=None,
                      compute_dtype=jnp.bfloat16):
    """x: (N, L, E) float32, batch-first. Returns (N, L, E). Causal self-attention."""
    N, L, E = x.shape
    Hm = params["w2"].shape[1]
    assert E % n_heads == 0, "d_model must be divisible by n_heads"
    hd = E // n_heads

    # Per-generation VMEM budget (v5e/v6e: 128 MiB, v7x: 64 MiB per TC).
    try:
        vmem_cap = int(pltpu.get_tpu_info().vmem_capacity_bytes)
    except Exception:
        vmem_cap = 64 * 1024 * 1024                      # conservative (v7x per-TC)
    vmem_limit = min(int(vmem_cap * 0.85), 100 * 1024 * 1024)

    if q_block is None:
        tgt = 256 if vmem_cap <= 64 * 1024 * 1024 else 512
        q_block = L if (L <= tgt or L % tgt != 0) else tgt
    assert L % q_block == 0 and (q_block == L or q_block % 8 == 0)
    num_qt = L // q_block

    f32 = jnp.float32
    cd = compute_dtype
    scale = 1.0 / (hd ** 0.5)

    # Pre-transpose weights once on the host (no in-kernel .T), fold q-scale into wq,
    # and store in the MXU compute dtype (halves HBM traffic + VMEM residency).
    wq = (params["wq"].T * scale).astype(cd)             # (E, E)  in x out
    wk = params["wk"].T.astype(cd)
    wv = params["wv"].T.astype(cd)
    wo = params["wo"].T.astype(cd)                       # (E, E)
    w1 = params["w1"].T.astype(cd)                       # (E, 2H)
    w2 = params["w2"].T.astype(cd)                       # (H, E)

    def row(p):
        return p.reshape(1, -1).astype(f32)

    g1, b1 = row(params["g1"]), row(params["b1"])
    g2, b2 = row(params["g2"]), row(params["b2"])
    g3, b3 = row(params["g3"]), row(params["b3"])
    g4, b4 = row(params["g4"]), row(params["b4"])

    kern = functools.partial(
        _transformer_block_kernel, n_heads=n_heads, q_block=q_block,
        approx_recip=(jnp.dtype(cd) != jnp.dtype(jnp.float32)))

    def const_spec(arr):
        shp = arr.shape
        return pl.BlockSpec(shp, lambda b, qt: (0,) * len(shp))

    in_specs = [
        # Full-L x block per batch: block index only changes with b, so it is DMA'd
        # once per batch; the query tile is sliced from it in-kernel.
        pl.BlockSpec((1, L, E), lambda b, qt: (b, 0, 0)),
        const_spec(g1), const_spec(b1), const_spec(g2), const_spec(b2),
        const_spec(g3), const_spec(b3), const_spec(g4), const_spec(b4),
        const_spec(wq), const_spec(wk), const_spec(wv), const_spec(wo),
        const_spec(w1), const_spec(w2),
    ]

    weight_bytes = sum(int(w.size) for w in (wq, wk, wv, wo, w1, w2)) * jnp.dtype(cd).itemsize
    ln_bytes = sum(int(p.size) for p in (g1, b1, g2, b2, g3, b3, g4, b4)) * 4
    cost = pl.CostEstimate(
        flops=int(2 * N * L * (4 * E * E + 3 * E * Hm)
                  + 2 * N * n_heads * (L * L // 2) * hd * 2),
        transcendentals=int(N * n_heads * (L * L // 2) + N * L * Hm),
        bytes_accessed=int(2 * N * L * E * 4 + weight_bytes + ln_bytes),
    )

    grid_spec = pltpu.PrefetchScalarGridSpec(
        num_scalar_prefetch=0,
        grid=(N, num_qt),
        in_specs=in_specs,
        out_specs=pl.BlockSpec((1, q_block, E), lambda b, qt: (b, qt, 0)),
        scratch_shapes=[pltpu.VMEM((n_heads, L, hd), cd),   # K per head, whole seq
                        pltpu.VMEM((n_heads, L, hd), cd)],  # V per head, whole seq
    )

    return pl.pallas_call(
        kern,
        out_shape=jax.ShapeDtypeStruct((N, L, E), x.dtype),
        grid_spec=grid_spec,
        compiler_params=pltpu.CompilerParams(
            # batch may shard across TCs (v7x); qt must be sequential because the
            # per-batch K/V scratch is produced at qt == 0 and reused at qt > 0.
            dimension_semantics=("parallel", "arbitrary"),
            vmem_limit_bytes=vmem_limit),
        cost_estimate=cost,
    )(x, g1, b1, g2, b2, g3, b3, g4, b4, wq, wk, wv, wo, w1, w2)


def reference(x, params, n_heads):
    """Pure-JAX f32 reference mirroring the PyTorch forward (causal mask)."""
    def ln(v, g, b, eps=1e-5):
        mu = v.mean(-1, keepdims=True)
        var = ((v - mu) ** 2).mean(-1, keepdims=True)
        return (v - mu) / jnp.sqrt(var + eps) * g + b

    N, L, E = x.shape
    hd = E // n_heads
    causal = jnp.tril(jnp.ones((L, L), bool))
    mask = jnp.where(causal, 0.0, -1e30).astype(jnp.float32)

    h = ln(x, params["g1"], params["b1"])
    q = (h @ params["wq"].T) / jnp.sqrt(jnp.float32(hd))
    k = h @ params["wk"].T
    v = h @ params["wv"].T
    qh = q.reshape(N, L, n_heads, hd).transpose(0, 2, 1, 3)
    kh = k.reshape(N, L, n_heads, hd).transpose(0, 2, 1, 3)
    vh = v.reshape(N, L, n_heads, hd).transpose(0, 2, 1, 3)
    s = qh @ kh.transpose(0, 1, 3, 2) + mask
    p = jax.nn.softmax(s, axis=-1)
    ctx = (p @ vh).transpose(0, 2, 1, 3).reshape(N, L, E)
    attn = ctx @ params["wo"].T
    x2 = x + ln(attn, params["g2"], params["b2"])
    m = ln(x2, params["g3"], params["b3"])
    u = m @ params["w1"].T
    H = params["w2"].shape[1]
    a, gate = u[..., :H], u[..., H:]
    sw = gate * jax.nn.sigmoid(gate) * a
    sw = ln(sw, params["g4"], params["b4"])
    return x2 + sw @ params["w2"].T


if __name__ == "__main__":
    # Small shapes: batch=2, seq=8, d_model=32, n_heads=4, mlp_scale=4 (H=128).
    # NOTE: for real configs E should be a multiple of 128 for lane-dense stores,
    #       and head_dim 128 (v5e) / 128-256 (v6e/v7x) keeps the MXU contraction deep.
    N, L, E = 2, 8, 32
    n_heads, mlp_scale = 4, 4
    Hm = E * mlp_scale
    f32 = jnp.float32

    key = jax.random.PRNGKey(0)
    ks = jax.random.split(key, 8)

    params = {
        # LayerNorm params (PyTorch init: gamma=1, beta=0)
        "g1": jnp.ones((E,), f32), "b1": jnp.zeros((E,), f32),
        "g2": jnp.ones((E,), f32), "b2": jnp.zeros((E,), f32),
        "g3": jnp.ones((E,), f32), "b3": jnp.zeros((E,), f32),
        "g4": jnp.ones((Hm,), f32), "b4": jnp.zeros((Hm,), f32),
        # MHA in/out projections (bias=False), stored torch-style (out, in)
        "wq": 0.05 * jax.random.normal(ks[0], (E, E), f32),
        "wk": 0.05 * jax.random.normal(ks[1], (E, E), f32),
        "wv": 0.05 * jax.random.normal(ks[2], (E, E), f32),
        "wo": 0.05 * jax.random.normal(ks[3], (E, E), f32),
        # MLP: Linear(E -> 2H, no bias), Linear(H -> E, no bias), torch-style (out, in)
        "w1": 0.05 * jax.random.normal(ks[4], (2 * Hm, E), f32),
        "w2": 0.05 * jax.random.normal(ks[5], (E, Hm), f32),
    }
    x = jax.random.normal(ks[6], (N, L, E), f32)
    ref = reference(x, params, n_heads)

    # f32 MXU-operand path (exact softmax divide): tight check.
    out_f32 = jax.block_until_ready(
        transformer_block(x, params, n_heads, compute_dtype=jnp.float32))
    assert out_f32.shape == (N, L, E) and out_f32.dtype == f32
    assert jnp.allclose(out_f32, ref, atol=5e-3, rtol=5e-3), (
        f"f32 max abs err {jnp.max(jnp.abs(out_f32 - ref))}")

    # Default bf16 MXU-operand path (f32 accumulation): looser tolerance.
    out_bf16 = jax.block_until_ready(transformer_block(x, params, n_heads))
    assert out_bf16.shape == (N, L, E) and out_bf16.dtype == f32
    assert jnp.allclose(out_bf16, ref, atol=3e-2, rtol=3e-2), (
        f"bf16 max abs err {jnp.max(jnp.abs(out_bf16 - ref))}")

    # Multi-q-tile path: exercises per-batch K/V precompute + the flash KV loop.
    L2 = 16
    x2 = jax.random.normal(ks[7], (N, L2, E), f32)
    ref2 = reference(x2, params, n_heads)
    out2_f32 = jax.block_until_ready(
        transformer_block(x2, params, n_heads, q_block=8, compute_dtype=jnp.float32))
    assert jnp.allclose(out2_f32, ref2, atol=5e-3, rtol=5e-3), (
        f"tiled f32 max abs err {jnp.max(jnp.abs(out2_f32 - ref2))}")
    out2_bf16 = jax.block_until_ready(
        transformer_block(x2, params, n_heads, q_block=8))
    assert jnp.allclose(out2_bf16, ref2, atol=3e-2, rtol=3e-2), (
        f"tiled bf16 max abs err {jnp.max(jnp.abs(out2_bf16 - ref2))}")

    print("KERNEL_OK")
</pallas_src>

<mosaic_0001>
module attributes {stable_mosaic.version = 11 : i64} {
  func.func @_transformer_block_kernel(%arg0: i32, %arg1: i32, %arg2: memref<1x8x32xf32, #tpu.memory_space<vmem>>, %arg3: memref<1x32xf32, #tpu.memory_space<vmem>>, %arg4: memref<1x32xf32, #tpu.memory_space<vmem>>, %arg5: memref<1x32xf32, #tpu.memory_space<vmem>>, %arg6: memref<1x32xf32, #tpu.memory_space<vmem>>, %arg7: memref<1x32xf32, #tpu.memory_space<vmem>>, %arg8: memref<1x32xf32, #tpu.memory_space<vmem>>, %arg9: memref<1x128xf32, #tpu.memory_space<vmem>>, %arg10: memref<1x128xf32, #tpu.memory_space<vmem>>, %arg11: memref<32x32xf32, #tpu.memory_space<vmem>>, %arg12: memref<32x32xf32, #tpu.memory_space<vmem>>, %arg13: memref<32x32xf32, #tpu.memory_space<vmem>>, %arg14: memref<32x32xf32, #tpu.memory_space<vmem>>, %arg15: memref<32x256xf32, #tpu.memory_space<vmem>>, %arg16: memref<128x32xf32, #tpu.memory_space<vmem>>, %arg17: memref<1x8x32xf32, #tpu.memory_space<vmem>>, %arg18: memref<4x8x8xf32, #tpu.memory_space<vmem>>, %arg19: memref<4x8x8xf32, #tpu.memory_space<vmem>>) attributes {dimension_semantics = [#tpu.dimension_semantics<parallel>, #tpu.dimension_semantics<arbitrary>], iteration_bounds = array<i64: 2, 1>, scalar_prefetch = 0 : i64, scratch_operands = 2 : i64, tpu.core_type = #tpu.core_type<tc>, window_params = [{transform_indices = @transform_0, window_bounds = array<i64: 1, 8, 32>}, {pipeline_mode = #tpu.pipeline_mode<synchronous>, transform_indices = @transform_1, window_bounds = array<i64: 1, 32>}, {pipeline_mode = #tpu.pipeline_mode<synchronous>, transform_indices = @transform_2, window_bounds = array<i64: 1, 32>}, {pipeline_mode = #tpu.pipeline_mode<synchronous>, transform_indices = @transform_3, window_bounds = array<i64: 1, 32>}, {pipeline_mode = #tpu.pipeline_mode<synchronous>, transform_indices = @transform_4, window_bounds = array<i64: 1, 32>}, {pipeline_mode = #tpu.pipeline_mode<synchronous>, transform_indices = @transform_5, window_bounds = array<i64: 1, 32>}, {pipeline_mode = #tpu.pipeline_mode<synchronous>, transform_indices = @transform_6, window_bounds = array<i64: 1, 32>}, {pipeline_mode = #tpu.pipeline_mode<synchronous>, transform_indices = @transform_7, window_bounds = array<i64: 1, 128>}, {pipeline_mode = #tpu.pipeline_mode<synchronous>, transform_indices = @transform_8, window_bounds = array<i64: 1, 128>}, {pipeline_mode = #tpu.pipeline_mode<synchronous>, transform_indices = @transform_9, window_bounds = array<i64: 32, 32>}, {pipeline_mode = #tpu.pipeline_mode<synchronous>, transform_indices = @transform_10, window_bounds = array<i64: 32, 32>}, {pipeline_mode = #tpu.pipeline_mode<synchronous>, transform_indices = @transform_11, window_bounds = array<i64: 32, 32>}, {pipeline_mode = #tpu.pipeline_mode<synchronous>, transform_indices = @transform_12, window_bounds = array<i64: 32, 32>}, {pipeline_mode = #tpu.pipeline_mode<synchronous>, transform_indices = @transform_13, window_bounds = array<i64: 32, 256>}, {pipeline_mode = #tpu.pipeline_mode<synchronous>, transform_indices = @transform_14, window_bounds = array<i64: 128, 32>}, {transform_indices = @transform_15, window_bounds = array<i64: 1, 8, 32>}]} {
    %c0_i32 = arith.constant 0 : i32
    %0 = arith.cmpi eq, %arg1, %c0_i32 : i32
    %1 = arith.extui %0 : i1 to i32
    %c0_i32_0 = arith.constant 0 : i32
    %2 = arith.cmpi ne, %1, %c0_i32_0 : i32
    scf.if %2 {
      %c0_66 = arith.constant 0 : index
      %c0_67 = arith.constant 0 : index
      %c0_68 = arith.constant 0 : index
      %167 = vector.load %arg2[%c0_66, %c0_67, %c0_68] : memref<1x8x32xf32, #tpu.memory_space<vmem>>, vector<1x8x32xf32>
      %168 = vector.shape_cast %167 : vector<1x8x32xf32> to vector<8x32xf32>
      %c0_69 = arith.constant 0 : index
      %c0_70 = arith.constant 0 : index
      %169 = vector.load %arg3[%c0_69, %c0_70] : memref<1x32xf32, #tpu.memory_space<vmem>>, vector<1x32xf32>
      %c0_71 = arith.constant 0 : index
      %c0_72 = arith.constant 0 : index
      %170 = vector.load %arg4[%c0_71, %c0_72] : memref<1x32xf32, #tpu.memory_space<vmem>>, vector<1x32xf32>
      %cst_73 = arith.constant dense<0.000000e+00> : vector<8xf32>
      %171 = vector.multi_reduction <add>, %168, %cst_73 [1] : vector<8x32xf32> to vector<8xf32>
      %172 = vector.shape_cast %171 : vector<8xf32> to vector<8x1xf32>
      %cst_74 = arith.constant 3.200000e+01 : f32
      %173 = vector.broadcast %cst_74 : f32 to vector<8x1xf32>
      %174 = arith.divf %172, %173 : vector<8x1xf32>
      %175 = vector.broadcast %174 : vector<8x1xf32> to vector<8x32xf32>
      %176 = arith.subf %168, %175 : vector<8x32xf32>
      %177 = arith.mulf %176, %176 : vector<8x32xf32>
      %cst_75 = arith.constant dense<0.000000e+00> : vector<8xf32>
      %178 = vector.multi_reduction <add>, %177, %cst_75 [1] : vector<8x32xf32> to vector<8xf32>
      %179 = vector.shape_cast %178 : vector<8xf32> to vector<8x1xf32>
      %cst_76 = arith.constant 3.200000e+01 : f32
      %180 = vector.broadcast %cst_76 : f32 to vector<8x1xf32>
      %181 = arith.divf %179, %180 : vector<8x1xf32>
      %182 = vector.broadcast %174 : vector<8x1xf32> to vector<8x32xf32>
      %183 = arith.subf %168, %182 : vector<8x32xf32>
      %cst_77 = arith.constant 9.99999974E-6 : f32
      %184 = vector.broadcast %cst_77 : f32 to vector<8x1xf32>
      %185 = arith.addf %181, %184 : vector<8x1xf32>
      %186 = math.rsqrt %185 : vector<8x1xf32>
      %187 = vector.broadcast %186 : vector<8x1xf32> to vector<8x32xf32>
      %188 = arith.mulf %183, %187 : vector<8x32xf32>
      %189 = vector.broadcast %169 : vector<1x32xf32> to vector<8x32xf32>
      %190 = arith.mulf %188, %189 : vector<8x32xf32>
      %191 = vector.broadcast %170 : vector<1x32xf32> to vector<8x32xf32>
      %192 = arith.addf %190, %191 : vector<8x32xf32>
      %c0_78 = arith.constant 0 : index
      %c0_79 = arith.constant 0 : index
      %193 = vector.load %arg12[%c0_78, %c0_79] : memref<32x32xf32, #tpu.memory_space<vmem>>, vector<32x32xf32>
      %cst_80 = arith.constant dense<0.000000e+00> : vector<8x32xf32>
      %194 = tpu.matmul %192, %193, %cst_80 {dimension_numbers = #tpu.dot_dimension_numbers<[1], [0], [0], [1], [0, 0, 1, 1], [], []>} : vector<8x32xf32>, vector<32x32xf32>, vector<8x32xf32> -> vector<8x32xf32>
      %c0_81 = arith.constant 0 : index
      %c0_82 = arith.constant 0 : index
      %195 = vector.load %arg13[%c0_81, %c0_82] : memref<32x32xf32, #tpu.memory_space<vmem>>, vector<32x32xf32>
      %cst_83 = arith.constant dense<0.000000e+00> : vector<8x32xf32>
      %196 = tpu.matmul %192, %195, %cst_83 {dimension_numbers = #tpu.dot_dimension_numbers<[1], [0], [0], [1], [0, 0, 1, 1], [], []>} : vector<8x32xf32>, vector<32x32xf32>, vector<8x32xf32> -> vector<8x32xf32>
      %197 = vector.shape_cast %194 : vector<8x32xf32> to vector<8x4x8xf32>
      %198 = tpu.transpose %197, [1, 0, 2] : vector<8x4x8xf32> -> vector<4x8x8xf32>
      %c0_84 = arith.constant 0 : index
      %c0_85 = arith.constant 0 : index
      %c0_86 = arith.constant 0 : index
      %199 = vector.load %arg18[%c0_84, %c0_85, %c0_86] : memref<4x8x8xf32, #tpu.memory_space<vmem>>, vector<4x8x8xf32>
      tpu.vector_store %arg18[%c0_84, %c0_85, %c0_86], %198 {strides = array<i32>} : memref<4x8x8xf32, #tpu.memory_space<vmem>>, vector<4x8x8xf32>,
      %200 = vector.shape_cast %196 : vector<8x32xf32> to vector<8x4x8xf32>
      %201 = tpu.transpose %200, [1, 0, 2] : vector<8x4x8xf32> -> vector<4x8x8xf32>
      %c0_87 = arith.constant 0 : index
      %c0_88 = arith.constant 0 : index
      %c0_89 = arith.constant 0 : index
      %202 = vector.load %arg19[%c0_87, %c0_88, %c0_89] : memref<4x8x8xf32, #tpu.memory_space<vmem>>, vector<4x8x8xf32>
      tpu.vector_store %arg19[%c0_87, %c0_88, %c0_89], %201 {strides = array<i32>} : memref<4x8x8xf32, #tpu.memory_space<vmem>>, vector<4x8x8xf32>,
    } else {
    }
    %c8_i32 = arith.constant 8 : i32
    %3 = arith.muli %arg1, %c8_i32 : i32
    %4 = tpu.assume_multiple %3, 8 : i32
    %c0 = arith.constant 0 : index
    %5 = arith.index_cast %4 : i32 to index
    %c0_1 = arith.constant 0 : index
    %6 = vector.load %arg2[%c0, %5, %c0_1] : memref<1x8x32xf32, #tpu.memory_space<vmem>>, vector<1x8x32xf32>
    %7 = vector.shape_cast %6 : vector<1x8x32xf32> to vector<8x32xf32>
    %c0_2 = arith.constant 0 : index
    %c0_3 = arith.constant 0 : index
    %8 = vector.load %arg3[%c0_2, %c0_3] : memref<1x32xf32, #tpu.memory_space<vmem>>, vector<1x32xf32>
    %c0_4 = arith.constant 0 : index
    %c0_5 = arith.constant 0 : index
    %9 = vector.load %arg4[%c0_4, %c0_5] : memref<1x32xf32, #tpu.memory_space<vmem>>, vector<1x32xf32>
    %cst = arith.constant dense<0.000000e+00> : vector<8xf32>
    %10 = vector.multi_reduction <add>, %7, %cst [1] : vector<8x32xf32> to vector<8xf32>
    %11 = vector.shape_cast %10 : vector<8xf32> to vector<8x1xf32>
    %cst_6 = arith.constant 3.200000e+01 : f32
    %12 = vector.broadcast %cst_6 : f32 to vector<8x1xf32>
    %13 = arith.divf %11, %12 : vector<8x1xf32>
    %14 = vector.broadcast %13 : vector<8x1xf32> to vector<8x32xf32>
    %15 = arith.subf %7, %14 : vector<8x32xf32>
    %16 = arith.mulf %15, %15 : vector<8x32xf32>
    %cst_7 = arith.constant dense<0.000000e+00> : vector<8xf32>
    %17 = vector.multi_reduction <add>, %16, %cst_7 [1] : vector<8x32xf32> to vector<8xf32>
    %18 = vector.shape_cast %17 : vector<8xf32> to vector<8x1xf32>
    %cst_8 = arith.constant 3.200000e+01 : f32
    %19 = vector.broadcast %cst_8 : f32 to vector<8x1xf32>
    %20 = arith.divf %18, %19 : vector<8x1xf32>
    %21 = vector.broadcast %13 : vector<8x1xf32> to vector<8x32xf32>
    %22 = arith.subf %7, %21 : vector<8x32xf32>
    %cst_9 = arith.constant 9.99999974E-6 : f32
    %23 = vector.broadcast %cst_9 : f32 to vector<8x1xf32>
    %24 = arith.addf %20, %23 : vector<8x1xf32>
    %25 = math.rsqrt %24 : vector<8x1xf32>
    %26 = vector.broadcast %25 : vector<8x1xf32> to vector<8x32xf32>
    %27 = arith.mulf %22, %26 : vector<8x32xf32>
    %28 = vector.broadcast %8 : vector<1x32xf32> to vector<8x32xf32>
    %29 = arith.mulf %27, %28 : vector<8x32xf32>
    %30 = vector.broadcast %9 : vector<1x32xf32> to vector<8x32xf32>
    %31 = arith.addf %29, %30 : vector<8x32xf32>
    %c0_10 = arith.constant 0 : index
    %c0_11 = arith.constant 0 : index
    %32 = vector.load %arg11[%c0_10, %c0_11] : memref<32x32xf32, #tpu.memory_space<vmem>>, vector<32x32xf32>
    %cst_12 = arith.constant dense<0.000000e+00> : vector<8x32xf32>
    %33 = tpu.matmul %31, %32, %cst_12 {dimension_numbers = #tpu.dot_dimension_numbers<[1], [0], [0], [1], [0, 0, 1, 1], [], []>} : vector<8x32xf32>, vector<32x32xf32>, vector<8x32xf32> -> vector<8x32xf32>
    %34 = vector.shape_cast %33 : vector<8x32xf32> to vector<8x4x8xf32>
    %35 = tpu.transpose %34, [1, 0, 2] : vector<8x4x8xf32> -> vector<4x8x8xf32>
    %cst_13 = arith.constant 0xFF800000 : f32
    %36 = vector.broadcast %cst_13 : f32 to vector<4x8x1xf32>
    %cst_14 = arith.constant 0.000000e+00 : f32
    %37 = vector.broadcast %cst_14 : f32 to vector<4x8x1xf32>
    %cst_15 = arith.constant 0.000000e+00 : f32
    %38 = vector.broadcast %cst_15 : f32 to vector<4x8x8xf32>
    %c0_i32_16 = arith.constant 0 : i32
    %39 = arith.subi %arg1, %c0_i32_16 : i32
    %40 = arith.addi %c0_i32_16, %39 : i32
    %c1_i32 = arith.constant 1 : i32
    %41:3 = scf.for %arg20 = %c0_i32_16 to %40 step %c1_i32 iter_args(%arg21 = %36, %arg22 = %37, %arg23 = %38) -> (vector<4x8x1xf32>, vector<4x8x1xf32>, vector<4x8x8xf32>)  : i32 {
      %c8_i32_66 = arith.constant 8 : i32
      %167 = arith.muli %arg20, %c8_i32_66 : i32
      %168 = tpu.assume_multiple %167, 8 : i32
      %c0_67 = arith.constant 0 : index
      %169 = arith.index_cast %168 : i32 to index
      %c0_68 = arith.constant 0 : index
      %170 = vector.load %arg18[%c0_67, %169, %c0_68] : memref<4x8x8xf32, #tpu.memory_space<vmem>>, vector<4x8x8xf32>
      %c0_69 = arith.constant 0 : index
      %171 = arith.index_cast %168 : i32 to index
      %c0_70 = arith.constant 0 : index
      %172 = vector.load %arg19[%c0_69, %171, %c0_70] : memref<4x8x8xf32, #tpu.memory_space<vmem>>, vector<4x8x8xf32>
      "tpu.trace_start"() <{level = 10 : i32, message = "hqd,hkd->hqk"}> : () -> ()
      %cst_71 = arith.constant dense<0.000000e+00> : vector<4x8x8xf32>
      %173 = tpu.matmul %35, %170, %cst_71 {dimension_numbers = #tpu.dot_dimension_numbers<[2], [2], [1], [1], [0, 0, 0, 1, 1, 1], [0], [0]>} : vector<4x8x8xf32>, vector<4x8x8xf32>, vector<4x8x8xf32> -> vector<4x8x8xf32>
      "tpu.trace_stop"() : () -> ()
      %cst_72 = arith.constant dense<0xFF800000> : vector<4x8xf32>
      %174 = vector.multi_reduction <maximumf>, %173, %cst_72 [2] : vector<4x8x8xf32> to vector<4x8xf32>
      %175 = vector.shape_cast %174 : vector<4x8xf32> to vector<4x8x1xf32>
      %176 = arith.maximumf %arg21, %175 : vector<4x8x1xf32>
      %177 = arith.subf %arg21, %176 : vector<4x8x1xf32>
      %178 = math.exp %177 : vector<4x8x1xf32>
      %179 = vector.broadcast %176 : vector<4x8x1xf32> to vector<4x8x8xf32>
      %180 = arith.subf %173, %179 : vector<4x8x8xf32>
      %181 = math.exp %180 : vector<4x8x8xf32>
      %182 = arith.mulf %178, %arg22 : vector<4x8x1xf32>
      %cst_73 = arith.constant dense<0.000000e+00> : vector<4x8xf32>
      %183 = vector.multi_reduction <add>, %181, %cst_73 [2] : vector<4x8x8xf32> to vector<4x8xf32>
      %184 = vector.shape_cast %183 : vector<4x8xf32> to vector<4x8x1xf32>
      %185 = arith.addf %182, %184 : vector<4x8x1xf32>
      %186 = vector.broadcast %178 : vector<4x8x1xf32> to vector<4x8x8xf32>
      %187 = arith.mulf %186, %arg23 : vector<4x8x8xf32>
      "tpu.trace_start"() <{level = 10 : i32, message = "hqk,hkd->hqd"}> : () -> ()
      %cst_74 = arith.constant dense<0.000000e+00> : vector<4x8x8xf32>
      %188 = tpu.matmul %181, %172, %cst_74 {dimension_numbers = #tpu.dot_dimension_numbers<[2], [1], [1], [2], [0, 0, 0, 1, 1, 2], [0], [0]>} : vector<4x8x8xf32>, vector<4x8x8xf32>, vector<4x8x8xf32> -> vector<4x8x8xf32>
      "tpu.trace_stop"() : () -> ()
      %189 = arith.addf %187, %188 : vector<4x8x8xf32>
      scf.yield %176, %185, %189 : vector<4x8x1xf32>, vector<4x8x1xf32>, vector<4x8x8xf32>
    }
    %c0_17 = arith.constant 0 : index
    %42 = arith.index_cast %4 : i32 to index
    %c0_18 = arith.constant 0 : index
    %43 = vector.load %arg18[%c0_17, %42, %c0_18] : memref<4x8x8xf32, #tpu.memory_space<vmem>>, vector<4x8x8xf32>
    %c0_19 = arith.constant 0 : index
    %44 = arith.index_cast %4 : i32 to index
    %c0_20 = arith.constant 0 : index
    %45 = vector.load %arg19[%c0_19, %44, %c0_20] : memref<4x8x8xf32, #tpu.memory_space<vmem>>, vector<4x8x8xf32>
    %46 = tpu.iota {dimensions = array<i32: 0>} : vector<8x8xi32>
    %47 = tpu.iota {dimensions = array<i32: 1>} : vector<8x8xi32>
    %48 = arith.cmpi sle, %47, %46 : vector<8x8xi32>
    %49 = vector.shape_cast %48 : vector<8x8xi1> to vector<1x8x8xi1>
    "tpu.trace_start"() <{level = 10 : i32, message = "hqd,hkd->hqk"}> : () -> ()
    %cst_21 = arith.constant dense<0.000000e+00> : vector<4x8x8xf32>
    %50 = tpu.matmul %35, %43, %cst_21 {dimension_numbers = #tpu.dot_dimension_numbers<[2], [2], [1], [1], [0, 0, 0, 1, 1, 1], [0], [0]>} : vector<4x8x8xf32>, vector<4x8x8xf32>, vector<4x8x8xf32> -> vector<4x8x8xf32>
    %cst_22 = arith.constant -1.000000e+30 : f32
    "tpu.trace_stop"() : () -> ()
    %51 = vector.shape_cast %49 : vector<1x8x8xi1> to vector<1x8x8xi1>
    %52 = vector.broadcast %51 : vector<1x8x8xi1> to vector<4x8x8xi1>
    %53 = vector.broadcast %cst_22 : f32 to vector<4x8x8xf32>
    %54 = arith.select %52, %50, %53 : vector<4x8x8xi1>, vector<4x8x8xf32>
    %cst_23 = arith.constant dense<0xFF800000> : vector<4x8xf32>
    %55 = vector.multi_reduction <maximumf>, %54, %cst_23 [2] : vector<4x8x8xf32> to vector<4x8xf32>
    %56 = vector.shape_cast %55 : vector<4x8xf32> to vector<4x8x1xf32>
    %57 = arith.maximumf %41#0, %56 : vector<4x8x1xf32>
    %58 = arith.subf %41#0, %57 : vector<4x8x1xf32>
    %59 = math.exp %58 : vector<4x8x1xf32>
    %60 = vector.broadcast %57 : vector<4x8x1xf32> to vector<4x8x8xf32>
    %61 = arith.subf %54, %60 : vector<4x8x8xf32>
    %62 = math.exp %61 : vector<4x8x8xf32>
    %63 = arith.mulf %59, %41#1 : vector<4x8x1xf32>
    %cst_24 = arith.constant dense<0.000000e+00> : vector<4x8xf32>
    %64 = vector.multi_reduction <add>, %62, %cst_24 [2] : vector<4x8x8xf32> to vector<4x8xf32>
    %65 = vector.shape_cast %64 : vector<4x8xf32> to vector<4x8x1xf32>
    %66 = arith.addf %63, %65 : vector<4x8x1xf32>
    %67 = vector.broadcast %59 : vector<4x8x1xf32> to vector<4x8x8xf32>
    %68 = arith.mulf %67, %41#2 : vector<4x8x8xf32>
    "tpu.trace_start"() <{level = 10 : i32, message = "hqk,hkd->hqd"}> : () -> ()
    %cst_25 = arith.constant dense<0.000000e+00> : vector<4x8x8xf32>
    %69 = tpu.matmul %62, %45, %cst_25 {dimension_numbers = #tpu.dot_dimension_numbers<[2], [1], [1], [2], [0, 0, 0, 1, 1, 2], [0], [0]>} : vector<4x8x8xf32>, vector<4x8x8xf32>, vector<4x8x8xf32> -> vector<4x8x8xf32>
    "tpu.trace_stop"() : () -> ()
    %70 = arith.addf %68, %69 : vector<4x8x8xf32>
    %71 = vector.broadcast %66 : vector<4x8x1xf32> to vector<4x8x8xf32>
    %72 = arith.divf %70, %71 : vector<4x8x8xf32>
    %73 = tpu.transpose %72, [1, 0, 2] : vector<4x8x8xf32> -> vector<8x4x8xf32>
    %74 = vector.shape_cast %73 : vector<8x4x8xf32> to vector<8x32xf32>
    %c0_26 = arith.constant 0 : index
    %c0_27 = arith.constant 0 : index
    %75 = vector.load %arg14[%c0_26, %c0_27] : memref<32x32xf32, #tpu.memory_space<vmem>>, vector<32x32xf32>
    %cst_28 = arith.constant dense<0.000000e+00> : vector<8x32xf32>
    %76 = tpu.matmul %74, %75, %cst_28 {dimension_numbers = #tpu.dot_dimension_numbers<[1], [0], [0], [1], [0, 0, 1, 1], [], []>} : vector<8x32xf32>, vector<32x32xf32>, vector<8x32xf32> -> vector<8x32xf32>
    %c0_29 = arith.constant 0 : index
    %c0_30 = arith.constant 0 : index
    %77 = vector.load %arg5[%c0_29, %c0_30] : memref<1x32xf32, #tpu.memory_space<vmem>>, vector<1x32xf32>
    %c0_31 = arith.constant 0 : index
    %c0_32 = arith.constant 0 : index
    %78 = vector.load %arg6[%c0_31, %c0_32] : memref<1x32xf32, #tpu.memory_space<vmem>>, vector<1x32xf32>
    %cst_33 = arith.constant dense<0.000000e+00> : vector<8xf32>
    %79 = vector.multi_reduction <add>, %76, %cst_33 [1] : vector<8x32xf32> to vector<8xf32>
    %80 = vector.shape_cast %79 : vector<8xf32> to vector<8x1xf32>
    %cst_34 = arith.constant 3.200000e+01 : f32
    %81 = vector.broadcast %cst_34 : f32 to vector<8x1xf32>
    %82 = arith.divf %80, %81 : vector<8x1xf32>
    %83 = vector.broadcast %82 : vector<8x1xf32> to vector<8x32xf32>
    %84 = arith.subf %76, %83 : vector<8x32xf32>
    %85 = arith.mulf %84, %84 : vector<8x32xf32>
    %cst_35 = arith.constant dense<0.000000e+00> : vector<8xf32>
    %86 = vector.multi_reduction <add>, %85, %cst_35 [1] : vector<8x32xf32> to vector<8xf32>
    %87 = vector.shape_cast %86 : vector<8xf32> to vector<8x1xf32>
    %cst_36 = arith.constant 3.200000e+01 : f32
    %88 = vector.broadcast %cst_36 : f32 to vector<8x1xf32>
    %89 = arith.divf %87, %88 : vector<8x1xf32>
    %90 = vector.broadcast %82 : vector<8x1xf32> to vector<8x32xf32>
    %91 = arith.subf %76, %90 : vector<8x32xf32>
    %cst_37 = arith.constant 9.99999974E-6 : f32
    %92 = vector.broadcast %cst_37 : f32 to vector<8x1xf32>
    %93 = arith.addf %89, %92 : vector<8x1xf32>
    %94 = math.rsqrt %93 : vector<8x1xf32>
    %95 = vector.broadcast %94 : vector<8x1xf32> to vector<8x32xf32>
    %96 = arith.mulf %91, %95 : vector<8x32xf32>
    %97 = vector.broadcast %77 : vector<1x32xf32> to vector<8x32xf32>
    %98 = arith.mulf %96, %97 : vector<8x32xf32>
    %99 = vector.broadcast %78 : vector<1x32xf32> to vector<8x32xf32>
    %100 = arith.addf %98, %99 : vector<8x32xf32>
    %101 = arith.addf %7, %100 : vector<8x32xf32>
    %c0_38 = arith.constant 0 : index
    %c0_39 = arith.constant 0 : index
    %102 = vector.load %arg7[%c0_38, %c0_39] : memref<1x32xf32, #tpu.memory_space<vmem>>, vector<1x32xf32>
    %c0_40 = arith.constant 0 : index
    %c0_41 = arith.constant 0 : index
    %103 = vector.load %arg8[%c0_40, %c0_41] : memref<1x32xf32, #tpu.memory_space<vmem>>, vector<1x32xf32>
    %cst_42 = arith.constant dense<0.000000e+00> : vector<8xf32>
    %104 = vector.multi_reduction <add>, %101, %cst_42 [1] : vector<8x32xf32> to vector<8xf32>
    %105 = vector.shape_cast %104 : vector<8xf32> to vector<8x1xf32>
    %cst_43 = arith.constant 3.200000e+01 : f32
    %106 = vector.broadcast %cst_43 : f32 to vector<8x1xf32>
    %107 = arith.divf %105, %106 : vector<8x1xf32>
    %108 = vector.broadcast %107 : vector<8x1xf32> to vector<8x32xf32>
    %109 = arith.subf %101, %108 : vector<8x32xf32>
    %110 = arith.mulf %109, %109 : vector<8x32xf32>
    %cst_44 = arith.constant dense<0.000000e+00> : vector<8xf32>
    %111 = vector.multi_reduction <add>, %110, %cst_44 [1] : vector<8x32xf32> to vector<8xf32>
    %112 = vector.shape_cast %111 : vector<8xf32> to vector<8x1xf32>
    %cst_45 = arith.constant 3.200000e+01 : f32
    %113 = vector.broadcast %cst_45 : f32 to vector<8x1xf32>
    %114 = arith.divf %112, %113 : vector<8x1xf32>
    %115 = vector.broadcast %107 : vector<8x1xf32> to vector<8x32xf32>
    %116 = arith.subf %101, %115 : vector<8x32xf32>
    %cst_46 = arith.constant 9.99999974E-6 : f32
    %117 = vector.broadcast %cst_46 : f32 to vector<8x1xf32>
    %118 = arith.addf %114, %117 : vector<8x1xf32>
    %119 = math.rsqrt %118 : vector<8x1xf32>
    %120 = vector.broadcast %119 : vector<8x1xf32> to vector<8x32xf32>
    %121 = arith.mulf %116, %120 : vector<8x32xf32>
    %122 = vector.broadcast %102 : vector<1x32xf32> to vector<8x32xf32>
    %123 = arith.mulf %121, %122 : vector<8x32xf32>
    %124 = vector.broadcast %103 : vector<1x32xf32> to vector<8x32xf32>
    %125 = arith.addf %123, %124 : vector<8x32xf32>
    %c0_47 = arith.constant 0 : index
    %c0_48 = arith.constant 0 : index
    %126 = vector.load %arg15[%c0_47, %c0_48] : memref<32x256xf32, #tpu.memory_space<vmem>>, vector<32x256xf32>
    %cst_49 = arith.constant dense<0.000000e+00> : vector<8x256xf32>
    %127 = tpu.matmul %125, %126, %cst_49 {dimension_numbers = #tpu.dot_dimension_numbers<[1], [0], [0], [1], [0, 0, 1, 1], [], []>} : vector<8x32xf32>, vector<32x256xf32>, vector<8x256xf32> -> vector<8x256xf32>
    %128 = vector.extract_strided_slice %127 {offsets = [0, 0], sizes = [8, 128], strides = [1, 1]} : vector<8x256xf32> to vector<8x128xf32>
    %129 = vector.extract_strided_slice %127 {offsets = [0, 128], sizes = [8, 128], strides = [1, 1]} : vector<8x256xf32> to vector<8x128xf32>
    %130 = arith.negf %129 : vector<8x128xf32>
    %131 = math.exp %130 : vector<8x128xf32>
    %cst_50 = arith.constant 1.000000e+00 : f32
    %132 = vector.broadcast %cst_50 : f32 to vector<8x128xf32>
    %133 = arith.addf %132, %131 : vector<8x128xf32>
    %134 = arith.divf %132, %133 : vector<8x128xf32>
    %135 = arith.mulf %129, %134 : vector<8x128xf32>
    %136 = arith.mulf %135, %128 : vector<8x128xf32>
    %c0_51 = arith.constant 0 : index
    %c0_52 = arith.constant 0 : index
    %137 = vector.load %arg9[%c0_51, %c0_52] : memref<1x128xf32, #tpu.memory_space<vmem>>, vector<1x128xf32>
    %c0_53 = arith.constant 0 : index
    %c0_54 = arith.constant 0 : index
    %138 = vector.load %arg10[%c0_53, %c0_54] : memref<1x128xf32, #tpu.memory_space<vmem>>, vector<1x128xf32>
    %cst_55 = arith.constant dense<0.000000e+00> : vector<8xf32>
    %139 = vector.multi_reduction <add>, %136, %cst_55 [1] : vector<8x128xf32> to vector<8xf32>
    %140 = vector.shape_cast %139 : vector<8xf32> to vector<8x1xf32>
    %cst_56 = arith.constant 1.280000e+02 : f32
    %141 = vector.broadcast %cst_56 : f32 to vector<8x1xf32>
    %142 = arith.divf %140, %141 : vector<8x1xf32>
    %143 = vector.broadcast %142 : vector<8x1xf32> to vector<8x128xf32>
    %144 = arith.subf %136, %143 : vector<8x128xf32>
    %145 = arith.mulf %144, %144 : vector<8x128xf32>
    %cst_57 = arith.constant dense<0.000000e+00> : vector<8xf32>
    %146 = vector.multi_reduction <add>, %145, %cst_57 [1] : vector<8x128xf32> to vector<8xf32>
    %147 = vector.shape_cast %146 : vector<8xf32> to vector<8x1xf32>
    %cst_58 = arith.constant 1.280000e+02 : f32
    %148 = vector.broadcast %cst_58 : f32 to vector<8x1xf32>
    %149 = arith.divf %147, %148 : vector<8x1xf32>
    %150 = vector.broadcast %142 : vector<8x1xf32> to vector<8x128xf32>
    %151 = arith.subf %136, %150 : vector<8x128xf32>
    %cst_59 = arith.constant 9.99999974E-6 : f32
    %152 = vector.broadcast %cst_59 : f32 to vector<8x1xf32>
    %153 = arith.addf %149, %152 : vector<8x1xf32>
    %154 = math.rsqrt %153 : vector<8x1xf32>
    %155 = vector.broadcast %154 : vector<8x1xf32> to vector<8x128xf32>
    %156 = arith.mulf %151, %155 : vector<8x128xf32>
    %157 = vector.broadcast %137 : vector<1x128xf32> to vector<8x128xf32>
    %158 = arith.mulf %156, %157 : vector<8x128xf32>
    %159 = vector.broadcast %138 : vector<1x128xf32> to vector<8x128xf32>
    %160 = arith.addf %158, %159 : vector<8x128xf32>
    %c0_60 = arith.constant 0 : index
    %c0_61 = arith.constant 0 : index
    %161 = vector.load %arg16[%c0_60, %c0_61] : memref<128x32xf32, #tpu.memory_space<vmem>>, vector<128x32xf32>
    %cst_62 = arith.constant dense<0.000000e+00> : vector<8x32xf32>
    %162 = tpu.matmul %160, %161, %cst_62 {dimension_numbers = #tpu.dot_dimension_numbers<[1], [0], [0], [1], [0, 0, 1, 1], [], []>} : vector<8x128xf32>, vector<128x32xf32>, vector<8x32xf32> -> vector<8x32xf32>
    %163 = arith.addf %101, %162 : vector<8x32xf32>
    %c0_63 = arith.constant 0 : index
    %c0_64 = arith.constant 0 : index
    %c0_65 = arith.constant 0 : index
    %164 = vector.load %arg17[%c0_63, %c0_64, %c0_65] : memref<1x8x32xf32, #tpu.memory_space<vmem>>, vector<1x8x32xf32>
    %165 = vector.shape_cast %164 : vector<1x8x32xf32> to vector<8x32xf32>
    %166 = vector.shape_cast %163 : vector<8x32xf32> to vector<1x8x32xf32>
    tpu.vector_store %arg17[%c0_63, %c0_64, %c0_65], %166 {strides = array<i32>} : memref<1x8x32xf32, #tpu.memory_space<vmem>>, vector<1x8x32xf32>,
    return
  }
  func.func @transform_0(%arg0: i32, %arg1: i32) -> (i32, i32, i32) {
    %c0_i32 = arith.constant 0 : i32
    %c0_i32_0 = arith.constant 0 : i32
    %c0_i32_1 = arith.constant 0 : i32
    return %arg0, %c0_i32, %c0_i32_0 : i32, i32, i32
  }
  func.func @transform_1(%arg0: i32, %arg1: i32) -> (i32, i32) {
    %c0_i32 = arith.constant 0 : i32
    %c0_i32_0 = arith.constant 0 : i32
    %c0_i32_1 = arith.constant 0 : i32
    return %c0_i32, %c0_i32_0 : i32, i32
  }
  func.func @transform_2(%arg0: i32, %arg1: i32) -> (i32, i32) {
    %c0_i32 = arith.constant 0 : i32
    %c0_i32_0 = arith.constant 0 : i32
    %c0_i32_1 = arith.constant 0 : i32
    return %c0_i32, %c0_i32_0 : i32, i32
  }
  func.func @transform_3(%arg0: i32, %arg1: i32) -> (i32, i32) {
    %c0_i32 = arith.constant 0 : i32
    %c0_i32_0 = arith.constant 0 : i32
    %c0_i32_1 = arith.constant 0 : i32
    return %c0_i32, %c0_i32_0 : i32, i32
  }
  func.func @transform_4(%arg0: i32, %arg1: i32) -> (i32, i32) {
    %c0_i32 = arith.constant 0 : i32
    %c0_i32_0 = arith.constant 0 : i32
    %c0_i32_1 = arith.constant 0 : i32
    return %c0_i32, %c0_i32_0 : i32, i32
  }
  func.func @transform_5(%arg0: i32, %arg1: i32) -> (i32, i32) {
    %c0_i32 = arith.constant 0 : i32
    %c0_i32_0 = arith.constant 0 : i32
    %c0_i32_1 = arith.constant 0 : i32
    return %c0_i32, %c0_i32_0 : i32, i32
  }
  func.func @transform_6(%arg0: i32, %arg1: i32) -> (i32, i32) {
    %c0_i32 = arith.constant 0 : i32
    %c0_i32_0 = arith.constant 0 : i32
    %c0_i32_1 = arith.constant 0 : i32
    return %c0_i32, %c0_i32_0 : i32, i32
  }
  func.func @transform_7(%arg0: i32, %arg1: i32) -> (i32, i32) {
    %c0_i32 = arith.constant 0 : i32
    %c0_i32_0 = arith.constant 0 : i32
    %c0_i32_1 = arith.constant 0 : i32
    return %c0_i32, %c0_i32_0 : i32, i32
  }
  func.func @transform_8(%arg0: i32, %arg1: i32) -> (i32, i32) {
    %c0_i32 = arith.constant 0 : i32
    %c0_i32_0 = arith.constant 0 : i32
    %c0_i32_1 = arith.constant 0 : i32
    return %c0_i32, %c0_i32_0 : i32, i32
  }
  func.func @transform_9(%arg0: i32, %arg1: i32) -> (i32, i32) {
    %c0_i32 = arith.constant 0 : i32
    %c0_i32_0 = arith.constant 0 : i32
    %c0_i32_1 = arith.constant 0 : i32
    return %c0_i32, %c0_i32_0 : i32, i32
  }
  func.func @transform_10(%arg0: i32, %arg1: i32) -> (i32, i32) {
    %c0_i32 = arith.constant 0 : i32
    %c0_i32_0 = arith.constant 0 : i32
    %c0_i32_1 = arith.constant 0 : i32
    return %c0_i32, %c0_i32_0 : i32, i32
  }
  func.func @transform_11(%arg0: i32, %arg1: i32) -> (i32, i32) {
    %c0_i32 = arith.constant 0 : i32
    %c0_i32_0 = arith.constant 0 : i32
    %c0_i32_1 = arith.constant 0 : i32
    return %c0_i32, %c0_i32_0 : i32, i32
  }
  func.func @transform_12(%arg0: i32, %arg1: i32) -> (i32, i32) {
    %c0_i32 = arith.constant 0 : i32
    %c0_i32_0 = arith.constant 0 : i32
    %c0_i32_1 = arith.constant 0 : i32
    return %c0_i32, %c0_i32_0 : i32, i32
  }
  func.func @transform_13(%arg0: i32, %arg1: i32) -> (i32, i32) {
    %c0_i32 = arith.constant 0 : i32
    %c0_i32_0 = arith.constant 0 : i32
    %c0_i32_1 = arith.constant 0 : i32
    return %c0_i32, %c0_i32_0 : i32, i32
  }
  func.func @transform_14(%arg0: i32, %arg1: i32) -> (i32, i32) {
    %c0_i32 = arith.constant 0 : i32
    %c0_i32_0 = arith.constant 0 : i32
    %c0_i32_1 = arith.constant 0 : i32
    return %c0_i32, %c0_i32_0 : i32, i32
  }
  func.func @transform_15(%arg0: i32, %arg1: i32) -> (i32, i32, i32) {
    %c0_i32 = arith.constant 0 : i32
    %c0_i32_0 = arith.constant 0 : i32
    return %arg0, %arg1, %c0_i32 : i32, i32, i32
  }
}

</mosaic_0001>

<llo_original>
// kernel: tpu_custom_call.1
$region0: #{tpu_custom_call.1}
  #allocation0 [shape = 'u32[]', space=smem, size = 0x4, offset = 0x4, fixed_abs, tag = 'smem constant byte address 0x4 - core index']
  #allocation1 [shape = 'u32[144,128]{1,0:T(1,128)}', space=vmem, size = 0x12000, scoped, tag = 'internal scratch']
  #allocation2 [shape = 'f32[4,8,8]{2,1,0:T(8,128)}', space=vmem, size = 0x4000, scoped, tag = 'scratch operand']
  #allocation3 [shape = 'f32[4,8,8]{2,1,0:T(8,128)}', space=vmem, size = 0x4000, scoped, tag = 'scratch operand']
  %s0 = inlined_call_operand.hbm [shape: f32[2,8,32], index: 0, kind: input, shape index: {}]
  %s1 = inlined_call_operand.vmem [shape: f32[1,32], index: 1, kind: input, shape index: {}]
  %s2 = inlined_call_operand.vmem [shape: f32[1,32], index: 2, kind: input, shape index: {}]
  %s3 = inlined_call_operand.vmem [shape: f32[1,32], index: 3, kind: input, shape index: {}]
  %s4 = inlined_call_operand.vmem [shape: f32[1,32], index: 4, kind: input, shape index: {}]
  %s5 = inlined_call_operand.vmem [shape: f32[1,32], index: 5, kind: input, shape index: {}]
  %s6 = inlined_call_operand.vmem [shape: f32[1,32], index: 6, kind: input, shape index: {}]
  %s7 = inlined_call_operand.vmem [shape: f32[1,128], index: 7, kind: input, shape index: {}]
  %s8 = inlined_call_operand.vmem [shape: f32[1,128], index: 8, kind: input, shape index: {}]
  %s9 = inlined_call_operand.vmem [shape: f32[32,32], index: 9, kind: input, shape index: {}]
  %s10 = inlined_call_operand.vmem [shape: f32[32,32], index: 10, kind: input, shape index: {}]
  %s11 = inlined_call_operand.vmem [shape: f32[32,32], index: 11, kind: input, shape index: {}]
  %s12 = inlined_call_operand.hbm [shape: f32[32,32], index: 12, kind: input, shape index: {}]
  %s13 = inlined_call_operand.vmem [shape: f32[32,256], index: 13, kind: input, shape index: {}]
  %s14 = inlined_call_operand.vmem [shape: f32[128,32], index: 14, kind: input, shape index: {}]
  %s15 = inlined_call_operand.hbm [shape: f32[2,8,32], index: 15, kind: output, shape index: {}]
  %s16 = sld [smem:[#allocation0]]
  $region112: #{tpu_custom_call.1} parent=0
    _
  %s18 = ssub.s32 1, %s16
  %s19 = scalar_select 0, %s18, %s16
  $region1: #{tpu_custom_call.1} parent=0
    #allocation4 [shape = 'u8[8192]{0}', space=vmem, size = 0x2000, scoped, tag = 'input window, operand 0']
    #allocation5 [shape = 's32[2]{0}', space=sflag, size = 0x8, scoped, tag = 'scoped memory for tpu_custom_call.1']
    #allocation6 [shape = 's32[2]{0}', space=sflag, size = 0x8, scoped, tag = 'scoped memory for tpu_custom_call.1']
    #allocation7 [shape = 'u8[16384]{0}', space=vmem, size = 0x4000, scoped, tag = 'input window, operand 12, single buffered']
    #allocation8 [shape = 's32[1]{0}', space=sflag, size = 0x4, scoped, tag = 'scoped memory for tpu_custom_call.1']
    #allocation9 [shape = 'u8[8192]{0}', space=vmem, size = 0x2000, scoped, tag = 'output window, operand 0']
    %20 = vsyncpa [#allocation5], 0
    %s21 = scalar_lea.sflag [#allocation5], 1
    %22 = vsyncpa %s21, 0
    %23 = vsyncpa [#allocation8], 0
    %24 = vsyncpa [#allocation6], 0
    %s25 = scalar_lea.sflag [#allocation6], 1
    %26 = vsyncpa %s25, 0
    loop: start=0, step=1, limit=4
    $region2: #{tpu_custom_call.1} parent=1 // loop_pre_header
      _
    $region3: #{tpu_custom_call.1} parent=1 // loop_header
      %s28 = sphi 0, %s32
      %p29 = scmp.ge.s32.totalorder %s28, 4
      %s35 = sphi 0, %s47
      %s36 = sphi 0, %s43
      %s37 = sphi 0, %s35
      %s38 = sphi 0, %s36
      %s39 = sphi 0, %s37
      %s40 = sphi 0, %s38
      %s50 = sphi 0, %s52
      %s53 = sphi 0, %s50
      %s54 = sphi 0, %s53
      %s70 = sphi 0, %s54
      %s74 = sphi 0, %s74
      %s76 = sphi 0, %s74
      %s77 = sphi 0, %s76
      %s91 = sphi 0, %s77
      %s95 = sphi 0, %s95
      %s97 = sphi 0, %s95
      %s98 = sphi 0, %s97
      %s112 = sphi 0, %s98
      %s116 = sphi 0, %s116
      %s118 = sphi 0, %s116
      %s119 = sphi 0, %s118
      %s133 = sphi 0, %s119
      %s137 = sphi 0, %s137
      %s139 = sphi 0, %s137
      %s140 = sphi 0, %s139
      %s154 = sphi 0, %s140
      %s158 = sphi 0, %s158
      %s160 = sphi 0, %s158
      %s161 = sphi 0, %s160
      %s175 = sphi 0, %s161
      %s179 = sphi 0, %s179
      %s181 = sphi 0, %s179
      %s182 = sphi 0, %s181
      %s196 = sphi 0, %s182
      %s200 = sphi 0, %s200
      %s202 = sphi 0, %s200
      %s203 = sphi 0, %s202
      %s217 = sphi 0, %s203
      %s221 = sphi 0, %s221
      %s223 = sphi 0, %s221
      %s224 = sphi 0, %s223
      %s238 = sphi 0, %s224
      %s242 = sphi 0, %s242
      %s244 = sphi 0, %s242
      %s245 = sphi 0, %s244
      %s259 = sphi 0, %s245
      %s263 = sphi 0, %s263
      %s265 = sphi 0, %s263
      %s266 = sphi 0, %s265
      %s280 = sphi 0, %s266
      %s284 = sphi 0, %s284
      %s286 = sphi 0, %s284
      %s287 = sphi 0, %s286
      %s301 = sphi 0, %s287
      %s305 = sphi 0, %s305
      %s307 = sphi 0, %s305
      %s308 = sphi 0, %s307
      %s322 = sphi 0, %s308
      %s326 = sphi 0, %s326
      %s328 = sphi 0, %s326
      %s329 = sphi 0, %s328
      %s343 = sphi 0, %s329
      %s347 = sphi 0, %s347
      %s349 = sphi 0, %s347
      %s350 = sphi 0, %s349
      %s364 = sphi 0, %s350
      %s372 = sphi 0, %s374
      %s375 = sphi 0, %s372
      %s376 = sphi 0, %s375
      %s392 = sphi 0, %s376
    $region4: #{tpu_custom_call.1} parent=1 // loop_header_branch
      %31 = sbr.rel (%p29) target = $region8
    $region5: #{tpu_custom_call.1} parent=1 // loop_body
      %s33 = ssub.s32 %s28, 1
      %s34 = ssub.s32 %s28, 2
      %s41 = sadd.s32 1, %s36
      %p42 = scmp.ge.s32.totalorder %s41, 1
      %s43 = scalar_select %p42, 0, %s41
      %s44 = sadd.s32 1, %s35
      %s45 = scalar_select %p42, %s44, %s35
      %p46 = scmp.ge.s32.totalorder %s45, 2
      %s47 = scalar_select %p46, 0, %s45
      %s48 = ssub.s32 %s35, %s47
      %p49 = scmp.eq.s32.totalorder %s48, 0
      %s51 = sadd.s32 %s50, 1
      %s52 = scalar_select %p49, %s50, %s51
      %p55 = pneg %p49
      %p56 = scmp.eq.s32.totalorder %s28, 1
      %p57 = por %p55, %p56
      %p58 = scmp.ne.s32.totalorder %s50, %s53
      %p59 = scmp.eq.s32.totalorder %s28, 0
      %p60 = por %p58, %p59
      %p61 = scmp.ne.s32.totalorder %s50, %s53
      %p62 = scmp.eq.s32.totalorder %s33, 1
      %p63 = por %p61, %p62
      %p64 = scmp.ne.s32.totalorder %s53, %s54
      %p65 = scmp.eq.s32.totalorder %s33, 0
      %p66 = por %p64, %p65
      %p67 = scmp.ne.s32.totalorder %s53, %s54
      %p68 = scmp.eq.s32.totalorder %s34, 1
      %p69 = por %p67, %p68
      %p71 = scmp.ne.s32.totalorder %s54, %s70
      %p72 = scmp.eq.s32.totalorder %s34, 0
      %p73 = por %p71, %p72
      %s75 = sadd.s32 %s74, 1
      %p78 = scmp.eq.s32.totalorder %s28, 1
      %p79 = scmp.ne.s32.totalorder %s74, %s76
      %p80 = scmp.eq.s32.totalorder %s28, 0
      %p81 = por %p79, %p80
      %p82 = scmp.ne.s32.totalorder %s74, %s76
      %p83 = scmp.eq.s32.totalorder %s33, 1
      %p84 = por %p82, %p83
      %p85 = scmp.ne.s32.totalorder %s76, %s77
      %p86 = scmp.eq.s32.totalorder %s33, 0
      %p87 = por %p85, %p86
      %p88 = scmp.ne.s32.totalorder %s76, %s77
      %p89 = scmp.eq.s32.totalorder %s34, 1
      %p90 = por %p88, %p89
      %p92 = scmp.ne.s32.totalorder %s77, %s91
      %p93 = scmp.eq.s32.totalorder %s34, 0
      %p94 = por %p92, %p93
      %s96 = sadd.s32 %s95, 1
      %p99 = scmp.eq.s32.totalorder %s28, 1
      %p100 = scmp.ne.s32.totalorder %s95, %s97
      %p101 = scmp.eq.s32.totalorder %s28, 0
      %p102 = por %p100, %p101
      %p103 = scmp.ne.s32.totalorder %s95, %s97
      %p104 = scmp.eq.s32.totalorder %s33, 1
      %p105 = por %p103, %p104
      %p106 = scmp.ne.s32.totalorder %s97, %s98
      %p107 = scmp.eq.s32.totalorder %s33, 0
      %p108 = por %p106, %p107
      %p109 = scmp.ne.s32.totalorder %s97, %s98
      %p110 = scmp.eq.s32.totalorder %s34, 1
      %p111 = por %p109, %p110
      %p113 = scmp.ne.s32.totalorder %s98, %s112
      %p114 = scmp.eq.s32.totalorder %s34, 0
      %p115 = por %p113, %p114
      %s117 = sadd.s32 %s116, 1
      %p120 = scmp.eq.s32.totalorder %s28, 1
      %p121 = scmp.ne.s32.totalorder %s116, %s118
      %p122 = scmp.eq.s32.totalorder %s28, 0
      %p123 = por %p121, %p122
      %p124 = scmp.ne.s32.totalorder %s116, %s118
      %p125 = scmp.eq.s32.totalorder %s33, 1
      %p126 = por %p124, %p125
      %p127 = scmp.ne.s32.totalorder %s118, %s119
      %p128 = scmp.eq.s32.totalorder %s33, 0
      %p129 = por %p127, %p128
      %p130 = scmp.ne.s32.totalorder %s118, %s119
      %p131 = scmp.eq.s32.totalorder %s34, 1
      %p132 = por %p130, %p131
      %p134 = scmp.ne.s32.totalorder %s119, %s133
      %p135 = scmp.eq.s32.totalorder %s34, 0
      %p136 = por %p134, %p135
      %s138 = sadd.s32 %s137, 1
      %p141 = scmp.eq.s32.totalorder %s28, 1
      %p142 = scmp.ne.s32.totalorder %s137, %s139
      %p143 = scmp.eq.s32.totalorder %s28, 0
      %p144 = por %p142, %p143
      %p145 = scmp.ne.s32.totalorder %s137, %s139
      %p146 = scmp.eq.s32.totalorder %s33, 1
      %p147 = por %p145, %p146
      %p148 = scmp.ne.s32.totalorder %s139, %s140
      %p149 = scmp.eq.s32.totalorder %s33, 0
      %p150 = por %p148, %p149
      %p151 = scmp.ne.s32.totalorder %s139, %s140
      %p152 = scmp.eq.s32.totalorder %s34, 1
      %p153 = por %p151, %p152
      %p155 = scmp.ne.s32.totalorder %s140, %s154
      %p156 = scmp.eq.s32.totalorder %s34, 0
      %p157 = por %p155, %p156
      %s159 = sadd.s32 %s158, 1
      %p162 = scmp.eq.s32.totalorder %s28, 1
      %p163 = scmp.ne.s32.totalorder %s158, %s160
      %p164 = scmp.eq.s32.totalorder %s28, 0
      %p165 = por %p163, %p164
      %p166 = scmp.ne.s32.totalorder %s158, %s160
      %p167 = scmp.eq.s32.totalorder %s33, 1
      %p168 = por %p166, %p167
      %p169 = scmp.ne.s32.totalorder %s160, %s161
      %p170 = scmp.eq.s32.totalorder %s33, 0
      %p171 = por %p169, %p170
      %p172 = scmp.ne.s32.totalorder %s160, %s161
      %p173 = scmp.eq.s32.totalorder %s34, 1
      %p174 = por %p172, %p173
      %p176 = scmp.ne.s32.totalorder %s161, %s175
      %p177 = scmp.eq.s32.totalorder %s34, 0
      %p178 = por %p176, %p177
      %s180 = sadd.s32 %s179, 1
      %p183 = scmp.eq.s32.totalorder %s28, 1
      %p184 = scmp.ne.s32.totalorder %s179, %s181
      %p185 = scmp.eq.s32.totalorder %s28, 0
      %p186 = por %p184, %p185
      %p187 = scmp.ne.s32.totalorder %s179, %s181
      %p188 = scmp.eq.s32.totalorder %s33, 1
      %p189 = por %p187, %p188
      %p190 = scmp.ne.s32.totalorder %s181, %s182
      %p191 = scmp.eq.s32.totalorder %s33, 0
      %p192 = por %p190, %p191
      %p193 = scmp.ne.s32.totalorder %s181, %s182
      %p194 = scmp.eq.s32.totalorder %s34, 1
      %p195 = por %p193, %p194
      %p197 = scmp.ne.s32.totalorder %s182, %s196
      %p198 = scmp.eq.s32.totalorder %s34, 0
      %p199 = por %p197, %p198
      %s201 = sadd.s32 %s200, 1
      %p204 = scmp.eq.s32.totalorder %s28, 1
      %p205 = scmp.ne.s32.totalorder %s200, %s202
      %p206 = scmp.eq.s32.totalorder %s28, 0
      %p207 = por %p205, %p206
      %p208 = scmp.ne.s32.totalorder %s200, %s202
      %p209 = scmp.eq.s32.totalorder %s33, 1
      %p210 = por %p208, %p209
      %p211 = scmp.ne.s32.totalorder %s202, %s203
      %p212 = scmp.eq.s32.totalorder %s33, 0
      %p213 = por %p211, %p212
      %p214 = scmp.ne.s32.totalorder %s202, %s203
      %p215 = scmp.eq.s32.totalorder %s34, 1
      %p216 = por %p214, %p215
      %p218 = scmp.ne.s32.totalorder %s203, %s217
      %p219 = scmp.eq.s32.totalorder %s34, 0
      %p220 = por %p218, %p219
      %s222 = sadd.s32 %s221, 1
      %p225 = scmp.eq.s32.totalorder %s28, 1
      %p226 = scmp.ne.s32.totalorder %s221, %s223
      %p227 = scmp.eq.s32.totalorder %s28, 0
      %p228 = por %p226, %p227
      %p229 = scmp.ne.s32.totalorder %s221, %s223
      %p230 = scmp.eq.s32.totalorder %s33, 1
      %p231 = por %p229, %p230
      %p232 = scmp.ne.s32.totalorder %s223, %s224
      %p233 = scmp.eq.s32.totalorder %s33, 0
      %p234 = por %p232, %p233
      %p235 = scmp.ne.s32.totalorder %s223, %s224
      %p236 = scmp.eq.s32.totalorder %s34, 1
      %p237 = por %p235, %p236
      %p239 = scmp.ne.s32.totalorder %s224, %s238
      %p240 = scmp.eq.s32.totalorder %s34, 0
      %p241 = por %p239, %p240
      %s243 = sadd.s32 %s242, 1
      %p246 = scmp.eq.s32.totalorder %s28, 1
      %p247 = scmp.ne.s32.totalorder %s242, %s244
      %p248 = scmp.eq.s32.totalorder %s28, 0
      %p249 = por %p247, %p248
      %p250 = scmp.ne.s32.totalorder %s242, %s244
      %p251 = scmp.eq.s32.totalorder %s33, 1
      %p252 = por %p250, %p251
      %p253 = scmp.ne.s32.totalorder %s244, %s245
      %p254 = scmp.eq.s32.totalorder %s33, 0
      %p255 = por %p253, %p254
      %p256 = scmp.ne.s32.totalorder %s244, %s245
      %p257 = scmp.eq.s32.totalorder %s34, 1
      %p258 = por %p256, %p257
      %p260 = scmp.ne.s32.totalorder %s245, %s259
      %p261 = scmp.eq.s32.totalorder %s34, 0
      %p262 = por %p260, %p261
      %s264 = sadd.s32 %s263, 1
      %p267 = scmp.eq.s32.totalorder %s28, 1
      %p268 = scmp.ne.s32.totalorder %s263, %s265
      %p269 = scmp.eq.s32.totalorder %s28, 0
      %p270 = por %p268, %p269
      %p271 = scmp.ne.s32.totalorder %s263, %s265
      %p272 = scmp.eq.s32.totalorder %s33, 1
      %p273 = por %p271, %p272
      %p274 = scmp.ne.s32.totalorder %s265, %s266
      %p275 = scmp.eq.s32.totalorder %s33, 0
      %p276 = por %p274, %p275
      %p277 = scmp.ne.s32.totalorder %s265, %s266
      %p278 = scmp.eq.s32.totalorder %s34, 1
      %p279 = por %p277, %p278
      %p281 = scmp.ne.s32.totalorder %s266, %s280
      %p282 = scmp.eq.s32.totalorder %s34, 0
      %p283 = por %p281, %p282
      %s285 = sadd.s32 %s284, 1
      %p288 = scmp.eq.s32.totalorder %s28, 1
      %p289 = scmp.ne.s32.totalorder %s284, %s286
      %p290 = scmp.eq.s32.totalorder %s28, 0
      %p291 = por %p289, %p290
      %p292 = scmp.ne.s32.totalorder %s284, %s286
      %p293 = scmp.eq.s32.totalorder %s33, 1
      %p294 = por %p292, %p293
      %p295 = scmp.ne.s32.totalorder %s286, %s287
      %p296 = scmp.eq.s32.totalorder %s33, 0
      %p297 = por %p295, %p296
      %p298 = scmp.ne.s32.totalorder %s286, %s287
      %p299 = scmp.eq.s32.totalorder %s34, 1
      %p300 = por %p298, %p299
      %p302 = scmp.ne.s32.totalorder %s287, %s301
      %p303 = scmp.eq.s32.totalorder %s34, 0
      %p304 = por %p302, %p303
      %s306 = sadd.s32 %s305, 1
      %p309 = scmp.eq.s32.totalorder %s28, 1
      %p310 = scmp.ne.s32.totalorder %s305, %s307
      %p311 = scmp.eq.s32.totalorder %s28, 0
      %p312 = por %p310, %p311
      %p313 = scmp.ne.s32.totalorder %s305, %s307
      %p314 = scmp.eq.s32.totalorder %s33, 1
      %p315 = por %p313, %p314
      %p316 = scmp.ne.s32.totalorder %s307, %s308
      %p317 = scmp.eq.s32.totalorder %s33, 0
      %p318 = por %p316, %p317
      %p319 = scmp.ne.s32.totalorder %s307, %s308
      %p320 = scmp.eq.s32.totalorder %s34, 1
      %p321 = por %p319, %p320
      %p323 = scmp.ne.s32.totalorder %s308, %s322
      %p324 = scmp.eq.s32.totalorder %s34, 0
      %p325 = por %p323, %p324
      %s327 = sadd.s32 %s326, 1
      %p330 = scmp.eq.s32.totalorder %s28, 1
      %p331 = scmp.ne.s32.totalorder %s326, %s328
      %p332 = scmp.eq.s32.totalorder %s28, 0
      %p333 = por %p331, %p332
      %p334 = scmp.ne.s32.totalorder %s326, %s328
      %p335 = scmp.eq.s32.totalorder %s33, 1
      %p336 = por %p334, %p335
      %p337 = scmp.ne.s32.totalorder %s328, %s329
      %p338 = scmp.eq.s32.totalorder %s33, 0
      %p339 = por %p337, %p338
      %p340 = scmp.ne.s32.totalorder %s328, %s329
      %p341 = scmp.eq.s32.totalorder %s34, 1
      %p342 = por %p340, %p341
      %p344 = scmp.ne.s32.totalorder %s329, %s343
      %p345 = scmp.eq.s32.totalorder %s34, 0
      %p346 = por %p344, %p345
      %s348 = sadd.s32 %s347, 1
      %p351 = scmp.eq.s32.totalorder %s28, 1
      %p352 = scmp.ne.s32.totalorder %s347, %s349
      %p353 = scmp.eq.s32.totalorder %s28, 0
      %p354 = por %p352, %p353
      %p355 = scmp.ne.s32.totalorder %s347, %s349
      %p356 = scmp.eq.s32.totalorder %s33, 1
      %p357 = por %p355, %p356
      %p358 = scmp.ne.s32.totalorder %s349, %s350
      %p359 = scmp.eq.s32.totalorder %s33, 0
      %p360 = por %p358, %p359
      %p361 = scmp.ne.s32.totalorder %s349, %s350
      %p362 = scmp.eq.s32.totalorder %s34, 1
      %p363 = por %p361, %p362
      %p365 = scmp.ne.s32.totalorder %s350, %s364
      %p366 = scmp.eq.s32.totalorder %s34, 0
      %p367 = por %p365, %p366
      %s368 = ssub.s32 %s35, %s47
      %s369 = ssub.s32 %s36, %s43
      %s370 = sor.u32 %s368, %s369
      %p371 = scmp.eq.s32.totalorder %s370, 0
      %s373 = sadd.s32 %s372, 1
      %s374 = scalar_select %p371, %s372, %s373
      %p377 = pneg %p371
      %p378 = scmp.eq.s32.totalorder %s28, 1
      %p379 = por %p377, %p378
      %p380 = scmp.ne.s32.totalorder %s372, %s375
      %p381 = scmp.eq.s32.totalorder %s28, 0
      %p382 = por %p380, %p381
      %p383 = scmp.ne.s32.totalorder %s372, %s375
      %p384 = scmp.eq.s32.totalorder %s33, 1
      %p385 = por %p383, %p384
      %p386 = scmp.ne.s32.totalorder %s375, %s376
      %p387 = scmp.eq.s32.totalorder %s33, 0
      %p388 = por %p386, %p387
      %p389 = scmp.ne.s32.totalorder %s375, %s376
      %p390 = scmp.eq.s32.totalorder %s34, 1
      %p391 = por %p389, %p390
      %p393 = scmp.ne.s32.totalorder %s376, %s392
      %p394 = scmp.eq.s32.totalorder %s34, 0
      %p395 = por %p393, %p394
      %p396 = scmp.le.s32.totalorder 1, %s28
      %p397 = scmp.lt.s32.totalorder %s28, 3
      %p398 = pnand %p396, %p397
      %p399 = pneg %p398
      // Predicated region
      $region9: #{tpu_custom_call.1} parent=5 // pred_check
        _
      $region10: #{tpu_custom_call.1} parent=5 // pred_check_branch
        %401 = sbr.rel (%p398) target = $region12
      $region11: #{tpu_custom_call.1} parent=5 // pred_region
        %s402 = ssub.s32 %s28, 1
        // Predicated region
        $region13: #{tpu_custom_call.1} parent=11 // pred_check
          %p403 = pneg %p87
        $region14: #{tpu_custom_call.1} parent=11 // pred_check_branch
          %405 = sbr.rel (%p403) target = $region16
        $region15: #{tpu_custom_call.1} parent=11 // pred_region
          _
        $region16: #{tpu_custom_call.1} parent=11 // pred_fallthru
          _
        // Predicated region
        $region17: #{tpu_custom_call.1} parent=11 // pred_check
          %p406 = pneg %p108
        $region18: #{tpu_custom_call.1} parent=11 // pred_check_branch
          %408 = sbr.rel (%p406) target = $region20
        $region19: #{tpu_custom_call.1} parent=11 // pred_region
          _
        $region20: #{tpu_custom_call.1} parent=11 // pred_fallthru
          _
        // Predicated region
        $region21: #{tpu_custom_call.1} parent=11 // pred_check
          %p409 = pneg %p129
        $region22: #{tpu_custom_call.1} parent=11 // pred_check_branch
          %411 = sbr.rel (%p409) target = $region24
        $region23: #{tpu_custom_call.1} parent=11 // pred_region
          _
        $region24: #{tpu_custom_call.1} parent=11 // pred_fallthru
          _
        // Predicated region
        $region25: #{tpu_custom_call.1} parent=11 // pred_check
          %p412 = pneg %p150
        $region26: #{tpu_custom_call.1} parent=11 // pred_check_branch
          %414 = sbr.rel (%p412) target = $region28
        $region27: #{tpu_custom_call.1} parent=11 // pred_region
          _
        $region28: #{tpu_custom_call.1} parent=11 // pred_fallthru
          _
        // Predicated region
        $region29: #{tpu_custom_call.1} parent=11 // pred_check
          %p415 = pneg %p171
        $region30: #{tpu_custom_call.1} parent=11 // pred_check_branch
          %417 = sbr.rel (%p415) target = $region32
        $region31: #{tpu_custom_call.1} parent=11 // pred_region
          _
        $region32: #{tpu_custom_call.1} parent=11 // pred_fallthru
          _
        // Predicated region
        $region33: #{tpu_custom_call.1} parent=11 // pred_check
          %p418 = pneg %p192
        $region34: #{tpu_custom_call.1} parent=11 // pred_check_branch
          %420 = sbr.rel (%p418) target = $region36
        $region35: #{tpu_custom_call.1} parent=11 // pred_region
          _
        $region36: #{tpu_custom_call.1} parent=11 // pred_fallthru
          _
        // Predicated region
        $region37: #{tpu_custom_call.1} parent=11 // pred_check
          %p421 = pneg %p213
        $region38: #{tpu_custom_call.1} parent=11 // pred_check_branch
          %423 = sbr.rel (%p421) target = $region40
        $region39: #{tpu_custom_call.1} parent=11 // pred_region
          _
        $region40: #{tpu_custom_call.1} parent=11 // pred_fallthru
          _
        // Predicated region
        $region41: #{tpu_custom_call.1} parent=11 // pred_check
          %p424 = pneg %p234
        $region42: #{tpu_custom_call.1} parent=11 // pred_check_branch
          %426 = sbr.rel (%p424) target = $region44
        $region43: #{tpu_custom_call.1} parent=11 // pred_region
          _
        $region44: #{tpu_custom_call.1} parent=11 // pred_fallthru
          _
        // Predicated region
        $region45: #{tpu_custom_call.1} parent=11 // pred_check
          %p427 = pneg %p255
        $region46: #{tpu_custom_call.1} parent=11 // pred_check_branch
          %429 = sbr.rel (%p427) target = $region48
        $region47: #{tpu_custom_call.1} parent=11 // pred_region
          _
        $region48: #{tpu_custom_call.1} parent=11 // pred_fallthru
          _
        // Predicated region
        $region49: #{tpu_custom_call.1} parent=11 // pred_check
          %p430 = pneg %p276
        $region50: #{tpu_custom_call.1} parent=11 // pred_check_branch
          %432 = sbr.rel (%p430) target = $region52
        $region51: #{tpu_custom_call.1} parent=11 // pred_region
          _
        $region52: #{tpu_custom_call.1} parent=11 // pred_fallthru
          _
        // Predicated region
        $region53: #{tpu_custom_call.1} parent=11 // pred_check
          %p433 = pneg %p297
        $region54: #{tpu_custom_call.1} parent=11 // pred_check_branch
          %435 = sbr.rel (%p433) target = $region56
        $region55: #{tpu_custom_call.1} parent=11 // pred_region
          _
        $region56: #{tpu_custom_call.1} parent=11 // pred_fallthru
          _
        // Predicated region
        $region57: #{tpu_custom_call.1} parent=11 // pred_check
          %p436 = pneg %p318
        $region58: #{tpu_custom_call.1} parent=11 // pred_check_branch
          %438 = sbr.rel (%p436) target = $region60
        $region59: #{tpu_custom_call.1} parent=11 // pred_region
          %s440 = ssub.s32 512, 512
          %441 = vsyncadd [#allocation8], %s440
          %s442 = sshll.u32 [#allocation7], 4
          %s443 = int_to_ptr.vmem [resolvable:$true] %s442
          %448 = dma.hbm_to_vmem [thread:$0]  %s12, 512, %s443, [#allocation8], 128, 128, 8
        $region60: #{tpu_custom_call.1} parent=11 // pred_fallthru
          _
        // Predicated region
        $region61: #{tpu_custom_call.1} parent=11 // pred_check
          %p449 = pneg %p339
        $region62: #{tpu_custom_call.1} parent=11 // pred_check_branch
          %451 = sbr.rel (%p449) target = $region64
        $region63: #{tpu_custom_call.1} parent=11 // pred_region
          _
        $region64: #{tpu_custom_call.1} parent=11 // pred_fallthru
          _
        // Predicated region
        $region65: #{tpu_custom_call.1} parent=11 // pred_check
          %p452 = pneg %p360
        $region66: #{tpu_custom_call.1} parent=11 // pred_check_branch
          %454 = sbr.rel (%p452) target = $region68
        $region67: #{tpu_custom_call.1} parent=11 // pred_region
          _
        $region68: #{tpu_custom_call.1} parent=11 // pred_fallthru
          _
      $region12: #{tpu_custom_call.1} parent=5 // pred_fallthru
        _
      %p455 = scmp.lt.s32.totalorder %s28, 2
      // Predicated region
      $region69: #{tpu_custom_call.1} parent=5 // pred_check
        %p456 = pneg %p455
      $region70: #{tpu_custom_call.1} parent=5 // pred_check_branch
        %458 = sbr.rel (%p456) target = $region72
      $region71: #{tpu_custom_call.1} parent=5 // pred_region
        // Predicated region
        $region73: #{tpu_custom_call.1} parent=71 // pred_check
          %p459 = pneg %p60
        $region74: #{tpu_custom_call.1} parent=71 // pred_check_branch
          %461 = sbr.rel (%p459) target = $region76
        $region75: #{tpu_custom_call.1} parent=71 // pred_region
          %s462 = sand.u32 %s50, 1
          %s463 = scalar_lea.sflag [#allocation5], %s462
          %s464 = sand.u32 %s50, 1
          %s465 = smul.addr %s464, 8
          %s466 = scalar_lea.vmem [#allocation4], %s465
          %s468 = ssub.s32 128, 128
          %469 = vsyncadd %s463, %s468
          %s470 = smul.addr %s35, 128
          %s471 = scalar_lea.hbm %s0, %s470
          %s473 = sshll.u32 %s466, 4
          %s474 = int_to_ptr.vmem [resolvable:$true] %s473
          %476 = dma.hbm_to_vmem [thread:$0]  %s471, 128, %s474, %s463
        $region76: #{tpu_custom_call.1} parent=71 // pred_fallthru
          _
      $region72: #{tpu_custom_call.1} parent=5 // pred_fallthru
        _
      %p477 = scmp.le.s32.totalorder 1, %s28
      %p478 = scmp.lt.s32.totalorder %s28, 3
      %p479 = pnand %p477, %p478
      %p480 = pneg %p479
      // Predicated region
      $region77: #{tpu_custom_call.1} parent=5 // pred_check
        _
      $region78: #{tpu_custom_call.1} parent=5 // pred_check_branch
        %482 = sbr.rel (%p479) target = $region80
      $region79: #{tpu_custom_call.1} parent=5 // pred_region
        %s483 = ssub.s32 %s28, 1
        %s484 = sand.u32 %s53, 1
        %s485 = scalar_lea.sflag [#allocation5], %s484
        %s486 = sand.u32 %s53, 1
        %s487 = smul.addr %s486, 8
        %s488 = scalar_lea.vmem [#allocation4], %s487
        // Predicated region
        $region81: #{tpu_custom_call.1} parent=79 // pred_check
          %p489 = pneg %p66
        $region82: #{tpu_custom_call.1} parent=79 // pred_check_branch
          %491 = sbr.rel (%p489) target = $region84
        $region83: #{tpu_custom_call.1} parent=79 // pred_region
          %492 = dma.done %s485, 128
        $region84: #{tpu_custom_call.1} parent=79 // pred_fallthru
          _
        // Predicated region
        $region85: #{tpu_custom_call.1} parent=79 // pred_check
          %p493 = pneg %p318
        $region86: #{tpu_custom_call.1} parent=79 // pred_check_branch
          %495 = sbr.rel (%p493) target = $region88
        $region87: #{tpu_custom_call.1} parent=79 // pred_region
          %496 = dma.done [#allocation8], 512
        $region88: #{tpu_custom_call.1} parent=79 // pred_fallthru
          _
        %s497 = sand.u32 %s53, 1
        %s498 = scalar_lea.sflag [#allocation5], %s497
        %s499 = sand.u32 %s53, 1
        %s500 = smul.addr %s499, 8
        %s501 = scalar_lea.vmem [#allocation4], %s500
        %p502 = pneg %p66
        %p503 = pneg %p63
        %p504 = pneg %p87
        %p505 = pneg %p84
        %p506 = pneg %p108
        %p507 = pneg %p105
        %p508 = pneg %p129
        %p509 = pneg %p126
        %p510 = pneg %p150
        %p511 = pneg %p147
        %p512 = pneg %p171
        %p513 = pneg %p168
        %p514 = pneg %p192
        %p515 = pneg %p189
        %p516 = pneg %p213
        %p517 = pneg %p210
        %p518 = pneg %p234
        %p519 = pneg %p231
        %p520 = pneg %p255
        %p521 = pneg %p252
        %p522 = pneg %p276
        %p523 = pneg %p273
        %p524 = pneg %p297
        %p525 = pneg %p294
        %p526 = pneg %p318
        %p527 = pneg %p315
        %p528 = pneg %p339
        %p529 = pneg %p336
        %p530 = pneg %p360
        %p531 = pneg %p357
        %p532 = pneg %p388
        %p533 = pneg %p385
        %s534 = sand.u32 %s375, 1
        %s535 = scalar_lea.sflag [#allocation6], %s534
        %s536 = sand.u32 %s375, 1
        %s537 = smul.addr %s536, 8
        %s538 = scalar_lea.vmem [#allocation9], %s537
        %p539 = scmp.eq.s32.totalorder %s38, 0
        // Predicated region
        $region89: #{tpu_custom_call.1} parent=79 // pred_check
          %p540 = pneg %p539
        $region90: #{tpu_custom_call.1} parent=79 // pred_check_branch
          %542 = sbr.rel (%p540) target = $region92
        $region91: #{tpu_custom_call.1} parent=79 // pred_region
          %v543 = vld [vmem:[%s488] sm:$0xff]
          %v544 = vld [vmem:[%s1] sm:$0x1]
          %v545 = vld [vmem:[%s2] sm:$0x1]
          %vm546 = vcmask 261120
          %v547 = vsel %vm546, %v543, 0.0
          %548 = vadd.xlane.f32.xlu0 %v547
          %v549 = vpop.xlane.xlu0 %548
          %v550 = vrcp.pop 32.0
          %v551 = vmul.f32 %v549, %v550
          %v552 = vsub.f32 %v543, %v551
          %v553 = vmul.f32 %v552, %v552
          %v554 = vsel %vm546, %v553, 0.0
          %555 = vadd.xlane.f32.xlu0 %v554
          %v556 = vpop.xlane.xlu0 %555
          %v557 = vmul.f32 %v556, %v550
          %v558 = vadd.f32 %v557, 1e-05
          %v559 = vrsqrt.pop %v558
          %v560 = vmul.f32 %v552, %v559
          %v562 = vlaneseq
          %v563 = vshrl.u32 %v562, 7
          %v564 = vsub.s32 0, %v563
          %v565 = vrot.slane %v544, %v564
          %v567 = vmul.f32 %v560, %v565
          %v569 = vlaneseq
          %v570 = vshrl.u32 %v569, 7
          %v571 = vsub.s32 0, %v570
          %v572 = vrot.slane %v545, %v571
          %v574 = vadd.f32 %v567, %v572
          %v575 = vld [vmem:[%s10] sm:$0xff]
          %v576 = vld [vmem:[%s10 + $0x8] sm:$0xff]
          %v577 = vld [vmem:[%s10 + $0x10] sm:$0xff]
          %v578 = vld [vmem:[%s10 + $0x18] sm:$0xff]
          %v580 = vsel %vm546, %v574, 0
          %582 = vmatprep.subr.mxu0 0.0
          %583 = vmatpush1.msra.mxu0 %v575
          %584 = vmatprep.subr.mxu0 0.0
          %585 = vmatpush1.msra.mxu0 %v576
          %586 = vmatprep.subr.mxu0 0.0
          %587 = vmatpush1.msra.mxu0 %v577
          %588 = vmatprep.subr.mxu0 0.0
          %589 = vmatpush1.msra.mxu0 %v578
          %590 = vmatprep.subr.mxu0 0.0
          %591 = vmatpush1.msra.mxu0 0.0
          %592 = vmatprep.subr.mxu0 0.0
          %593 = vmatpush1.msra.mxu0 0.0
          %594 = vmatprep.subr.mxu0 0.0
          %595 = vmatpush1.msra.mxu0 0.0
          %596 = vmatprep.subr.mxu0 0.0
          %597 = vmatpush1.msra.mxu0 0.0
          %598 = vmatprep.subr.mxu0 0.0
          %599 = vmatpush1.msra.mxu0 0.0
          %600 = vmatprep.subr.mxu0 0.0
          %601 = vmatpush1.msra.mxu0 0.0
          %602 = vmatprep.subr.mxu0 0.0
          %603 = vmatpush1.msra.mxu0 0.0
          %604 = vmatprep.subr.mxu0 0.0
          %605 = vmatpush1.msra.mxu0 0.0
          %606 = vmatprep.subr.mxu0 0.0
          %607 = vmatpush1.msra.mxu0 0.0
          %608 = vmatprep.subr.mxu0 0.0
          %609 = vmatpush1.msra.mxu0 0.0
          %610 = vmatprep.subr.mxu0 0.0
          %611 = vmatpush1.msra.mxu0 0.0
          %612 = vmatprep.subr.mxu0 0.0
          %613 = vmatpush1.msra.mxu0 0.0
          %614 = vmatprep.subr.mxu0 0.0
          %615 = vmatpush1.msra.mxu0 0.0
          %616 = vmatprep.subr.mxu0 0.0
          %617 = vmatpush1.msra.mxu0 0.0
          %618 = vmatprep.subr.mxu0 0.0
          %619 = vmatpush1.msra.mxu0 0.0
          %620 = vmatprep.subr.mxu0 0.0
          %621 = vmatpush1.msra.mxu0 0.0
          %622 = vmatprep.subr.mxu0 0.0
          %623 = vmatpush1.msra.mxu0 0.0
          %624 = vmatprep.subr.mxu0 0.0
          %625 = vmatpush1.msra.mxu0 0.0
          %626 = vmatprep.subr.mxu0 0.0
          %627 = vmatpush1.msra.mxu0 0.0
          %628 = vmatprep.subr.mxu0 0.0
          %629 = vmatpush1.msra.mxu0 0.0
          %630 = vmatprep.subr.mxu0 0.0
          %631 = vmatpush1.msra.mxu0 0.0
          %632 = vmatprep.subr.mxu0 0.0
          %633 = vmatpush1.msra.mxu0 0.0
          %634 = vmatprep.subr.mxu0 0.0
          %635 = vmatpush1.msra.mxu0 0.0
          %636 = vmatprep.subr.mxu0 0.0
          %637 = vmatpush1.msra.mxu0 0.0
          %638 = vmatprep.subr.mxu0 0.0
          %639 = vmatpush1.msra.mxu0 0.0
          %640 = vmatprep.subr.mxu0 0.0
          %641 = vmatpush1.msra.mxu0 0.0
          %642 = vmatprep.subr.mxu0 0.0
          %643 = vmatpush1.msra.mxu0 0.0
          %644 = vmatprep.subr.mxu0 0.0
          %645 = vmatpush1.msra.mxu0 0.0
          %646 = vmatprep.mubr.f32.mxu0 0.0
          %647 = vmatmul.mubr.f32.gmra.mrb[0].mxu0 %v580
          %v648 = vpop.f32.mrb[0].mxu0
          %v649 = vadd.f32 0.0, %v648
          %v650 = vpop.f32.mrb[0].mxu0
          %651 = vdwg.mxu0
          %v652 = vld [vmem:[%s11] sm:$0xff]
          %v653 = vld [vmem:[%s11 + $0x8] sm:$0xff]
          %v654 = vld [vmem:[%s11 + $0x10] sm:$0xff]
          %v655 = vld [vmem:[%s11 + $0x18] sm:$0xff]
          %656 = vmatprep.subr.mxu0 0.0
          %657 = vmatpush1.msra.mxu0 %v652
          %658 = vmatprep.subr.mxu0 0.0
          %659 = vmatpush1.msra.mxu0 %v653
          %660 = vmatprep.subr.mxu0 0.0
          %661 = vmatpush1.msra.mxu0 %v654
          %662 = vmatprep.subr.mxu0 0.0
          %663 = vmatpush1.msra.mxu0 %v655
          %664 = vmatprep.subr.mxu0 0.0
          %665 = vmatpush1.msra.mxu0 0.0
          %666 = vmatprep.subr.mxu0 0.0
          %667 = vmatpush1.msra.mxu0 0.0
          %668 = vmatprep.subr.mxu0 0.0
          %669 = vmatpush1.msra.mxu0 0.0
          %670 = vmatprep.subr.mxu0 0.0
          %671 = vmatpush1.msra.mxu0 0.0
          %672 = vmatprep.subr.mxu0 0.0
          %673 = vmatpush1.msra.mxu0 0.0
          %674 = vmatprep.subr.mxu0 0.0
          %675 = vmatpush1.msra.mxu0 0.0
          %676 = vmatprep.subr.mxu0 0.0
          %677 = vmatpush1.msra.mxu0 0.0
          %678 = vmatprep.subr.mxu0 0.0
          %679 = vmatpush1.msra.mxu0 0.0
          %680 = vmatprep.subr.mxu0 0.0
          %681 = vmatpush1.msra.mxu0 0.0
          %682 = vmatprep.subr.mxu0 0.0
          %683 = vmatpush1.msra.mxu0 0.0
          %684 = vmatprep.subr.mxu0 0.0
          %685 = vmatpush1.msra.mxu0 0.0
          %686 = vmatprep.subr.mxu0 0.0
          %687 = vmatpush1.msra.mxu0 0.0
          %688 = vmatprep.subr.mxu0 0.0
          %689 = vmatpush1.msra.mxu0 0.0
          %690 = vmatprep.subr.mxu0 0.0
          %691 = vmatpush1.msra.mxu0 0.0
          %692 = vmatprep.subr.mxu0 0.0
          %693 = vmatpush1.msra.mxu0 0.0
          %694 = vmatprep.subr.mxu0 0.0
          %695 = vmatpush1.msra.mxu0 0.0
          %696 = vmatprep.subr.mxu0 0.0
          %697 = vmatpush1.msra.mxu0 0.0
          %698 = vmatprep.subr.mxu0 0.0
          %699 = vmatpush1.msra.mxu0 0.0
          %700 = vmatprep.subr.mxu0 0.0
          %701 = vmatpush1.msra.mxu0 0.0
          %702 = vmatprep.subr.mxu0 0.0
          %703 = vmatpush1.msra.mxu0 0.0
          %704 = vmatprep.subr.mxu0 0.0
          %705 = vmatpush1.msra.mxu0 0.0
          %706 = vmatprep.subr.mxu0 0.0
          %707 = vmatpush1.msra.mxu0 0.0
          %708 = vmatprep.subr.mxu0 0.0
          %709 = vmatpush1.msra.mxu0 0.0
          %710 = vmatprep.subr.mxu0 0.0
          %711 = vmatpush1.msra.mxu0 0.0
          %712 = vmatprep.subr.mxu0 0.0
          %713 = vmatpush1.msra.mxu0 0.0
          %714 = vmatprep.subr.mxu0 0.0
          %715 = vmatpush1.msra.mxu0 0.0
          %716 = vmatprep.subr.mxu0 0.0
          %717 = vmatpush1.msra.mxu0 0.0
          %718 = vmatprep.subr.mxu0 0.0
          %719 = vmatpush1.msra.mxu0 0.0
          %720 = vmatprep.mubr.f32.mxu0 0.0
          %721 = vmatmul.mubr.f32.gmra.mrb[0].mxu0 %v580
          %v722 = vpop.f32.mrb[0].mxu0
          %v723 = vadd.f32 0.0, %v722
          %v724 = vpop.f32.mrb[0].mxu0
          %725 = vdwg.mxu0
          %727 = vrot.lane.b32.xlu0 %v649, 120
          %v728 = vpop.permute.xlu0 %727
          %730 = vrot.lane.b32.xlu0 %v649, 112
          %v731 = vpop.permute.xlu0 %730
          %733 = vrot.lane.b32.xlu0 %v649, 104
          %v734 = vpop.permute.xlu0 %733
          %v736 = vcombine.low %v649, %v731
          %v737 = vcombine.high %v649, %v731
          %v739 = vunpack.c.l.s4 1983009808
          %v740 = vunpack.c.0.s8 %v739
          %v741 = vlaneseq
          %v742 = vshrl.u32 %v741, 7
          %v743 = vsub.s32 %v740, %v742
          %v744 = vrot.slane %v736, %v743
          %v746 = vunpack.c.l.s4 1983009808
          %v747 = vunpack.c.0.s8 %v746
          %v748 = vlaneseq
          %v749 = vshrl.u32 %v748, 7
          %v750 = vsub.s32 %v747, %v749
          %v751 = vrot.slane %v737, %v750
          %v752 = vcombine.low %v728, %v734
          %v753 = vcombine.high %v728, %v734
          %v755 = vunpack.c.l.s4 1983009808
          %v756 = vunpack.c.0.s8 %v755
          %v757 = vlaneseq
          %v758 = vshrl.u32 %v757, 7
          %v759 = vsub.s32 %v756, %v758
          %v760 = vrot.slane %v752, %v759
          %v762 = vunpack.c.l.s4 1983009808
          %v763 = vunpack.c.0.s8 %v762
          %v764 = vlaneseq
          %v765 = vshrl.u32 %v764, 7
          %v766 = vsub.s32 %v763, %v765
          %v767 = vrot.slane %v753, %v766
          %v768 = vcombine.low %v744, %v760
          %v769 = vcombine.high %v744, %v760
          %v771 = vunpack.c.l.s4 1934713408
          %v772 = vunpack.c.0.s8 %v771
          %v773 = vlaneseq
          %v774 = vshrl.u32 %v773, 7
          %v775 = vsub.s32 %v772, %v774
          %v776 = vrot.slane %v768, %v775
          %v778 = vunpack.c.l.s4 1934713408
          %v779 = vunpack.c.0.s8 %v778
          %v780 = vlaneseq
          %v781 = vshrl.u32 %v780, 7
          %v782 = vsub.s32 %v779, %v781
          %v783 = vrot.slane %v769, %v782
          %v784 = vcombine.low %v751, %v767
          %v785 = vcombine.high %v751, %v767
          %v787 = vunpack.c.l.s4 1934713408
          %v788 = vunpack.c.0.s8 %v787
          %v789 = vlaneseq
          %v790 = vshrl.u32 %v789, 7
          %v791 = vsub.s32 %v788, %v790
          %v792 = vrot.slane %v784, %v791
          %v794 = vunpack.c.l.s4 1934713408
          %v795 = vunpack.c.0.s8 %v794
          %v796 = vlaneseq
          %v797 = vshrl.u32 %v796, 7
          %v798 = vsub.s32 %v795, %v797
          %v799 = vrot.slane %v785, %v798
          %v800 = vcombine.high %v776, 0.0
          %v801 = vcombine.high %v783, 0.0
          %v802 = vcombine.high %v792, 0.0
          %v803 = vcombine.high %v799, 0.0
          %v804 = vcombine.low %v776, %v783
          %v806 = vunpack.c.l.s4 1983009808
          %v807 = vunpack.c.0.s8 %v806
          %v808 = vlaneseq
          %v809 = vshrl.u32 %v808, 7
          %v810 = vsub.s32 %v807, %v809
          %v811 = vrot.slane %v804, %v810
          %v812 = vcombine.low %v800, %v801
          %v814 = vunpack.c.l.s4 1983009808
          %v815 = vunpack.c.0.s8 %v814
          %v816 = vlaneseq
          %v817 = vshrl.u32 %v816, 7
          %v818 = vsub.s32 %v815, %v817
          %v819 = vrot.slane %v812, %v818
          %v820 = vcombine.low %v792, %v799
          %v822 = vunpack.c.l.s4 1983009808
          %v823 = vunpack.c.0.s8 %v822
          %v824 = vlaneseq
          %v825 = vshrl.u32 %v824, 7
          %v826 = vsub.s32 %v823, %v825
          %v827 = vrot.slane %v820, %v826
          %v828 = vcombine.low %v802, %v803
          %v830 = vunpack.c.l.s4 1983009808
          %v831 = vunpack.c.0.s8 %v830
          %v832 = vlaneseq
          %v833 = vshrl.u32 %v832, 7
          %v834 = vsub.s32 %v831, %v833
          %v835 = vrot.slane %v828, %v834
          %v836 = vcombine.low %v811, %v819
          %v837 = vcombine.high %v811, %v819
          %v839 = vunpack.c.l.s4 1934713408
          %v840 = vunpack.c.0.s8 %v839
          %v841 = vlaneseq
          %v842 = vshrl.u32 %v841, 7
          %v843 = vsub.s32 %v840, %v842
          %v844 = vrot.slane %v836, %v843
          %v846 = vunpack.c.l.s4 1934713408
          %v847 = vunpack.c.0.s8 %v846
          %v848 = vlaneseq
          %v849 = vshrl.u32 %v848, 7
          %v850 = vsub.s32 %v847, %v849
          %v851 = vrot.slane %v837, %v850
          %v852 = vcombine.low %v827, %v835
          %v853 = vcombine.high %v827, %v835
          %v855 = vunpack.c.l.s4 1934713408
          %v856 = vunpack.c.0.s8 %v855
          %v857 = vlaneseq
          %v858 = vshrl.u32 %v857, 7
          %v859 = vsub.s32 %v856, %v858
          %v860 = vrot.slane %v852, %v859
          %v862 = vunpack.c.l.s4 1934713408
          %v863 = vunpack.c.0.s8 %v862
          %v864 = vlaneseq
          %v865 = vshrl.u32 %v864, 7
          %v866 = vsub.s32 %v863, %v865
          %v867 = vrot.slane %v853, %v866
          %v868 = vcombine.low %v844, %v860
          %v869 = vcombine.high %v844, %v860
          %v870 = vcombine.low %v851, %v867
          %v871 = vcombine.high %v851, %v867
          %vm872 = vcmask 64512
          %873 = vst.msk [vmem:[#allocation2] sm:$0xff] %vm872, %v868
          %874 = vst.msk [vmem:[#allocation2 + $0x8] sm:$0xff] %vm872, %v869
          %875 = vst.msk [vmem:[#allocation2 + $0x10] sm:$0xff] %vm872, %v870
          %876 = vst.msk [vmem:[#allocation2 + $0x18] sm:$0xff] %vm872, %v871
          %878 = vrot.lane.b32.xlu0 %v723, 120
          %v879 = vpop.permute.xlu0 %878
          %881 = vrot.lane.b32.xlu0 %v723, 112
          %v882 = vpop.permute.xlu0 %881
          %884 = vrot.lane.b32.xlu0 %v723, 104
          %v885 = vpop.permute.xlu0 %884
          %v887 = vcombine.low %v723, %v882
          %v888 = vcombine.high %v723, %v882
          %v890 = vunpack.c.l.s4 1983009808
          %v891 = vunpack.c.0.s8 %v890
          %v892 = vlaneseq
          %v893 = vshrl.u32 %v892, 7
          %v894 = vsub.s32 %v891, %v893
          %v895 = vrot.slane %v887, %v894
          %v897 = vunpack.c.l.s4 1983009808
          %v898 = vunpack.c.0.s8 %v897
          %v899 = vlaneseq
          %v900 = vshrl.u32 %v899, 7
          %v901 = vsub.s32 %v898, %v900
          %v902 = vrot.slane %v888, %v901
          %v903 = vcombine.low %v879, %v885
          %v904 = vcombine.high %v879, %v885
          %v906 = vunpack.c.l.s4 1983009808
          %v907 = vunpack.c.0.s8 %v906
          %v908 = vlaneseq
          %v909 = vshrl.u32 %v908, 7
          %v910 = vsub.s32 %v907, %v909
          %v911 = vrot.slane %v903, %v910
          %v913 = vunpack.c.l.s4 1983009808
          %v914 = vunpack.c.0.s8 %v913
          %v915 = vlaneseq
          %v916 = vshrl.u32 %v915, 7
          %v917 = vsub.s32 %v914, %v916
          %v918 = vrot.slane %v904, %v917
          %v919 = vcombine.low %v895, %v911
          %v920 = vcombine.high %v895, %v911
          %v922 = vunpack.c.l.s4 1934713408
          %v923 = vunpack.c.0.s8 %v922
          %v924 = vlaneseq
          %v925 = vshrl.u32 %v924, 7
          %v926 = vsub.s32 %v923, %v925
          %v927 = vrot.slane %v919, %v926
          %v929 = vunpack.c.l.s4 1934713408
          %v930 = vunpack.c.0.s8 %v929
          %v931 = vlaneseq
          %v932 = vshrl.u32 %v931, 7
          %v933 = vsub.s32 %v930, %v932
          %v934 = vrot.slane %v920, %v933
          %v935 = vcombine.low %v902, %v918
          %v936 = vcombine.high %v902, %v918
          %v938 = vunpack.c.l.s4 1934713408
          %v939 = vunpack.c.0.s8 %v938
          %v940 = vlaneseq
          %v941 = vshrl.u32 %v940, 7
          %v942 = vsub.s32 %v939, %v941
          %v943 = vrot.slane %v935, %v942
          %v945 = vunpack.c.l.s4 1934713408
          %v946 = vunpack.c.0.s8 %v945
          %v947 = vlaneseq
          %v948 = vshrl.u32 %v947, 7
          %v949 = vsub.s32 %v946, %v948
          %v950 = vrot.slane %v936, %v949
          %v951 = vcombine.high %v927, 0.0
          %v952 = vcombine.high %v934, 0.0
          %v953 = vcombine.high %v943, 0.0
          %v954 = vcombine.high %v950, 0.0
          %v955 = vcombine.low %v927, %v934
          %v957 = vunpack.c.l.s4 1983009808
          %v958 = vunpack.c.0.s8 %v957
          %v959 = vlaneseq
          %v960 = vshrl.u32 %v959, 7
          %v961 = vsub.s32 %v958, %v960
          %v962 = vrot.slane %v955, %v961
          %v963 = vcombine.low %v951, %v952
          %v965 = vunpack.c.l.s4 1983009808
          %v966 = vunpack.c.0.s8 %v965
          %v967 = vlaneseq
          %v968 = vshrl.u32 %v967, 7
          %v969 = vsub.s32 %v966, %v968
          %v970 = vrot.slane %v963, %v969
          %v971 = vcombine.low %v943, %v950
          %v973 = vunpack.c.l.s4 1983009808
          %v974 = vunpack.c.0.s8 %v973
          %v975 = vlaneseq
          %v976 = vshrl.u32 %v975, 7
          %v977 = vsub.s32 %v974, %v976
          %v978 = vrot.slane %v971, %v977
          %v979 = vcombine.low %v953, %v954
          %v981 = vunpack.c.l.s4 1983009808
          %v982 = vunpack.c.0.s8 %v981
          %v983 = vlaneseq
          %v984 = vshrl.u32 %v983, 7
          %v985 = vsub.s32 %v982, %v984
          %v986 = vrot.slane %v979, %v985
          %v987 = vcombine.low %v962, %v970
          %v988 = vcombine.high %v962, %v970
          %v990 = vunpack.c.l.s4 1934713408
          %v991 = vunpack.c.0.s8 %v990
          %v992 = vlaneseq
          %v993 = vshrl.u32 %v992, 7
          %v994 = vsub.s32 %v991, %v993
          %v995 = vrot.slane %v987, %v994
          %v997 = vunpack.c.l.s4 1934713408
          %v998 = vunpack.c.0.s8 %v997
          %v999 = vlaneseq
          %v1000 = vshrl.u32 %v999, 7
          %v1001 = vsub.s32 %v998, %v1000
          %v1002 = vrot.slane %v988, %v1001
          %v1003 = vcombine.low %v978, %v986
          %v1004 = vcombine.high %v978, %v986
          %v1006 = vunpack.c.l.s4 1934713408
          %v1007 = vunpack.c.0.s8 %v1006
          %v1008 = vlaneseq
          %v1009 = vshrl.u32 %v1008, 7
          %v1010 = vsub.s32 %v1007, %v1009
          %v1011 = vrot.slane %v1003, %v1010
          %v1013 = vunpack.c.l.s4 1934713408
          %v1014 = vunpack.c.0.s8 %v1013
          %v1015 = vlaneseq
          %v1016 = vshrl.u32 %v1015, 7
          %v1017 = vsub.s32 %v1014, %v1016
          %v1018 = vrot.slane %v1004, %v1017
          %v1019 = vcombine.low %v995, %v1011
          %v1020 = vcombine.high %v995, %v1011
          %v1021 = vcombine.low %v1002, %v1018
          %v1022 = vcombine.high %v1002, %v1018
          %1023 = vst.msk [vmem:[#allocation3] sm:$0xff] %vm872, %v1019
          %1024 = vst.msk [vmem:[#allocation3 + $0x8] sm:$0xff] %vm872, %v1020
          %1025 = vst.msk [vmem:[#allocation3 + $0x10] sm:$0xff] %vm872, %v1021
          %1026 = vst.msk [vmem:[#allocation3 + $0x18] sm:$0xff] %vm872, %v1022
        $region92: #{tpu_custom_call.1} parent=79 // pred_fallthru
          _
        %s1027 = smul.u32 %s38, 8
        %s1028 = scalar_lea.vmem %s488, %s1027 [#allocation4]
        %v1029 = vld [vmem:[%s1028] sm:$0xff]
        %v1030 = vld [vmem:[%s1] sm:$0x1]
        %v1031 = vld [vmem:[%s2] sm:$0x1]
        %vm1032 = vcmask 261120
        %v1033 = vsel %vm1032, %v1029, 0.0
        %1034 = vadd.xlane.f32.xlu0 %v1033
        %v1035 = vpop.xlane.xlu0 %1034
        %v1036 = vrcp.pop 32.0
        %v1037 = vmul.f32 %v1035, %v1036
        %v1038 = vsub.f32 %v1029, %v1037
        %v1039 = vmul.f32 %v1038, %v1038
        %v1040 = vsel %vm1032, %v1039, 0.0
        %1041 = vadd.xlane.f32.xlu0 %v1040
        %v1042 = vpop.xlane.xlu0 %1041
        %v1043 = vmul.f32 %v1042, %v1036
        %v1044 = vadd.f32 %v1043, 1e-05
        %v1045 = vrsqrt.pop %v1044
        %v1046 = vmul.f32 %v1038, %v1045
        %v1048 = vlaneseq
        %v1049 = vshrl.u32 %v1048, 7
        %v1050 = vsub.s32 0, %v1049
        %v1051 = vrot.slane %v1030, %v1050
        %v1053 = vmul.f32 %v1046, %v1051
        %v1055 = vlaneseq
        %v1056 = vshrl.u32 %v1055, 7
        %v1057 = vsub.s32 0, %v1056
        %v1058 = vrot.slane %v1031, %v1057
        %v1060 = vadd.f32 %v1053, %v1058
        %v1061 = vld [vmem:[%s9] sm:$0xff]
        %v1062 = vld [vmem:[%s9 + $0x8] sm:$0xff]
        %v1063 = vld [vmem:[%s9 + $0x10] sm:$0xff]
        %v1064 = vld [vmem:[%s9 + $0x18] sm:$0xff]
        %v1066 = vsel %vm1032, %v1060, 0
        %1068 = vmatprep.subr.mxu0 0.0
        %1069 = vmatpush1.msra.mxu0 %v1061
        %1070 = vmatprep.subr.mxu0 0.0
        %1071 = vmatpush1.msra.mxu0 %v1062
        %1072 = vmatprep.subr.mxu0 0.0
        %1073 = vmatpush1.msra.mxu0 %v1063
        %1074 = vmatprep.subr.mxu0 0.0
        %1075 = vmatpush1.msra.mxu0 %v1064
        %1076 = vmatprep.subr.mxu0 0.0
        %1077 = vmatpush1.msra.mxu0 0.0
        %1078 = vmatprep.subr.mxu0 0.0
        %1079 = vmatpush1.msra.mxu0 0.0
        %1080 = vmatprep.subr.mxu0 0.0
        %1081 = vmatpush1.msra.mxu0 0.0
        %1082 = vmatprep.subr.mxu0 0.0
        %1083 = vmatpush1.msra.mxu0 0.0
        %1084 = vmatprep.subr.mxu0 0.0
        %1085 = vmatpush1.msra.mxu0 0.0
        %1086 = vmatprep.subr.mxu0 0.0
        %1087 = vmatpush1.msra.mxu0 0.0
        %1088 = vmatprep.subr.mxu0 0.0
        %1089 = vmatpush1.msra.mxu0 0.0
        %1090 = vmatprep.subr.mxu0 0.0
        %1091 = vmatpush1.msra.mxu0 0.0
        %1092 = vmatprep.subr.mxu0 0.0
        %1093 = vmatpush1.msra.mxu0 0.0
        %1094 = vmatprep.subr.mxu0 0.0
        %1095 = vmatpush1.msra.mxu0 0.0
        %1096 = vmatprep.subr.mxu0 0.0
        %1097 = vmatpush1.msra.mxu0 0.0
        %1098 = vmatprep.subr.mxu0 0.0
        %1099 = vmatpush1.msra.mxu0 0.0
        %1100 = vmatprep.subr.mxu0 0.0
        %1101 = vmatpush1.msra.mxu0 0.0
        %1102 = vmatprep.subr.mxu0 0.0
        %1103 = vmatpush1.msra.mxu0 0.0
        %1104 = vmatprep.subr.mxu0 0.0
        %1105 = vmatpush1.msra.mxu0 0.0
        %1106 = vmatprep.subr.mxu0 0.0
        %1107 = vmatpush1.msra.mxu0 0.0
        %1108 = vmatprep.subr.mxu0 0.0
        %1109 = vmatpush1.msra.mxu0 0.0
        %1110 = vmatprep.subr.mxu0 0.0
        %1111 = vmatpush1.msra.mxu0 0.0
        %1112 = vmatprep.subr.mxu0 0.0
        %1113 = vmatpush1.msra.mxu0 0.0
        %1114 = vmatprep.subr.mxu0 0.0
        %1115 = vmatpush1.msra.mxu0 0.0
        %1116 = vmatprep.subr.mxu0 0.0
        %1117 = vmatpush1.msra.mxu0 0.0
        %1118 = vmatprep.subr.mxu0 0.0
        %1119 = vmatpush1.msra.mxu0 0.0
        %1120 = vmatprep.subr.mxu0 0.0
        %1121 = vmatpush1.msra.mxu0 0.0
        %1122 = vmatprep.subr.mxu0 0.0
        %1123 = vmatpush1.msra.mxu0 0.0
        %1124 = vmatprep.subr.mxu0 0.0
        %1125 = vmatpush1.msra.mxu0 0.0
        %1126 = vmatprep.subr.mxu0 0.0
        %1127 = vmatpush1.msra.mxu0 0.0
        %1128 = vmatprep.subr.mxu0 0.0
        %1129 = vmatpush1.msra.mxu0 0.0
        %1130 = vmatprep.subr.mxu0 0.0
        %1131 = vmatpush1.msra.mxu0 0.0
        %1132 = vmatprep.mubr.f32.mxu0 0.0
        %1133 = vmatmul.mubr.f32.gmra.mrb[0].mxu0 %v1066
        %v1134 = vpop.f32.mrb[0].mxu0
        %v1135 = vadd.f32 0.0, %v1134
        %v1136 = vpop.f32.mrb[0].mxu0
        %1137 = vdwg.mxu0
        %1139 = vrot.lane.b32.xlu0 %v1135, 120
        %v1140 = vpop.permute.xlu0 %1139
        %1142 = vrot.lane.b32.xlu0 %v1135, 112
        %v1143 = vpop.permute.xlu0 %1142
        %1145 = vrot.lane.b32.xlu0 %v1135, 104
        %v1146 = vpop.permute.xlu0 %1145
        %v1148 = vcombine.low %v1135, %v1143
        %v1149 = vcombine.high %v1135, %v1143
        %v1151 = vunpack.c.l.s4 1983009808
        %v1152 = vunpack.c.0.s8 %v1151
        %v1153 = vlaneseq
        %v1154 = vshrl.u32 %v1153, 7
        %v1155 = vsub.s32 %v1152, %v1154
        %v1156 = vrot.slane %v1148, %v1155
        %v1158 = vunpack.c.l.s4 1983009808
        %v1159 = vunpack.c.0.s8 %v1158
        %v1160 = vlaneseq
        %v1161 = vshrl.u32 %v1160, 7
        %v1162 = vsub.s32 %v1159, %v1161
        %v1163 = vrot.slane %v1149, %v1162
        %v1164 = vcombine.low %v1140, %v1146
        %v1165 = vcombine.high %v1140, %v1146
        %v1167 = vunpack.c.l.s4 1983009808
        %v1168 = vunpack.c.0.s8 %v1167
        %v1169 = vlaneseq
        %v1170 = vshrl.u32 %v1169, 7
        %v1171 = vsub.s32 %v1168, %v1170
        %v1172 = vrot.slane %v1164, %v1171
        %v1174 = vunpack.c.l.s4 1983009808
        %v1175 = vunpack.c.0.s8 %v1174
        %v1176 = vlaneseq
        %v1177 = vshrl.u32 %v1176, 7
        %v1178 = vsub.s32 %v1175, %v1177
        %v1179 = vrot.slane %v1165, %v1178
        %v1180 = vcombine.low %v1156, %v1172
        %v1181 = vcombine.high %v1156, %v1172
        %v1183 = vunpack.c.l.s4 1934713408
        %v1184 = vunpack.c.0.s8 %v1183
        %v1185 = vlaneseq
        %v1186 = vshrl.u32 %v1185, 7
        %v1187 = vsub.s32 %v1184, %v1186
        %v1188 = vrot.slane %v1180, %v1187
        %v1190 = vunpack.c.l.s4 1934713408
        %v1191 = vunpack.c.0.s8 %v1190
        %v1192 = vlaneseq
        %v1193 = vshrl.u32 %v1192, 7
        %v1194 = vsub.s32 %v1191, %v1193
        %v1195 = vrot.slane %v1181, %v1194
        %v1196 = vcombine.low %v1163, %v1179
        %v1197 = vcombine.high %v1163, %v1179
        %v1199 = vunpack.c.l.s4 1934713408
        %v1200 = vunpack.c.0.s8 %v1199
        %v1201 = vlaneseq
        %v1202 = vshrl.u32 %v1201, 7
        %v1203 = vsub.s32 %v1200, %v1202
        %v1204 = vrot.slane %v1196, %v1203
        %v1206 = vunpack.c.l.s4 1934713408
        %v1207 = vunpack.c.0.s8 %v1206
        %v1208 = vlaneseq
        %v1209 = vshrl.u32 %v1208, 7
        %v1210 = vsub.s32 %v1207, %v1209
        %v1211 = vrot.slane %v1197, %v1210
        %v1212 = vcombine.high %v1188, 0.0
        %v1213 = vcombine.high %v1195, 0.0
        %v1214 = vcombine.high %v1204, 0.0
        %v1215 = vcombine.high %v1211, 0.0
        %v1216 = vcombine.low %v1188, %v1195
        %v1218 = vunpack.c.l.s4 1983009808
        %v1219 = vunpack.c.0.s8 %v1218
        %v1220 = vlaneseq
        %v1221 = vshrl.u32 %v1220, 7
        %v1222 = vsub.s32 %v1219, %v1221
        %v1223 = vrot.slane %v1216, %v1222
        %v1224 = vcombine.low %v1212, %v1213
        %v1226 = vunpack.c.l.s4 1983009808
        %v1227 = vunpack.c.0.s8 %v1226
        %v1228 = vlaneseq
        %v1229 = vshrl.u32 %v1228, 7
        %v1230 = vsub.s32 %v1227, %v1229
        %v1231 = vrot.slane %v1224, %v1230
        %v1232 = vcombine.low %v1204, %v1211
        %v1234 = vunpack.c.l.s4 1983009808
        %v1235 = vunpack.c.0.s8 %v1234
        %v1236 = vlaneseq
        %v1237 = vshrl.u32 %v1236, 7
        %v1238 = vsub.s32 %v1235, %v1237
        %v1239 = vrot.slane %v1232, %v1238
        %v1240 = vcombine.low %v1214, %v1215
        %v1242 = vunpack.c.l.s4 1983009808
        %v1243 = vunpack.c.0.s8 %v1242
        %v1244 = vlaneseq
        %v1245 = vshrl.u32 %v1244, 7
        %v1246 = vsub.s32 %v1243, %v1245
        %v1247 = vrot.slane %v1240, %v1246
        %v1248 = vcombine.low %v1223, %v1231
        %v1249 = vcombine.high %v1223, %v1231
        %v1251 = vunpack.c.l.s4 1934713408
        %v1252 = vunpack.c.0.s8 %v1251
        %v1253 = vlaneseq
        %v1254 = vshrl.u32 %v1253, 7
        %v1255 = vsub.s32 %v1252, %v1254
        %v1256 = vrot.slane %v1248, %v1255
        %v1258 = vunpack.c.l.s4 1934713408
        %v1259 = vunpack.c.0.s8 %v1258
        %v1260 = vlaneseq
        %v1261 = vshrl.u32 %v1260, 7
        %v1262 = vsub.s32 %v1259, %v1261
        %v1263 = vrot.slane %v1249, %v1262
        %v1264 = vcombine.low %v1239, %v1247
        %v1265 = vcombine.high %v1239, %v1247
        %v1267 = vunpack.c.l.s4 1934713408
        %v1268 = vunpack.c.0.s8 %v1267
        %v1269 = vlaneseq
        %v1270 = vshrl.u32 %v1269, 7
        %v1271 = vsub.s32 %v1268, %v1270
        %v1272 = vrot.slane %v1264, %v1271
        %v1274 = vunpack.c.l.s4 1934713408
        %v1275 = vunpack.c.0.s8 %v1274
        %v1276 = vlaneseq
        %v1277 = vshrl.u32 %v1276, 7
        %v1278 = vsub.s32 %v1275, %v1277
        %v1279 = vrot.slane %v1265, %v1278
        %v1280 = vcombine.low %v1256, %v1272
        %v1281 = vcombine.high %v1256, %v1272
        %v1282 = vcombine.low %v1263, %v1279
        %v1283 = vcombine.high %v1263, %v1279
        // While loop
        $region93: #{tpu_custom_call.1} parent=79 // loop_pre_header
          _
        $region94: #{tpu_custom_call.1} parent=79 // loop_header
          %s1285 = sphi 0, %s1287
          %p1286 = scmp.ge.s32.totalorder %s1285, %s38
          %v1290 = vphi -inf, %v1630
          %v1291 = vphi -inf, %v1631
          %v1292 = vphi -inf, %v1632
          %v1293 = vphi -inf, %v1633
          %v1294 = vphi 0.0, %v1674
          %v1295 = vphi 0.0, %v1675
          %v1296 = vphi 0.0, %v1676
          %v1297 = vphi 0.0, %v1677
          %v1298 = vphi 0.0, %v1974
          %v1299 = vphi 0.0, %v1975
          %v1300 = vphi 0.0, %v1976
          %v1301 = vphi 0.0, %v1977
        $region95: #{tpu_custom_call.1} parent=79 // loop_header_branch
          %1289 = sbr.rel (%p1286) target = $region99
        $region96: #{tpu_custom_call.1} parent=79 // loop_body
          %s1302 = smul.u32 %s1285, 8
          %s1303 = scalar_lea.vmem [#allocation2], %s1302
          %v1304 = vld [vmem:[%s1303] sm:$0xff]
          %v1305 = vld [vmem:[%s1303 + $0x8] sm:$0xff]
          %v1306 = vld [vmem:[%s1303 + $0x10] sm:$0xff]
          %v1307 = vld [vmem:[%s1303 + $0x18] sm:$0xff]
          %s1308 = scalar_lea.vmem [#allocation3], %s1302
          %v1309 = vld [vmem:[%s1308] sm:$0xff]
          %v1310 = vld [vmem:[%s1308 + $0x8] sm:$0xff]
          %v1311 = vld [vmem:[%s1308 + $0x10] sm:$0xff]
          %v1312 = vld [vmem:[%s1308 + $0x18] sm:$0xff]
          %vm1313 = vcmask 64512
          %v1315 = vsel %vm1313, %v1280, 0
          %v1318 = vsel %vm1313, %v1304, 0
          %1320 = vmatprep.subr.mxu0 0.0
          %1321 = vmatpush1.xpose.msra.mxu0 %v1318
          %1322 = vmatprep.subr.mxu0 0.0
          %1323 = vmatpush1.xpose.msra.mxu0 0.0
          %1324 = vmatprep.subr.mxu0 0.0
          %1325 = vmatpush1.xpose.msra.mxu0 0.0
          %1326 = vmatprep.subr.mxu0 0.0
          %1327 = vmatpush1.xpose.msra.mxu0 0.0
          %1328 = vmatprep.subr.mxu0 0.0
          %1329 = vmatpush1.xpose.msra.mxu0 0.0
          %1330 = vmatprep.subr.mxu0 0.0
          %1331 = vmatpush1.xpose.msra.mxu0 0.0
          %1332 = vmatprep.subr.mxu0 0.0
          %1333 = vmatpush1.xpose.msra.mxu0 0.0
          %1334 = vmatprep.subr.mxu0 0.0
          %1335 = vmatpush1.xpose.msra.mxu0 0.0
          %1336 = vmatprep.subr.mxu0 0.0
          %1337 = vmatpush1.xpose.msra.mxu0 0.0
          %1338 = vmatprep.subr.mxu0 0.0
          %1339 = vmatpush1.xpose.msra.mxu0 0.0
          %1340 = vmatprep.subr.mxu0 0.0
          %1341 = vmatpush1.xpose.msra.mxu0 0.0
          %1342 = vmatprep.subr.mxu0 0.0
          %1343 = vmatpush1.xpose.msra.mxu0 0.0
          %1344 = vmatprep.subr.mxu0 0.0
          %1345 = vmatpush1.xpose.msra.mxu0 0.0
          %1346 = vmatprep.subr.mxu0 0.0
          %1347 = vmatpush1.xpose.msra.mxu0 0.0
          %1348 = vmatprep.subr.mxu0 0.0
          %1349 = vmatpush1.xpose.msra.mxu0 0.0
          %1350 = vmatprep.subr.mxu0 0.0
          %1351 = vmatpush1.xpose.msra.mxu0 0.0
          %1352 = vmatprep.subr.mxu0 0.0
          %1353 = vmatpush1.xpose.msra.mxu0 0.0
          %1354 = vmatprep.subr.mxu0 0.0
          %1355 = vmatpush1.xpose.msra.mxu0 0.0
          %1356 = vmatprep.subr.mxu0 0.0
          %1357 = vmatpush1.xpose.msra.mxu0 0.0
          %1358 = vmatprep.subr.mxu0 0.0
          %1359 = vmatpush1.xpose.msra.mxu0 0.0
          %1360 = vmatprep.subr.mxu0 0.0
          %1361 = vmatpush1.xpose.msra.mxu0 0.0
          %1362 = vmatprep.subr.mxu0 0.0
          %1363 = vmatpush1.xpose.msra.mxu0 0.0
          %1364 = vmatprep.subr.mxu0 0.0
          %1365 = vmatpush1.xpose.msra.mxu0 0.0
          %1366 = vmatprep.subr.mxu0 0.0
          %1367 = vmatpush1.xpose.msra.mxu0 0.0
          %1368 = vmatprep.subr.mxu0 0.0
          %1369 = vmatpush1.xpose.msra.mxu0 0.0
          %1370 = vmatprep.subr.mxu0 0.0
          %1371 = vmatpush1.xpose.msra.mxu0 0.0
          %1372 = vmatprep.subr.mxu0 0.0
          %1373 = vmatpush1.xpose.msra.mxu0 0.0
          %1374 = vmatprep.subr.mxu0 0.0
          %1375 = vmatpush1.xpose.msra.mxu0 0.0
          %1376 = vmatprep.subr.mxu0 0.0
          %1377 = vmatpush1.xpose.msra.mxu0 0.0
          %1378 = vmatprep.subr.mxu0 0.0
          %1379 = vmatpush1.xpose.msra.mxu0 0.0
          %1380 = vmatprep.subr.mxu0 0.0
          %1381 = vmatpush1.xpose.msra.mxu0 0.0
          %1382 = vmatprep.subr.mxu0 0.0
          %1383 = vmatpush1.xpose.msra.mxu0 0.0
          %1384 = vmatprep.mubr.f32.mxu0 0.0
          %1385 = vmatmul.mubr.f32.gmra.mrb[0].mxu0 %v1315
          %v1386 = vpop.f32.mrb[0].mxu0
          %v1387 = vadd.f32 0.0, %v1386
          %v1388 = vpop.f32.mrb[0].mxu0
          %1389 = vdwg.mxu0
          %v1391 = vsel %vm1313, %v1281, 0
          %v1394 = vsel %vm1313, %v1305, 0
          %1396 = vmatprep.subr.mxu0 0.0
          %1397 = vmatpush1.xpose.msra.mxu0 %v1394
          %1398 = vmatprep.subr.mxu0 0.0
          %1399 = vmatpush1.xpose.msra.mxu0 0.0
          %1400 = vmatprep.subr.mxu0 0.0
          %1401 = vmatpush1.xpose.msra.mxu0 0.0
          %1402 = vmatprep.subr.mxu0 0.0
          %1403 = vmatpush1.xpose.msra.mxu0 0.0
          %1404 = vmatprep.subr.mxu0 0.0
          %1405 = vmatpush1.xpose.msra.mxu0 0.0
          %1406 = vmatprep.subr.mxu0 0.0
          %1407 = vmatpush1.xpose.msra.mxu0 0.0
          %1408 = vmatprep.subr.mxu0 0.0
          %1409 = vmatpush1.xpose.msra.mxu0 0.0
          %1410 = vmatprep.subr.mxu0 0.0
          %1411 = vmatpush1.xpose.msra.mxu0 0.0
          %1412 = vmatprep.subr.mxu0 0.0
          %1413 = vmatpush1.xpose.msra.mxu0 0.0
          %1414 = vmatprep.subr.mxu0 0.0
          %1415 = vmatpush1.xpose.msra.mxu0 0.0
          %1416 = vmatprep.subr.mxu0 0.0
          %1417 = vmatpush1.xpose.msra.mxu0 0.0
          %1418 = vmatprep.subr.mxu0 0.0
          %1419 = vmatpush1.xpose.msra.mxu0 0.0
          %1420 = vmatprep.subr.mxu0 0.0
          %1421 = vmatpush1.xpose.msra.mxu0 0.0
          %1422 = vmatprep.subr.mxu0 0.0
          %1423 = vmatpush1.xpose.msra.mxu0 0.0
          %1424 = vmatprep.subr.mxu0 0.0
          %1425 = vmatpush1.xpose.msra.mxu0 0.0
          %1426 = vmatprep.subr.mxu0 0.0
          %1427 = vmatpush1.xpose.msra.mxu0 0.0
          %1428 = vmatprep.subr.mxu0 0.0
          %1429 = vmatpush1.xpose.msra.mxu0 0.0
          %1430 = vmatprep.subr.mxu0 0.0
          %1431 = vmatpush1.xpose.msra.mxu0 0.0
          %1432 = vmatprep.subr.mxu0 0.0
          %1433 = vmatpush1.xpose.msra.mxu0 0.0
          %1434 = vmatprep.subr.mxu0 0.0
          %1435 = vmatpush1.xpose.msra.mxu0 0.0
          %1436 = vmatprep.subr.mxu0 0.0
          %1437 = vmatpush1.xpose.msra.mxu0 0.0
          %1438 = vmatprep.subr.mxu0 0.0
          %1439 = vmatpush1.xpose.msra.mxu0 0.0
          %1440 = vmatprep.subr.mxu0 0.0
          %1441 = vmatpush1.xpose.msra.mxu0 0.0
          %1442 = vmatprep.subr.mxu0 0.0
          %1443 = vmatpush1.xpose.msra.mxu0 0.0
          %1444 = vmatprep.subr.mxu0 0.0
          %1445 = vmatpush1.xpose.msra.mxu0 0.0
          %1446 = vmatprep.subr.mxu0 0.0
          %1447 = vmatpush1.xpose.msra.mxu0 0.0
          %1448 = vmatprep.subr.mxu0 0.0
          %1449 = vmatpush1.xpose.msra.mxu0 0.0
          %1450 = vmatprep.subr.mxu0 0.0
          %1451 = vmatpush1.xpose.msra.mxu0 0.0
          %1452 = vmatprep.subr.mxu0 0.0
          %1453 = vmatpush1.xpose.msra.mxu0 0.0
          %1454 = vmatprep.subr.mxu0 0.0
          %1455 = vmatpush1.xpose.msra.mxu0 0.0
          %1456 = vmatprep.subr.mxu0 0.0
          %1457 = vmatpush1.xpose.msra.mxu0 0.0
          %1458 = vmatprep.subr.mxu0 0.0
          %1459 = vmatpush1.xpose.msra.mxu0 0.0
          %1460 = vmatprep.mubr.f32.mxu0 0.0
          %1461 = vmatmul.mubr.f32.gmra.mrb[0].mxu0 %v1391
          %v1462 = vpop.f32.mrb[0].mxu0
          %v1463 = vadd.f32 0.0, %v1462
          %v1464 = vpop.f32.mrb[0].mxu0
          %1465 = vdwg.mxu0
          %v1467 = vsel %vm1313, %v1282, 0
          %v1470 = vsel %vm1313, %v1306, 0
          %1472 = vmatprep.subr.mxu0 0.0
          %1473 = vmatpush1.xpose.msra.mxu0 %v1470
          %1474 = vmatprep.subr.mxu0 0.0
          %1475 = vmatpush1.xpose.msra.mxu0 0.0
          %1476 = vmatprep.subr.mxu0 0.0
          %1477 = vmatpush1.xpose.msra.mxu0 0.0
          %1478 = vmatprep.subr.mxu0 0.0
          %1479 = vmatpush1.xpose.msra.mxu0 0.0
          %1480 = vmatprep.subr.mxu0 0.0
          %1481 = vmatpush1.xpose.msra.mxu0 0.0
          %1482 = vmatprep.subr.mxu0 0.0
          %1483 = vmatpush1.xpose.msra.mxu0 0.0
          %1484 = vmatprep.subr.mxu0 0.0
          %1485 = vmatpush1.xpose.msra.mxu0 0.0
          %1486 = vmatprep.subr.mxu0 0.0
          %1487 = vmatpush1.xpose.msra.mxu0 0.0
          %1488 = vmatprep.subr.mxu0 0.0
          %1489 = vmatpush1.xpose.msra.mxu0 0.0
          %1490 = vmatprep.subr.mxu0 0.0
          %1491 = vmatpush1.xpose.msra.mxu0 0.0
          %1492 = vmatprep.subr.mxu0 0.0
          %1493 = vmatpush1.xpose.msra.mxu0 0.0
          %1494 = vmatprep.subr.mxu0 0.0
          %1495 = vmatpush1.xpose.msra.mxu0 0.0
          %1496 = vmatprep.subr.mxu0 0.0
          %1497 = vmatpush1.xpose.msra.mxu0 0.0
          %1498 = vmatprep.subr.mxu0 0.0
          %1499 = vmatpush1.xpose.msra.mxu0 0.0
          %1500 = vmatprep.subr.mxu0 0.0
          %1501 = vmatpush1.xpose.msra.mxu0 0.0
          %1502 = vmatprep.subr.mxu0 0.0
          %1503 = vmatpush1.xpose.msra.mxu0 0.0
          %1504 = vmatprep.subr.mxu0 0.0
          %1505 = vmatpush1.xpose.msra.mxu0 0.0
          %1506 = vmatprep.subr.mxu0 0.0
          %1507 = vmatpush1.xpose.msra.mxu0 0.0
          %1508 = vmatprep.subr.mxu0 0.0
          %1509 = vmatpush1.xpose.msra.mxu0 0.0
          %1510 = vmatprep.subr.mxu0 0.0
          %1511 = vmatpush1.xpose.msra.mxu0 0.0
          %1512 = vmatprep.subr.mxu0 0.0
          %1513 = vmatpush1.xpose.msra.mxu0 0.0
          %1514 = vmatprep.subr.mxu0 0.0
          %1515 = vmatpush1.xpose.msra.mxu0 0.0
          %1516 = vmatprep.subr.mxu0 0.0
          %1517 = vmatpush1.xpose.msra.mxu0 0.0
          %1518 = vmatprep.subr.mxu0 0.0
          %1519 = vmatpush1.xpose.msra.mxu0 0.0
          %1520 = vmatprep.subr.mxu0 0.0
          %1521 = vmatpush1.xpose.msra.mxu0 0.0
          %1522 = vmatprep.subr.mxu0 0.0
          %1523 = vmatpush1.xpose.msra.mxu0 0.0
          %1524 = vmatprep.subr.mxu0 0.0
          %1525 = vmatpush1.xpose.msra.mxu0 0.0
          %1526 = vmatprep.subr.mxu0 0.0
          %1527 = vmatpush1.xpose.msra.mxu0 0.0
          %1528 = vmatprep.subr.mxu0 0.0
          %1529 = vmatpush1.xpose.msra.mxu0 0.0
          %1530 = vmatprep.subr.mxu0 0.0
          %1531 = vmatpush1.xpose.msra.mxu0 0.0
          %1532 = vmatprep.subr.mxu0 0.0
          %1533 = vmatpush1.xpose.msra.mxu0 0.0
          %1534 = vmatprep.subr.mxu0 0.0
          %1535 = vmatpush1.xpose.msra.mxu0 0.0
          %1536 = vmatprep.mubr.f32.mxu0 0.0
          %1537 = vmatmul.mubr.f32.gmra.mrb[0].mxu0 %v1467
          %v1538 = vpop.f32.mrb[0].mxu0
          %v1539 = vadd.f32 0.0, %v1538
          %v1540 = vpop.f32.mrb[0].mxu0
          %1541 = vdwg.mxu0
          %v1543 = vsel %vm1313, %v1283, 0
          %v1546 = vsel %vm1313, %v1307, 0
          %1548 = vmatprep.subr.mxu0 0.0
          %1549 = vmatpush1.xpose.msra.mxu0 %v1546
          %1550 = vmatprep.subr.mxu0 0.0
          %1551 = vmatpush1.xpose.msra.mxu0 0.0
          %1552 = vmatprep.subr.mxu0 0.0
          %1553 = vmatpush1.xpose.msra.mxu0 0.0
          %1554 = vmatprep.subr.mxu0 0.0
          %1555 = vmatpush1.xpose.msra.mxu0 0.0
          %1556 = vmatprep.subr.mxu0 0.0
          %1557 = vmatpush1.xpose.msra.mxu0 0.0
          %1558 = vmatprep.subr.mxu0 0.0
          %1559 = vmatpush1.xpose.msra.mxu0 0.0
          %1560 = vmatprep.subr.mxu0 0.0
          %1561 = vmatpush1.xpose.msra.mxu0 0.0
          %1562 = vmatprep.subr.mxu0 0.0
          %1563 = vmatpush1.xpose.msra.mxu0 0.0
          %1564 = vmatprep.subr.mxu0 0.0
          %1565 = vmatpush1.xpose.msra.mxu0 0.0
          %1566 = vmatprep.subr.mxu0 0.0
          %1567 = vmatpush1.xpose.msra.mxu0 0.0
          %1568 = vmatprep.subr.mxu0 0.0
          %1569 = vmatpush1.xpose.msra.mxu0 0.0
          %1570 = vmatprep.subr.mxu0 0.0
          %1571 = vmatpush1.xpose.msra.mxu0 0.0
          %1572 = vmatprep.subr.mxu0 0.0
          %1573 = vmatpush1.xpose.msra.mxu0 0.0
          %1574 = vmatprep.subr.mxu0 0.0
          %1575 = vmatpush1.xpose.msra.mxu0 0.0
          %1576 = vmatprep.subr.mxu0 0.0
          %1577 = vmatpush1.xpose.msra.mxu0 0.0
          %1578 = vmatprep.subr.mxu0 0.0
          %1579 = vmatpush1.xpose.msra.mxu0 0.0
          %1580 = vmatprep.subr.mxu0 0.0
          %1581 = vmatpush1.xpose.msra.mxu0 0.0
          %1582 = vmatprep.subr.mxu0 0.0
          %1583 = vmatpush1.xpose.msra.mxu0 0.0
          %1584 = vmatprep.subr.mxu0 0.0
          %1585 = vmatpush1.xpose.msra.mxu0 0.0
          %1586 = vmatprep.subr.mxu0 0.0
          %1587 = vmatpush1.xpose.msra.mxu0 0.0
          %1588 = vmatprep.subr.mxu0 0.0
          %1589 = vmatpush1.xpose.msra.mxu0 0.0
          %1590 = vmatprep.subr.mxu0 0.0
          %1591 = vmatpush1.xpose.msra.mxu0 0.0
          %1592 = vmatprep.subr.mxu0 0.0
          %1593 = vmatpush1.xpose.msra.mxu0 0.0
          %1594 = vmatprep.subr.mxu0 0.0
          %1595 = vmatpush1.xpose.msra.mxu0 0.0
          %1596 = vmatprep.subr.mxu0 0.0
          %1597 = vmatpush1.xpose.msra.mxu0 0.0
          %1598 = vmatprep.subr.mxu0 0.0
          %1599 = vmatpush1.xpose.msra.mxu0 0.0
          %1600 = vmatprep.subr.mxu0 0.0
          %1601 = vmatpush1.xpose.msra.mxu0 0.0
          %1602 = vmatprep.subr.mxu0 0.0
          %1603 = vmatpush1.xpose.msra.mxu0 0.0
          %1604 = vmatprep.subr.mxu0 0.0
          %1605 = vmatpush1.xpose.msra.mxu0 0.0
          %1606 = vmatprep.subr.mxu0 0.0
          %1607 = vmatpush1.xpose.msra.mxu0 0.0
          %1608 = vmatprep.subr.mxu0 0.0
          %1609 = vmatpush1.xpose.msra.mxu0 0.0
          %1610 = vmatprep.subr.mxu0 0.0
          %1611 = vmatpush1.xpose.msra.mxu0 0.0
          %1612 = vmatprep.mubr.f32.mxu0 0.0
          %1613 = vmatmul.mubr.f32.gmra.mrb[0].mxu0 %v1543
          %v1614 = vpop.f32.mrb[0].mxu0
          %v1615 = vadd.f32 0.0, %v1614
          %v1616 = vpop.f32.mrb[0].mxu0
          %1617 = vdwg.mxu0
          %v1618 = vsel %vm1313, %v1387, -inf
          %1619 = vmax.xlane.f32.xlu0 %v1618
          %v1620 = vpop.xlane.xlu0 %1619
          %v1621 = vsel %vm1313, %v1463, -inf
          %1622 = vmax.xlane.f32.xlu0 %v1621
          %v1623 = vpop.xlane.xlu0 %1622
          %v1624 = vsel %vm1313, %v1539, -inf
          %1625 = vmax.xlane.f32.xlu0 %v1624
          %v1626 = vpop.xlane.xlu0 %1625
          %v1627 = vsel %vm1313, %v1615, -inf
          %1628 = vmax.xlane.f32.xlu0 %v1627
          %v1629 = vpop.xlane.xlu0 %1628
          %v1630 = vmax.f32 %v1290, %v1620
          %v1631 = vmax.f32 %v1291, %v1623
          %v1632 = vmax.f32 %v1292, %v1626
          %v1633 = vmax.f32 %v1293, %v1629
          %v1634 = vsub.f32 %v1290, %v1630
          %v1635 = vsub.f32 %v1291, %v1631
          %v1636 = vsub.f32 %v1292, %v1632
          %v1637 = vsub.f32 %v1293, %v1633
          %v1638 = vmul.f32 %v1634, 1.442695
          %v1639 = vpow.pop %v1638
          %v1640 = vmul.f32 %v1635, 1.442695
          %v1641 = vpow.pop %v1640
          %v1642 = vmul.f32 %v1636, 1.442695
          %v1643 = vpow.pop %v1642
          %v1644 = vmul.f32 %v1637, 1.442695
          %v1645 = vpow.pop %v1644
          %v1646 = vsub.f32 %v1387, %v1630
          %v1647 = vsub.f32 %v1463, %v1631
          %v1648 = vsub.f32 %v1539, %v1632
          %v1649 = vsub.f32 %v1615, %v1633
          %v1650 = vmul.f32 %v1646, 1.442695
          %v1651 = vpow.pop %v1650
          %v1652 = vmul.f32 %v1647, 1.442695
          %v1653 = vpow.pop %v1652
          %v1654 = vmul.f32 %v1648, 1.442695
          %v1655 = vpow.pop %v1654
          %v1656 = vmul.f32 %v1649, 1.442695
          %v1657 = vpow.pop %v1656
          %v1658 = vmul.f32 %v1639, %v1294
          %v1659 = vmul.f32 %v1641, %v1295
          %v1660 = vmul.f32 %v1643, %v1296
          %v1661 = vmul.f32 %v1645, %v1297
          %v1662 = vsel %vm1313, %v1651, 0.0
          %1663 = vadd.xlane.f32.xlu0 %v1662
          %v1664 = vpop.xlane.xlu0 %1663
          %v1665 = vsel %vm1313, %v1653, 0.0
          %1666 = vadd.xlane.f32.xlu0 %v1665
          %v1667 = vpop.xlane.xlu0 %1666
          %v1668 = vsel %vm1313, %v1655, 0.0
          %1669 = vadd.xlane.f32.xlu0 %v1668
          %v1670 = vpop.xlane.xlu0 %1669
          %v1671 = vsel %vm1313, %v1657, 0.0
          %1672 = vadd.xlane.f32.xlu0 %v1671
          %v1673 = vpop.xlane.xlu0 %1672
          %v1674 = vadd.f32 %v1658, %v1664
          %v1675 = vadd.f32 %v1659, %v1667
          %v1676 = vadd.f32 %v1660, %v1670
          %v1677 = vadd.f32 %v1661, %v1673
          %v1678 = vmul.f32 %v1639, %v1298
          %v1679 = vmul.f32 %v1641, %v1299
          %v1680 = vmul.f32 %v1643, %v1300
          %v1681 = vmul.f32 %v1645, %v1301
          %v1683 = vsel %vm1313, %v1651, 0
          %1685 = vmatprep.subr.mxu0 0.0
          %1686 = vmatpush1.msra.mxu0 %v1309
          %1687 = vmatprep.subr.mxu0 0.0
          %1688 = vmatpush1.msra.mxu0 0.0
          %1689 = vmatprep.subr.mxu0 0.0
          %1690 = vmatpush1.msra.mxu0 0.0
          %1691 = vmatprep.subr.mxu0 0.0
          %1692 = vmatpush1.msra.mxu0 0.0
          %1693 = vmatprep.subr.mxu0 0.0
          %1694 = vmatpush1.msra.mxu0 0.0
          %1695 = vmatprep.subr.mxu0 0.0
          %1696 = vmatpush1.msra.mxu0 0.0
          %1697 = vmatprep.subr.mxu0 0.0
          %1698 = vmatpush1.msra.mxu0 0.0
          %1699 = vmatprep.subr.mxu0 0.0
          %1700 = vmatpush1.msra.mxu0 0.0
          %1701 = vmatprep.subr.mxu0 0.0
          %1702 = vmatpush1.msra.mxu0 0.0
          %1703 = vmatprep.subr.mxu0 0.0
          %1704 = vmatpush1.msra.mxu0 0.0
          %1705 = vmatprep.subr.mxu0 0.0
          %1706 = vmatpush1.msra.mxu0 0.0
          %1707 = vmatprep.subr.mxu0 0.0
          %1708 = vmatpush1.msra.mxu0 0.0
          %1709 = vmatprep.subr.mxu0 0.0
          %1710 = vmatpush1.msra.mxu0 0.0
          %1711 = vmatprep.subr.mxu0 0.0
          %1712 = vmatpush1.msra.mxu0 0.0
          %1713 = vmatprep.subr.mxu0 0.0
          %1714 = vmatpush1.msra.mxu0 0.0
          %1715 = vmatprep.subr.mxu0 0.0
          %1716 = vmatpush1.msra.mxu0 0.0
          %1717 = vmatprep.subr.mxu0 0.0
          %1718 = vmatpush1.msra.mxu0 0.0
          %1719 = vmatprep.subr.mxu0 0.0
          %1720 = vmatpush1.msra.mxu0 0.0
          %1721 = vmatprep.subr.mxu0 0.0
          %1722 = vmatpush1.msra.mxu0 0.0
          %1723 = vmatprep.subr.mxu0 0.0
          %1724 = vmatpush1.msra.mxu0 0.0
          %1725 = vmatprep.subr.mxu0 0.0
          %1726 = vmatpush1.msra.mxu0 0.0
          %1727 = vmatprep.subr.mxu0 0.0
          %1728 = vmatpush1.msra.mxu0 0.0
          %1729 = vmatprep.subr.mxu0 0.0
          %1730 = vmatpush1.msra.mxu0 0.0
          %1731 = vmatprep.subr.mxu0 0.0
          %1732 = vmatpush1.msra.mxu0 0.0
          %1733 = vmatprep.subr.mxu0 0.0
          %1734 = vmatpush1.msra.mxu0 0.0
          %1735 = vmatprep.subr.mxu0 0.0
          %1736 = vmatpush1.msra.mxu0 0.0
          %1737 = vmatprep.subr.mxu0 0.0
          %1738 = vmatpush1.msra.mxu0 0.0
          %1739 = vmatprep.subr.mxu0 0.0
          %1740 = vmatpush1.msra.mxu0 0.0
          %1741 = vmatprep.subr.mxu0 0.0
          %1742 = vmatpush1.msra.mxu0 0.0
          %1743 = vmatprep.subr.mxu0 0.0
          %1744 = vmatpush1.msra.mxu0 0.0
          %1745 = vmatprep.subr.mxu0 0.0
          %1746 = vmatpush1.msra.mxu0 0.0
          %1747 = vmatprep.subr.mxu0 0.0
          %1748 = vmatpush1.msra.mxu0 0.0
          %1749 = vmatprep.mubr.f32.mxu0 0.0
          %1750 = vmatmul.mubr.f32.gmra.mrb[0].mxu0 %v1683
          %v1751 = vpop.f32.mrb[0].mxu0
          %v1752 = vadd.f32 0.0, %v1751
          %v1753 = vpop.f32.mrb[0].mxu0
          %1754 = vdwg.mxu0
          %v1756 = vsel %vm1313, %v1653, 0
          %1758 = vmatprep.subr.mxu0 0.0
          %1759 = vmatpush1.msra.mxu0 %v1310
          %1760 = vmatprep.subr.mxu0 0.0
          %1761 = vmatpush1.msra.mxu0 0.0
          %1762 = vmatprep.subr.mxu0 0.0
          %1763 = vmatpush1.msra.mxu0 0.0
          %1764 = vmatprep.subr.mxu0 0.0
          %1765 = vmatpush1.msra.mxu0 0.0
          %1766 = vmatprep.subr.mxu0 0.0
          %1767 = vmatpush1.msra.mxu0 0.0
          %1768 = vmatprep.subr.mxu0 0.0
          %1769 = vmatpush1.msra.mxu0 0.0
          %1770 = vmatprep.subr.mxu0 0.0
          %1771 = vmatpush1.msra.mxu0 0.0
          %1772 = vmatprep.subr.mxu0 0.0
          %1773 = vmatpush1.msra.mxu0 0.0
          %1774 = vmatprep.subr.mxu0 0.0
          %1775 = vmatpush1.msra.mxu0 0.0
          %1776 = vmatprep.subr.mxu0 0.0
          %1777 = vmatpush1.msra.mxu0 0.0
          %1778 = vmatprep.subr.mxu0 0.0
          %1779 = vmatpush1.msra.mxu0 0.0
          %1780 = vmatprep.subr.mxu0 0.0
          %1781 = vmatpush1.msra.mxu0 0.0
          %1782 = vmatprep.subr.mxu0 0.0
          %1783 = vmatpush1.msra.mxu0 0.0
          %1784 = vmatprep.subr.mxu0 0.0
          %1785 = vmatpush1.msra.mxu0 0.0
          %1786 = vmatprep.subr.mxu0 0.0
          %1787 = vmatpush1.msra.mxu0 0.0
          %1788 = vmatprep.subr.mxu0 0.0
          %1789 = vmatpush1.msra.mxu0 0.0
          %1790 = vmatprep.subr.mxu0 0.0
          %1791 = vmatpush1.msra.mxu0 0.0
          %1792 = vmatprep.subr.mxu0 0.0
          %1793 = vmatpush1.msra.mxu0 0.0
          %1794 = vmatprep.subr.mxu0 0.0
          %1795 = vmatpush1.msra.mxu0 0.0
          %1796 = vmatprep.subr.mxu0 0.0
          %1797 = vmatpush1.msra.mxu0 0.0
          %1798 = vmatprep.subr.mxu0 0.0
          %1799 = vmatpush1.msra.mxu0 0.0
          %1800 = vmatprep.subr.mxu0 0.0
          %1801 = vmatpush1.msra.mxu0 0.0
          %1802 = vmatprep.subr.mxu0 0.0
          %1803 = vmatpush1.msra.mxu0 0.0
          %1804 = vmatprep.subr.mxu0 0.0
          %1805 = vmatpush1.msra.mxu0 0.0
          %1806 = vmatprep.subr.mxu0 0.0
          %1807 = vmatpush1.msra.mxu0 0.0
          %1808 = vmatprep.subr.mxu0 0.0
          %1809 = vmatpush1.msra.mxu0 0.0
          %1810 = vmatprep.subr.mxu0 0.0
          %1811 = vmatpush1.msra.mxu0 0.0
          %1812 = vmatprep.subr.mxu0 0.0
          %1813 = vmatpush1.msra.mxu0 0.0
          %1814 = vmatprep.subr.mxu0 0.0
          %1815 = vmatpush1.msra.mxu0 0.0
          %1816 = vmatprep.subr.mxu0 0.0
          %1817 = vmatpush1.msra.mxu0 0.0
          %1818 = vmatprep.subr.mxu0 0.0
          %1819 = vmatpush1.msra.mxu0 0.0
          %1820 = vmatprep.subr.mxu0 0.0
          %1821 = vmatpush1.msra.mxu0 0.0
          %1822 = vmatprep.mubr.f32.mxu0 0.0
          %1823 = vmatmul.mubr.f32.gmra.mrb[0].mxu0 %v1756
          %v1824 = vpop.f32.mrb[0].mxu0
          %v1825 = vadd.f32 0.0, %v1824
          %v1826 = vpop.f32.mrb[0].mxu0
          %1827 = vdwg.mxu0
          %v1829 = vsel %vm1313, %v1655, 0
          %1831 = vmatprep.subr.mxu0 0.0
          %1832 = vmatpush1.msra.mxu0 %v1311
          %1833 = vmatprep.subr.mxu0 0.0
          %1834 = vmatpush1.msra.mxu0 0.0
          %1835 = vmatprep.subr.mxu0 0.0
          %1836 = vmatpush1.msra.mxu0 0.0
          %1837 = vmatprep.subr.mxu0 0.0
          %1838 = vmatpush1.msra.mxu0 0.0
          %1839 = vmatprep.subr.mxu0 0.0
          %1840 = vmatpush1.msra.mxu0 0.0
          %1841 = vmatprep.subr.mxu0 0.0
          %1842 = vmatpush1.msra.mxu0 0.0
          %1843 = vmatprep.subr.mxu0 0.0
          %1844 = vmatpush1.msra.mxu0 0.0
          %1845 = vmatprep.subr.mxu0 0.0
          %1846 = vmatpush1.msra.mxu0 0.0
          %1847 = vmatprep.subr.mxu0 0.0
          %1848 = vmatpush1.msra.mxu0 0.0
          %1849 = vmatprep.subr.mxu0 0.0
          %1850 = vmatpush1.msra.mxu0 0.0
          %1851 = vmatprep.subr.mxu0 0.0
          %1852 = vmatpush1.msra.mxu0 0.0
          %1853 = vmatprep.subr.mxu0 0.0
          %1854 = vmatpush1.msra.mxu0 0.0
          %1855 = vmatprep.subr.mxu0 0.0
          %1856 = vmatpush1.msra.mxu0 0.0
          %1857 = vmatprep.subr.mxu0 0.0
          %1858 = vmatpush1.msra.mxu0 0.0
          %1859 = vmatprep.subr.mxu0 0.0
          %1860 = vmatpush1.msra.mxu0 0.0
          %1861 = vmatprep.subr.mxu0 0.0
          %1862 = vmatpush1.msra.mxu0 0.0
          %1863 = vmatprep.subr.mxu0 0.0
          %1864 = vmatpush1.msra.mxu0 0.0
          %1865 = vmatprep.subr.mxu0 0.0
          %1866 = vmatpush1.msra.mxu0 0.0
          %1867 = vmatprep.subr.mxu0 0.0
          %1868 = vmatpush1.msra.mxu0 0.0
          %1869 = vmatprep.subr.mxu0 0.0
          %1870 = vmatpush1.msra.mxu0 0.0
          %1871 = vmatprep.subr.mxu0 0.0
          %1872 = vmatpush1.msra.mxu0 0.0
          %1873 = vmatprep.subr.mxu0 0.0
          %1874 = vmatpush1.msra.mxu0 0.0
          %1875 = vmatprep.subr.mxu0 0.0
          %1876 = vmatpush1.msra.mxu0 0.0
          %1877 = vmatprep.subr.mxu0 0.0
          %1878 = vmatpush1.msra.mxu0 0.0
          %1879 = vmatprep.subr.mxu0 0.0
          %1880 = vmatpush1.msra.mxu0 0.0
          %1881 = vmatprep.subr.mxu0 0.0
          %1882 = vmatpush1.msra.mxu0 0.0
          %1883 = vmatprep.subr.mxu0 0.0
          %1884 = vmatpush1.msra.mxu0 0.0
          %1885 = vmatprep.subr.mxu0 0.0
          %1886 = vmatpush1.msra.mxu0 0.0
          %1887 = vmatprep.subr.mxu0 0.0
          %1888 = vmatpush1.msra.mxu0 0.0
          %1889 = vmatprep.subr.mxu0 0.0
          %1890 = vmatpush1.msra.mxu0 0.0
          %1891 = vmatprep.subr.mxu0 0.0
          %1892 = vmatpush1.msra.mxu0 0.0
          %1893 = vmatprep.subr.mxu0 0.0
          %1894 = vmatpush1.msra.mxu0 0.0
          %1895 = vmatprep.mubr.f32.mxu0 0.0
          %1896 = vmatmul.mubr.f32.gmra.mrb[0].mxu0 %v1829
          %v1897 = vpop.f32.mrb[0].mxu0
          %v1898 = vadd.f32 0.0, %v1897
          %v1899 = vpop.f32.mrb[0].mxu0
          %1900 = vdwg.mxu0
          %v1902 = vsel %vm1313, %v1657, 0
          %1904 = vmatprep.subr.mxu0 0.0
          %1905 = vmatpush1.msra.mxu0 %v1312
          %1906 = vmatprep.subr.mxu0 0.0
          %1907 = vmatpush1.msra.mxu0 0.0
          %1908 = vmatprep.subr.mxu0 0.0
          %1909 = vmatpush1.msra.mxu0 0.0
          %1910 = vmatprep.subr.mxu0 0.0
          %1911 = vmatpush1.msra.mxu0 0.0
          %1912 = vmatprep.subr.mxu0 0.0
          %1913 = vmatpush1.msra.mxu0 0.0
          %1914 = vmatprep.subr.mxu0 0.0
          %1915 = vmatpush1.msra.mxu0 0.0
          %1916 = vmatprep.subr.mxu0 0.0
          %1917 = vmatpush1.msra.mxu0 0.0
          %1918 = vmatprep.subr.mxu0 0.0
          %1919 = vmatpush1.msra.mxu0 0.0
          %1920 = vmatprep.subr.mxu0 0.0
          %1921 = vmatpush1.msra.mxu0 0.0
          %1922 = vmatprep.subr.mxu0 0.0
          %1923 = vmatpush1.msra.mxu0 0.0
          %1924 = vmatprep.subr.mxu0 0.0
          %1925 = vmatpush1.msra.mxu0 0.0
          %1926 = vmatprep.subr.mxu0 0.0
          %1927 = vmatpush1.msra.mxu0 0.0
          %1928 = vmatprep.subr.mxu0 0.0
          %1929 = vmatpush1.msra.mxu0 0.0
          %1930 = vmatprep.subr.mxu0 0.0
          %1931 = vmatpush1.msra.mxu0 0.0
          %1932 = vmatprep.subr.mxu0 0.0
          %1933 = vmatpush1.msra.mxu0 0.0
          %1934 = vmatprep.subr.mxu0 0.0
          %1935 = vmatpush1.msra.mxu0 0.0
          %1936 = vmatprep.subr.mxu0 0.0
          %1937 = vmatpush1.msra.mxu0 0.0
          %1938 = vmatprep.subr.mxu0 0.0
          %1939 = vmatpush1.msra.mxu0 0.0
          %1940 = vmatprep.subr.mxu0 0.0
          %1941 = vmatpush1.msra.mxu0 0.0
          %1942 = vmatprep.subr.mxu0 0.0
          %1943 = vmatpush1.msra.mxu0 0.0
          %1944 = vmatprep.subr.mxu0 0.0
          %1945 = vmatpush1.msra.mxu0 0.0
          %1946 = vmatprep.subr.mxu0 0.0
          %1947 = vmatpush1.msra.mxu0 0.0
          %1948 = vmatprep.subr.mxu0 0.0
          %1949 = vmatpush1.msra.mxu0 0.0
          %1950 = vmatprep.subr.mxu0 0.0
          %1951 = vmatpush1.msra.mxu0 0.0
          %1952 = vmatprep.subr.mxu0 0.0
          %1953 = vmatpush1.msra.mxu0 0.0
          %1954 = vmatprep.subr.mxu0 0.0
          %1955 = vmatpush1.msra.mxu0 0.0
          %1956 = vmatprep.subr.mxu0 0.0
          %1957 = vmatpush1.msra.mxu0 0.0
          %1958 = vmatprep.subr.mxu0 0.0
          %1959 = vmatpush1.msra.mxu0 0.0
          %1960 = vmatprep.subr.mxu0 0.0
          %1961 = vmatpush1.msra.mxu0 0.0
          %1962 = vmatprep.subr.mxu0 0.0
          %1963 = vmatpush1.msra.mxu0 0.0
          %1964 = vmatprep.subr.mxu0 0.0
          %1965 = vmatpush1.msra.mxu0 0.0
          %1966 = vmatprep.subr.mxu0 0.0
          %1967 = vmatpush1.msra.mxu0 0.0
          %1968 = vmatprep.mubr.f32.mxu0 0.0
          %1969 = vmatmul.mubr.f32.gmra.mrb[0].mxu0 %v1902
          %v1970 = vpop.f32.mrb[0].mxu0
          %v1971 = vadd.f32 0.0, %v1970
          %v1972 = vpop.f32.mrb[0].mxu0
          %1973 = vdwg.mxu0
          %v1974 = vadd.f32 %v1678, %v1752
          %v1975 = vadd.f32 %v1679, %v1825
          %v1976 = vadd.f32 %v1680, %v1898
          %v1977 = vadd.f32 %v1681, %v1971
        $region97: #{tpu_custom_call.1} parent=79 // loop_footer
          %s1287 = sadd.s32 %s1285, 1
        $region98: #{tpu_custom_call.1} parent=79 // loop_footer_branch
          %1284 = sbr.rel target = $region94
        $region99: #{tpu_custom_call.1} parent=79 // loop_exit
          _
        %s1978 = scalar_lea.vmem [#allocation2], %s1027
        %v1979 = vld [vmem:[%s1978] sm:$0xff]
        %v1980 = vld [vmem:[%s1978 + $0x8] sm:$0xff]
        %v1981 = vld [vmem:[%s1978 + $0x10] sm:$0xff]
        %v1982 = vld [vmem:[%s1978 + $0x18] sm:$0xff]
        %s1983 = scalar_lea.vmem [#allocation3], %s1027
        %v1984 = vld [vmem:[%s1983] sm:$0xff]
        %v1985 = vld [vmem:[%s1983 + $0x8] sm:$0xff]
        %v1986 = vld [vmem:[%s1983 + $0x10] sm:$0xff]
        %v1987 = vld [vmem:[%s1983 + $0x18] sm:$0xff]
        %v1988 = vlaneseq
        %v1989 = vshrl.u32 %v1988, 7
        %v1990 = vlaneseq
        %v1991 = vand.u32 %v1990, 127
        %vm1992 = vcmp.le.s32.totalorder %v1991, %v1989
        %vm1993 = vcmask 64512
        %v1995 = vsel %vm1993, %v1280, 0
        %v1998 = vsel %vm1993, %v1979, 0
        %2000 = vmatprep.subr.mxu0 0.0
        %2001 = vmatpush1.xpose.msra.mxu0 %v1998
        %2002 = vmatprep.subr.mxu0 0.0
        %2003 = vmatpush1.xpose.msra.mxu0 0.0
        %2004 = vmatprep.subr.mxu0 0.0
        %2005 = vmatpush1.xpose.msra.mxu0 0.0
        %2006 = vmatprep.subr.mxu0 0.0
        %2007 = vmatpush1.xpose.msra.mxu0 0.0
        %2008 = vmatprep.subr.mxu0 0.0
        %2009 = vmatpush1.xpose.msra.mxu0 0.0
        %2010 = vmatprep.subr.mxu0 0.0
        %2011 = vmatpush1.xpose.msra.mxu0 0.0
        %2012 = vmatprep.subr.mxu0 0.0
        %2013 = vmatpush1.xpose.msra.mxu0 0.0
        %2014 = vmatprep.subr.mxu0 0.0
        %2015 = vmatpush1.xpose.msra.mxu0 0.0
        %2016 = vmatprep.subr.mxu0 0.0
        %2017 = vmatpush1.xpose.msra.mxu0 0.0
        %2018 = vmatprep.subr.mxu0 0.0
        %2019 = vmatpush1.xpose.msra.mxu0 0.0
        %2020 = vmatprep.subr.mxu0 0.0
        %2021 = vmatpush1.xpose.msra.mxu0 0.0
        %2022 = vmatprep.subr.mxu0 0.0
        %2023 = vmatpush1.xpose.msra.mxu0 0.0
        %2024 = vmatprep.subr.mxu0 0.0
        %2025 = vmatpush1.xpose.msra.mxu0 0.0
        %2026 = vmatprep.subr.mxu0 0.0
        %2027 = vmatpush1.xpose.msra.mxu0 0.0
        %2028 = vmatprep.subr.mxu0 0.0
        %2029 = vmatpush1.xpose.msra.mxu0 0.0
        %2030 = vmatprep.subr.mxu0 0.0
        %2031 = vmatpush1.xpose.msra.mxu0 0.0
        %2032 = vmatprep.subr.mxu0 0.0
        %2033 = vmatpush1.xpose.msra.mxu0 0.0
        %2034 = vmatprep.subr.mxu0 0.0
        %2035 = vmatpush1.xpose.msra.mxu0 0.0
        %2036 = vmatprep.subr.mxu0 0.0
        %2037 = vmatpush1.xpose.msra.mxu0 0.0
        %2038 = vmatprep.subr.mxu0 0.0
        %2039 = vmatpush1.xpose.msra.mxu0 0.0
        %2040 = vmatprep.subr.mxu0 0.0
        %2041 = vmatpush1.xpose.msra.mxu0 0.0
        %2042 = vmatprep.subr.mxu0 0.0
        %2043 = vmatpush1.xpose.msra.mxu0 0.0
        %2044 = vmatprep.subr.mxu0 0.0
        %2045 = vmatpush1.xpose.msra.mxu0 0.0
        %2046 = vmatprep.subr.mxu0 0.0
        %2047 = vmatpush1.xpose.msra.mxu0 0.0
        %2048 = vmatprep.subr.mxu0 0.0
        %2049 = vmatpush1.xpose.msra.mxu0 0.0
        %2050 = vmatprep.subr.mxu0 0.0
        %2051 = vmatpush1.xpose.msra.mxu0 0.0
        %2052 = vmatprep.subr.mxu0 0.0
        %2053 = vmatpush1.xpose.msra.mxu0 0.0
        %2054 = vmatprep.subr.mxu0 0.0
        %2055 = vmatpush1.xpose.msra.mxu0 0.0
        %2056 = vmatprep.subr.mxu0 0.0
        %2057 = vmatpush1.xpose.msra.mxu0 0.0
        %2058 = vmatprep.subr.mxu0 0.0
        %2059 = vmatpush1.xpose.msra.mxu0 0.0
        %2060 = vmatprep.subr.mxu0 0.0
        %2061 = vmatpush1.xpose.msra.mxu0 0.0
        %2062 = vmatprep.subr.mxu0 0.0
        %2063 = vmatpush1.xpose.msra.mxu0 0.0
        %2064 = vmatprep.mubr.f32.mxu0 0.0
        %2065 = vmatmul.mubr.f32.gmra.mrb[0].mxu0 %v1995
        %v2066 = vpop.f32.mrb[0].mxu0
        %v2067 = vadd.f32 0.0, %v2066
        %v2068 = vpop.f32.mrb[0].mxu0
        %2069 = vdwg.mxu0
        %v2071 = vsel %vm1993, %v1281, 0
        %v2074 = vsel %vm1993, %v1980, 0
        %2076 = vmatprep.subr.mxu0 0.0
        %2077 = vmatpush1.xpose.msra.mxu0 %v2074
        %2078 = vmatprep.subr.mxu0 0.0
        %2079 = vmatpush1.xpose.msra.mxu0 0.0
        %2080 = vmatprep.subr.mxu0 0.0
        %2081 = vmatpush1.xpose.msra.mxu0 0.0
        %2082 = vmatprep.subr.mxu0 0.0
        %2083 = vmatpush1.xpose.msra.mxu0 0.0
        %2084 = vmatprep.subr.mxu0 0.0
        %2085 = vmatpush1.xpose.msra.mxu0 0.0
        %2086 = vmatprep.subr.mxu0 0.0
        %2087 = vmatpush1.xpose.msra.mxu0 0.0
        %2088 = vmatprep.subr.mxu0 0.0
        %2089 = vmatpush1.xpose.msra.mxu0 0.0
        %2090 = vmatprep.subr.mxu0 0.0
        %2091 = vmatpush1.xpose.msra.mxu0 0.0
        %2092 = vmatprep.subr.mxu0 0.0
        %2093 = vmatpush1.xpose.msra.mxu0 0.0
        %2094 = vmatprep.subr.mxu0 0.0
        %2095 = vmatpush1.xpose.msra.mxu0 0.0
        %2096 = vmatprep.subr.mxu0 0.0
        %2097 = vmatpush1.xpose.msra.mxu0 0.0
        %2098 = vmatprep.subr.mxu0 0.0
        %2099 = vmatpush1.xpose.msra.mxu0 0.0
        %2100 = vmatprep.subr.mxu0 0.0
        %2101 = vmatpush1.xpose.msra.mxu0 0.0
        %2102 = vmatprep.subr.mxu0 0.0
        %2103 = vmatpush1.xpose.msra.mxu0 0.0
        %2104 = vmatprep.subr.mxu0 0.0
        %2105 = vmatpush1.xpose.msra.mxu0 0.0
        %2106 = vmatprep.subr.mxu0 0.0
        %2107 = vmatpush1.xpose.msra.mxu0 0.0
        %2108 = vmatprep.subr.mxu0 0.0
        %2109 = vmatpush1.xpose.msra.mxu0 0.0
        %2110 = vmatprep.subr.mxu0 0.0
        %2111 = vmatpush1.xpose.msra.mxu0 0.0
        %2112 = vmatprep.subr.mxu0 0.0
        %2113 = vmatpush1.xpose.msra.mxu0 0.0
        %2114 = vmatprep.subr.mxu0 0.0
        %2115 = vmatpush1.xpose.msra.mxu0 0.0
        %2116 = vmatprep.subr.mxu0 0.0
        %2117 = vmatpush1.xpose.msra.mxu0 0.0
        %2118 = vmatprep.subr.mxu0 0.0
        %2119 = vmatpush1.xpose.msra.mxu0 0.0
        %2120 = vmatprep.subr.mxu0 0.0
        %2121 = vmatpush1.xpose.msra.mxu0 0.0
        %2122 = vmatprep.subr.mxu0 0.0
        %2123 = vmatpush1.xpose.msra.mxu0 0.0
        %2124 = vmatprep.subr.mxu0 0.0
        %2125 = vmatpush1.xpose.msra.mxu0 0.0
        %2126 = vmatprep.subr.mxu0 0.0
        %2127 = vmatpush1.xpose.msra.mxu0 0.0
        %2128 = vmatprep.subr.mxu0 0.0
        %2129 = vmatpush1.xpose.msra.mxu0 0.0
        %2130 = vmatprep.subr.mxu0 0.0
        %2131 = vmatpush1.xpose.msra.mxu0 0.0
        %2132 = vmatprep.subr.mxu0 0.0
        %2133 = vmatpush1.xpose.msra.mxu0 0.0
        %2134 = vmatprep.subr.mxu0 0.0
        %2135 = vmatpush1.xpose.msra.mxu0 0.0
        %2136 = vmatprep.subr.mxu0 0.0
        %2137 = vmatpush1.xpose.msra.mxu0 0.0
        %2138 = vmatprep.subr.mxu0 0.0
        %2139 = vmatpush1.xpose.msra.mxu0 0.0
        %2140 = vmatprep.mubr.f32.mxu0 0.0
        %2141 = vmatmul.mubr.f32.gmra.mrb[0].mxu0 %v2071
        %v2142 = vpop.f32.mrb[0].mxu0
        %v2143 = vadd.f32 0.0, %v2142
        %v2144 = vpop.f32.mrb[0].mxu0
        %2145 = vdwg.mxu0
        %v2147 = vsel %vm1993, %v1282, 0
        %v2150 = vsel %vm1993, %v1981, 0
        %2152 = vmatprep.subr.mxu0 0.0
        %2153 = vmatpush1.xpose.msra.mxu0 %v2150
        %2154 = vmatprep.subr.mxu0 0.0
        %2155 = vmatpush1.xpose.msra.mxu0 0.0
        %2156 = vmatprep.subr.mxu0 0.0
        %2157 = vmatpush1.xpose.msra.mxu0 0.0
        %2158 = vmatprep.subr.mxu0 0.0
        %2159 = vmatpush1.xpose.msra.mxu0 0.0
        %2160 = vmatprep.subr.mxu0 0.0
        %2161 = vmatpush1.xpose.msra.mxu0 0.0
        %2162 = vmatprep.subr.mxu0 0.0
        %2163 = vmatpush1.xpose.msra.mxu0 0.0
        %2164 = vmatprep.subr.mxu0 0.0
        %2165 = vmatpush1.xpose.msra.mxu0 0.0
        %2166 = vmatprep.subr.mxu0 0.0
        %2167 = vmatpush1.xpose.msra.mxu0 0.0
        %2168 = vmatprep.subr.mxu0 0.0
        %2169 = vmatpush1.xpose.msra.mxu0 0.0
        %2170 = vmatprep.subr.mxu0 0.0
        %2171 = vmatpush1.xpose.msra.mxu0 0.0
        %2172 = vmatprep.subr.mxu0 0.0
        %2173 = vmatpush1.xpose.msra.mxu0 0.0
        %2174 = vmatprep.subr.mxu0 0.0
        %2175 = vmatpush1.xpose.msra.mxu0 0.0
        %2176 = vmatprep.subr.mxu0 0.0
        %2177 = vmatpush1.xpose.msra.mxu0 0.0
        %2178 = vmatprep.subr.mxu0 0.0
        %2179 = vmatpush1.xpose.msra.mxu0 0.0
        %2180 = vmatprep.subr.mxu0 0.0
        %2181 = vmatpush1.xpose.msra.mxu0 0.0
        %2182 = vmatprep.subr.mxu0 0.0
        %2183 = vmatpush1.xpose.msra.mxu0 0.0
        %2184 = vmatprep.subr.mxu0 0.0
        %2185 = vmatpush1.xpose.msra.mxu0 0.0
        %2186 = vmatprep.subr.mxu0 0.0
        %2187 = vmatpush1.xpose.msra.mxu0 0.0
        %2188 = vmatprep.subr.mxu0 0.0
        %2189 = vmatpush1.xpose.msra.mxu0 0.0
        %2190 = vmatprep.subr.mxu0 0.0
        %2191 = vmatpush1.xpose.msra.mxu0 0.0
        %2192 = vmatprep.subr.mxu0 0.0
        %2193 = vmatpush1.xpose.msra.mxu0 0.0
        %2194 = vmatprep.subr.mxu0 0.0
        %2195 = vmatpush1.xpose.msra.mxu0 0.0
        %2196 = vmatprep.subr.mxu0 0.0
        %2197 = vmatpush1.xpose.msra.mxu0 0.0
        %2198 = vmatprep.subr.mxu0 0.0
        %2199 = vmatpush1.xpose.msra.mxu0 0.0
        %2200 = vmatprep.subr.mxu0 0.0
        %2201 = vmatpush1.xpose.msra.mxu0 0.0
        %2202 = vmatprep.subr.mxu0 0.0
        %2203 = vmatpush1.xpose.msra.mxu0 0.0
        %2204 = vmatprep.subr.mxu0 0.0
        %2205 = vmatpush1.xpose.msra.mxu0 0.0
        %2206 = vmatprep.subr.mxu0 0.0
        %2207 = vmatpush1.xpose.msra.mxu0 0.0
        %2208 = vmatprep.subr.mxu0 0.0
        %2209 = vmatpush1.xpose.msra.mxu0 0.0
        %2210 = vmatprep.subr.mxu0 0.0
        %2211 = vmatpush1.xpose.msra.mxu0 0.0
        %2212 = vmatprep.subr.mxu0 0.0
        %2213 = vmatpush1.xpose.msra.mxu0 0.0
        %2214 = vmatprep.subr.mxu0 0.0
        %2215 = vmatpush1.xpose.msra.mxu0 0.0
        %2216 = vmatprep.mubr.f32.mxu0 0.0
        %2217 = vmatmul.mubr.f32.gmra.mrb[0].mxu0 %v2147
        %v2218 = vpop.f32.mrb[0].mxu0
        %v2219 = vadd.f32 0.0, %v2218
        %v2220 = vpop.f32.mrb[0].mxu0
        %2221 = vdwg.mxu0
        %v2223 = vsel %vm1993, %v1283, 0
        %v2226 = vsel %vm1993, %v1982, 0
        %2228 = vmatprep.subr.mxu0 0.0
        %2229 = vmatpush1.xpose.msra.mxu0 %v2226
        %2230 = vmatprep.subr.mxu0 0.0
        %2231 = vmatpush1.xpose.msra.mxu0 0.0
        %2232 = vmatprep.subr.mxu0 0.0
        %2233 = vmatpush1.xpose.msra.mxu0 0.0
        %2234 = vmatprep.subr.mxu0 0.0
        %2235 = vmatpush1.xpose.msra.mxu0 0.0
        %2236 = vmatprep.subr.mxu0 0.0
        %2237 = vmatpush1.xpose.msra.mxu0 0.0
        %2238 = vmatprep.subr.mxu0 0.0
        %2239 = vmatpush1.xpose.msra.mxu0 0.0
        %2240 = vmatprep.subr.mxu0 0.0
        %2241 = vmatpush1.xpose.msra.mxu0 0.0
        %2242 = vmatprep.subr.mxu0 0.0
        %2243 = vmatpush1.xpose.msra.mxu0 0.0
        %2244 = vmatprep.subr.mxu0 0.0
        %2245 = vmatpush1.xpose.msra.mxu0 0.0
        %2246 = vmatprep.subr.mxu0 0.0
        %2247 = vmatpush1.xpose.msra.mxu0 0.0
        %2248 = vmatprep.subr.mxu0 0.0
        %2249 = vmatpush1.xpose.msra.mxu0 0.0
        %2250 = vmatprep.subr.mxu0 0.0
        %2251 = vmatpush1.xpose.msra.mxu0 0.0
        %2252 = vmatprep.subr.mxu0 0.0
        %2253 = vmatpush1.xpose.msra.mxu0 0.0
        %2254 = vmatprep.subr.mxu0 0.0
        %2255 = vmatpush1.xpose.msra.mxu0 0.0
        %2256 = vmatprep.subr.mxu0 0.0
        %2257 = vmatpush1.xpose.msra.mxu0 0.0
        %2258 = vmatprep.subr.mxu0 0.0
        %2259 = vmatpush1.xpose.msra.mxu0 0.0
        %2260 = vmatprep.subr.mxu0 0.0
        %2261 = vmatpush1.xpose.msra.mxu0 0.0
        %2262 = vmatprep.subr.mxu0 0.0
        %2263 = vmatpush1.xpose.msra.mxu0 0.0
        %2264 = vmatprep.subr.mxu0 0.0
        %2265 = vmatpush1.xpose.msra.mxu0 0.0
        %2266 = vmatprep.subr.mxu0 0.0
        %2267 = vmatpush1.xpose.msra.mxu0 0.0
        %2268 = vmatprep.subr.mxu0 0.0
        %2269 = vmatpush1.xpose.msra.mxu0 0.0
        %2270 = vmatprep.subr.mxu0 0.0
        %2271 = vmatpush1.xpose.msra.mxu0 0.0
        %2272 = vmatprep.subr.mxu0 0.0
        %2273 = vmatpush1.xpose.msra.mxu0 0.0
        %2274 = vmatprep.subr.mxu0 0.0
        %2275 = vmatpush1.xpose.msra.mxu0 0.0
        %2276 = vmatprep.subr.mxu0 0.0
        %2277 = vmatpush1.xpose.msra.mxu0 0.0
        %2278 = vmatprep.subr.mxu0 0.0
        %2279 = vmatpush1.xpose.msra.mxu0 0.0
        %2280 = vmatprep.subr.mxu0 0.0
        %2281 = vmatpush1.xpose.msra.mxu0 0.0
        %2282 = vmatprep.subr.mxu0 0.0
        %2283 = vmatpush1.xpose.msra.mxu0 0.0
        %2284 = vmatprep.subr.mxu0 0.0
        %2285 = vmatpush1.xpose.msra.mxu0 0.0
        %2286 = vmatprep.subr.mxu0 0.0
        %2287 = vmatpush1.xpose.msra.mxu0 0.0
        %2288 = vmatprep.subr.mxu0 0.0
        %2289 = vmatpush1.xpose.msra.mxu0 0.0
        %2290 = vmatprep.subr.mxu0 0.0
        %2291 = vmatpush1.xpose.msra.mxu0 0.0
        %2292 = vmatprep.mubr.f32.mxu0 0.0
        %2293 = vmatmul.mubr.f32.gmra.mrb[0].mxu0 %v2223
        %v2294 = vpop.f32.mrb[0].mxu0
        %v2295 = vadd.f32 0.0, %v2294
        %v2296 = vpop.f32.mrb[0].mxu0
        %2297 = vdwg.mxu0
        %v2298 = vsel %vm1992, 1, 0
        %vm2299 = vcmp.eq.s32.totalorder %v2298, 1
        %v2300 = vsel %vm2299, %v2067, -1e+30
        %v2301 = vsel %vm2299, %v2143, -1e+30
        %v2302 = vsel %vm2299, %v2219, -1e+30
        %v2303 = vsel %vm2299, %v2295, -1e+30
        %v2304 = vsel %vm1993, %v2300, -inf
        %2305 = vmax.xlane.f32.xlu0 %v2304
        %v2306 = vpop.xlane.xlu0 %2305
        %v2307 = vsel %vm1993, %v2301, -inf
        %2308 = vmax.xlane.f32.xlu0 %v2307
        %v2309 = vpop.xlane.xlu0 %2308
        %v2310 = vsel %vm1993, %v2302, -inf
        %2311 = vmax.xlane.f32.xlu0 %v2310
        %v2312 = vpop.xlane.xlu0 %2311
        %v2313 = vsel %vm1993, %v2303, -inf
        %2314 = vmax.xlane.f32.xlu0 %v2313
        %v2315 = vpop.xlane.xlu0 %2314
        %v2316 = vmax.f32 %v1290, %v2306
        %v2317 = vmax.f32 %v1291, %v2309
        %v2318 = vmax.f32 %v1292, %v2312
        %v2319 = vmax.f32 %v1293, %v2315
        %v2320 = vsub.f32 %v1290, %v2316
        %v2321 = vsub.f32 %v1291, %v2317
        %v2322 = vsub.f32 %v1292, %v2318
        %v2323 = vsub.f32 %v1293, %v2319
        %v2324 = vmul.f32 %v2320, 1.442695
        %v2325 = vpow.pop %v2324
        %v2326 = vmul.f32 %v2321, 1.442695
        %v2327 = vpow.pop %v2326
        %v2328 = vmul.f32 %v2322, 1.442695
        %v2329 = vpow.pop %v2328
        %v2330 = vmul.f32 %v2323, 1.442695
        %v2331 = vpow.pop %v2330
        %v2332 = vsub.f32 %v2300, %v2316
        %v2333 = vsub.f32 %v2301, %v2317
        %v2334 = vsub.f32 %v2302, %v2318
        %v2335 = vsub.f32 %v2303, %v2319
        %v2336 = vmul.f32 %v2332, 1.442695
        %v2337 = vpow.pop %v2336
        %v2338 = vmul.f32 %v2333, 1.442695
        %v2339 = vpow.pop %v2338
        %v2340 = vmul.f32 %v2334, 1.442695
        %v2341 = vpow.pop %v2340
        %v2342 = vmul.f32 %v2335, 1.442695
        %v2343 = vpow.pop %v2342
        %v2344 = vmul.f32 %v2325, %v1294
        %v2345 = vmul.f32 %v2327, %v1295
        %v2346 = vmul.f32 %v2329, %v1296
        %v2347 = vmul.f32 %v2331, %v1297
        %v2348 = vsel %vm1993, %v2337, 0.0
        %2349 = vadd.xlane.f32.xlu0 %v2348
        %v2350 = vpop.xlane.xlu0 %2349
        %v2351 = vsel %vm1993, %v2339, 0.0
        %2352 = vadd.xlane.f32.xlu0 %v2351
        %v2353 = vpop.xlane.xlu0 %2352
        %v2354 = vsel %vm1993, %v2341, 0.0
        %2355 = vadd.xlane.f32.xlu0 %v2354
        %v2356 = vpop.xlane.xlu0 %2355
        %v2357 = vsel %vm1993, %v2343, 0.0
        %2358 = vadd.xlane.f32.xlu0 %v2357
        %v2359 = vpop.xlane.xlu0 %2358
        %v2360 = vadd.f32 %v2344, %v2350
        %v2361 = vadd.f32 %v2345, %v2353
        %v2362 = vadd.f32 %v2346, %v2356
        %v2363 = vadd.f32 %v2347, %v2359
        %v2364 = vmul.f32 %v2325, %v1298
        %v2365 = vmul.f32 %v2327, %v1299
        %v2366 = vmul.f32 %v2329, %v1300
        %v2367 = vmul.f32 %v2331, %v1301
        %v2369 = vsel %vm1993, %v2337, 0
        %2371 = vmatprep.subr.mxu0 0.0
        %2372 = vmatpush1.msra.mxu0 %v1984
        %2373 = vmatprep.subr.mxu0 0.0
        %2374 = vmatpush1.msra.mxu0 0.0
        %2375 = vmatprep.subr.mxu0 0.0
        %2376 = vmatpush1.msra.mxu0 0.0
        %2377 = vmatprep.subr.mxu0 0.0
        %2378 = vmatpush1.msra.mxu0 0.0
        %2379 = vmatprep.subr.mxu0 0.0
        %2380 = vmatpush1.msra.mxu0 0.0
        %2381 = vmatprep.subr.mxu0 0.0
        %2382 = vmatpush1.msra.mxu0 0.0
        %2383 = vmatprep.subr.mxu0 0.0
        %2384 = vmatpush1.msra.mxu0 0.0
        %2385 = vmatprep.subr.mxu0 0.0
        %2386 = vmatpush1.msra.mxu0 0.0
        %2387 = vmatprep.subr.mxu0 0.0
        %2388 = vmatpush1.msra.mxu0 0.0
        %2389 = vmatprep.subr.mxu0 0.0
        %2390 = vmatpush1.msra.mxu0 0.0
        %2391 = vmatprep.subr.mxu0 0.0
        %2392 = vmatpush1.msra.mxu0 0.0
        %2393 = vmatprep.subr.mxu0 0.0
        %2394 = vmatpush1.msra.mxu0 0.0
        %2395 = vmatprep.subr.mxu0 0.0
        %2396 = vmatpush1.msra.mxu0 0.0
        %2397 = vmatprep.subr.mxu0 0.0
        %2398 = vmatpush1.msra.mxu0 0.0
        %2399 = vmatprep.subr.mxu0 0.0
        %2400 = vmatpush1.msra.mxu0 0.0
        %2401 = vmatprep.subr.mxu0 0.0
        %2402 = vmatpush1.msra.mxu0 0.0
        %2403 = vmatprep.subr.mxu0 0.0
        %2404 = vmatpush1.msra.mxu0 0.0
        %2405 = vmatprep.subr.mxu0 0.0
        %2406 = vmatpush1.msra.mxu0 0.0
        %2407 = vmatprep.subr.mxu0 0.0
        %2408 = vmatpush1.msra.mxu0 0.0
        %2409 = vmatprep.subr.mxu0 0.0
        %2410 = vmatpush1.msra.mxu0 0.0
        %2411 = vmatprep.subr.mxu0 0.0
        %2412 = vmatpush1.msra.mxu0 0.0
        %2413 = vmatprep.subr.mxu0 0.0
        %2414 = vmatpush1.msra.mxu0 0.0
        %2415 = vmatprep.subr.mxu0 0.0
        %2416 = vmatpush1.msra.mxu0 0.0
        %2417 = vmatprep.subr.mxu0 0.0
        %2418 = vmatpush1.msra.mxu0 0.0
        %2419 = vmatprep.subr.mxu0 0.0
        %2420 = vmatpush1.msra.mxu0 0.0
        %2421 = vmatprep.subr.mxu0 0.0
        %2422 = vmatpush1.msra.mxu0 0.0
        %2423 = vmatprep.subr.mxu0 0.0
        %2424 = vmatpush1.msra.mxu0 0.0
        %2425 = vmatprep.subr.mxu0 0.0
        %2426 = vmatpush1.msra.mxu0 0.0
        %2427 = vmatprep.subr.mxu0 0.0
        %2428 = vmatpush1.msra.mxu0 0.0
        %2429 = vmatprep.subr.mxu0 0.0
        %2430 = vmatpush1.msra.mxu0 0.0
        %2431 = vmatprep.subr.mxu0 0.0
        %2432 = vmatpush1.msra.mxu0 0.0
        %2433 = vmatprep.subr.mxu0 0.0
        %2434 = vmatpush1.msra.mxu0 0.0
        %2435 = vmatprep.mubr.f32.mxu0 0.0
        %2436 = vmatmul.mubr.f32.gmra.mrb[0].mxu0 %v2369
        %v2437 = vpop.f32.mrb[0].mxu0
        %v2438 = vadd.f32 0.0, %v2437
        %v2439 = vpop.f32.mrb[0].mxu0
        %2440 = vdwg.mxu0
        %v2442 = vsel %vm1993, %v2339, 0
        %2444 = vmatprep.subr.mxu0 0.0
        %2445 = vmatpush1.msra.mxu0 %v1985
        %2446 = vmatprep.subr.mxu0 0.0
        %2447 = vmatpush1.msra.mxu0 0.0
        %2448 = vmatprep.subr.mxu0 0.0
        %2449 = vmatpush1.msra.mxu0 0.0
        %2450 = vmatprep.subr.mxu0 0.0
        %2451 = vmatpush1.msra.mxu0 0.0
        %2452 = vmatprep.subr.mxu0 0.0
        %2453 = vmatpush1.msra.mxu0 0.0
        %2454 = vmatprep.subr.mxu0 0.0
        %2455 = vmatpush1.msra.mxu0 0.0
        %2456 = vmatprep.subr.mxu0 0.0
        %2457 = vmatpush1.msra.mxu0 0.0
        %2458 = vmatprep.subr.mxu0 0.0
        %2459 = vmatpush1.msra.mxu0 0.0
        %2460 = vmatprep.subr.mxu0 0.0
        %2461 = vmatpush1.msra.mxu0 0.0
        %2462 = vmatprep.subr.mxu0 0.0
        %2463 = vmatpush1.msra.mxu0 0.0
        %2464 = vmatprep.subr.mxu0 0.0
        %2465 = vmatpush1.msra.mxu0 0.0
        %2466 = vmatprep.subr.mxu0 0.0
        %2467 = vmatpush1.msra.mxu0 0.0
        %2468 = vmatprep.subr.mxu0 0.0
        %2469 = vmatpush1.msra.mxu0 0.0
        %2470 = vmatprep.subr.mxu0 0.0
        %2471 = vmatpush1.msra.mxu0 0.0
        %2472 = vmatprep.subr.mxu0 0.0
        %2473 = vmatpush1.msra.mxu0 0.0
        %2474 = vmatprep.subr.mxu0 0.0
        %2475 = vmatpush1.msra.mxu0 0.0
        %2476 = vmatprep.subr.mxu0 0.0
        %2477 = vmatpush1.msra.mxu0 0.0
        %2478 = vmatprep.subr.mxu0 0.0
        %2479 = vmatpush1.msra.mxu0 0.0
        %2480 = vmatprep.subr.mxu0 0.0
        %2481 = vmatpush1.msra.mxu0 0.0
        %2482 = vmatprep.subr.mxu0 0.0
        %2483 = vmatpush1.msra.mxu0 0.0
        %2484 = vmatprep.subr.mxu0 0.0
        %2485 = vmatpush1.msra.mxu0 0.0
        %2486 = vmatprep.subr.mxu0 0.0
        %2487 = vmatpush1.msra.mxu0 0.0
        %2488 = vmatprep.subr.mxu0 0.0
        %2489 = vmatpush1.msra.mxu0 0.0
        %2490 = vmatprep.subr.mxu0 0.0
        %2491 = vmatpush1.msra.mxu0 0.0
        %2492 = vmatprep.subr.mxu0 0.0
        %2493 = vmatpush1.msra.mxu0 0.0
        %2494 = vmatprep.subr.mxu0 0.0
        %2495 = vmatpush1.msra.mxu0 0.0
        %2496 = vmatprep.subr.mxu0 0.0
        %2497 = vmatpush1.msra.mxu0 0.0
        %2498 = vmatprep.subr.mxu0 0.0
        %2499 = vmatpush1.msra.mxu0 0.0
        %2500 = vmatprep.subr.mxu0 0.0
        %2501 = vmatpush1.msra.mxu0 0.0
        %2502 = vmatprep.subr.mxu0 0.0
        %2503 = vmatpush1.msra.mxu0 0.0
        %2504 = vmatprep.subr.mxu0 0.0
        %2505 = vmatpush1.msra.mxu0 0.0
        %2506 = vmatprep.subr.mxu0 0.0
        %2507 = vmatpush1.msra.mxu0 0.0
        %2508 = vmatprep.mubr.f32.mxu0 0.0
        %2509 = vmatmul.mubr.f32.gmra.mrb[0].mxu0 %v2442
        %v2510 = vpop.f32.mrb[0].mxu0
        %v2511 = vadd.f32 0.0, %v2510
        %v2512 = vpop.f32.mrb[0].mxu0
        %2513 = vdwg.mxu0
        %v2515 = vsel %vm1993, %v2341, 0
        %2517 = vmatprep.subr.mxu0 0.0
        %2518 = vmatpush1.msra.mxu0 %v1986
        %2519 = vmatprep.subr.mxu0 0.0
        %2520 = vmatpush1.msra.mxu0 0.0
        %2521 = vmatprep.subr.mxu0 0.0
        %2522 = vmatpush1.msra.mxu0 0.0
        %2523 = vmatprep.subr.mxu0 0.0
        %2524 = vmatpush1.msra.mxu0 0.0
        %2525 = vmatprep.subr.mxu0 0.0
        %2526 = vmatpush1.msra.mxu0 0.0
        %2527 = vmatprep.subr.mxu0 0.0
        %2528 = vmatpush1.msra.mxu0 0.0
        %2529 = vmatprep.subr.mxu0 0.0
        %2530 = vmatpush1.msra.mxu0 0.0
        %2531 = vmatprep.subr.mxu0 0.0
        %2532 = vmatpush1.msra.mxu0 0.0
        %2533 = vmatprep.subr.mxu0 0.0
        %2534 = vmatpush1.msra.mxu0 0.0
        %2535 = vmatprep.subr.mxu0 0.0
        %2536 = vmatpush1.msra.mxu0 0.0
        %2537 = vmatprep.subr.mxu0 0.0
        %2538 = vmatpush1.msra.mxu0 0.0
        %2539 = vmatprep.subr.mxu0 0.0
        %2540 = vmatpush1.msra.mxu0 0.0
        %2541 = vmatprep.subr.mxu0 0.0
        %2542 = vmatpush1.msra.mxu0 0.0
        %2543 = vmatprep.subr.mxu0 0.0
        %2544 = vmatpush1.msra.mxu0 0.0
        %2545 = vmatprep.subr.mxu0 0.0
        %2546 = vmatpush1.msra.mxu0 0.0
        %2547 = vmatprep.subr.mxu0 0.0
        %2548 = vmatpush1.msra.mxu0 0.0
        %2549 = vmatprep.subr.mxu0 0.0
        %2550 = vmatpush1.msra.mxu0 0.0
        %2551 = vmatprep.subr.mxu0 0.0
        %2552 = vmatpush1.msra.mxu0 0.0
        %2553 = vmatprep.subr.mxu0 0.0
        %2554 = vmatpush1.msra.mxu0 0.0
        %2555 = vmatprep.subr.mxu0 0.0
        %2556 = vmatpush1.msra.mxu0 0.0
        %2557 = vmatprep.subr.mxu0 0.0
        %2558 = vmatpush1.msra.mxu0 0.0
        %2559 = vmatprep.subr.mxu0 0.0
        %2560 = vmatpush1.msra.mxu0 0.0
        %2561 = vmatprep.subr.mxu0 0.0
        %2562 = vmatpush1.msra.mxu0 0.0
        %2563 = vmatprep.subr.mxu0 0.0
        %2564 = vmatpush1.msra.mxu0 0.0
        %2565 = vmatprep.subr.mxu0 0.0
        %2566 = vmatpush1.msra.mxu0 0.0
        %2567 = vmatprep.subr.mxu0 0.0
        %2568 = vmatpush1.msra.mxu0 0.0
        %2569 = vmatprep.subr.mxu0 0.0
        %2570 = vmatpush1.msra.mxu0 0.0
        %2571 = vmatprep.subr.mxu0 0.0
        %2572 = vmatpush1.msra.mxu0 0.0
        %2573 = vmatprep.subr.mxu0 0.0
        %2574 = vmatpush1.msra.mxu0 0.0
        %2575 = vmatprep.subr.mxu0 0.0
        %2576 = vmatpush1.msra.mxu0 0.0
        %2577 = vmatprep.subr.mxu0 0.0
        %2578 = vmatpush1.msra.mxu0 0.0
        %2579 = vmatprep.subr.mxu0 0.0
        %2580 = vmatpush1.msra.mxu0 0.0
        %2581 = vmatprep.mubr.f32.mxu0 0.0
        %2582 = vmatmul.mubr.f32.gmra.mrb[0].mxu0 %v2515
        %v2583 = vpop.f32.mrb[0].mxu0
        %v2584 = vadd.f32 0.0, %v2583
        %v2585 = vpop.f32.mrb[0].mxu0
        %2586 = vdwg.mxu0
        %v2588 = vsel %vm1993, %v2343, 0
        %2590 = vmatprep.subr.mxu0 0.0
        %2591 = vmatpush1.msra.mxu0 %v1987
        %2592 = vmatprep.subr.mxu0 0.0
        %2593 = vmatpush1.msra.mxu0 0.0
        %2594 = vmatprep.subr.mxu0 0.0
        %2595 = vmatpush1.msra.mxu0 0.0
        %2596 = vmatprep.subr.mxu0 0.0
        %2597 = vmatpush1.msra.mxu0 0.0
        %2598 = vmatprep.subr.mxu0 0.0
        %2599 = vmatpush1.msra.mxu0 0.0
        %2600 = vmatprep.subr.mxu0 0.0
        %2601 = vmatpush1.msra.mxu0 0.0
        %2602 = vmatprep.subr.mxu0 0.0
        %2603 = vmatpush1.msra.mxu0 0.0
        %2604 = vmatprep.subr.mxu0 0.0
        %2605 = vmatpush1.msra.mxu0 0.0
        %2606 = vmatprep.subr.mxu0 0.0
        %2607 = vmatpush1.msra.mxu0 0.0
        %2608 = vmatprep.subr.mxu0 0.0
        %2609 = vmatpush1.msra.mxu0 0.0
        %2610 = vmatprep.subr.mxu0 0.0
        %2611 = vmatpush1.msra.mxu0 0.0
        %2612 = vmatprep.subr.mxu0 0.0
        %2613 = vmatpush1.msra.mxu0 0.0
        %2614 = vmatprep.subr.mxu0 0.0
        %2615 = vmatpush1.msra.mxu0 0.0
        %2616 = vmatprep.subr.mxu0 0.0
        %2617 = vmatpush1.msra.mxu0 0.0
        %2618 = vmatprep.subr.mxu0 0.0
        %2619 = vmatpush1.msra.mxu0 0.0
        %2620 = vmatprep.subr.mxu0 0.0
        %2621 = vmatpush1.msra.mxu0 0.0
        %2622 = vmatprep.subr.mxu0 0.0
        %2623 = vmatpush1.msra.mxu0 0.0
        %2624 = vmatprep.subr.mxu0 0.0
        %2625 = vmatpush1.msra.mxu0 0.0
        %2626 = vmatprep.subr.mxu0 0.0
        %2627 = vmatpush1.msra.mxu0 0.0
        %2628 = vmatprep.subr.mxu0 0.0
        %2629 = vmatpush1.msra.mxu0 0.0
        %2630 = vmatprep.subr.mxu0 0.0
        %2631 = vmatpush1.msra.mxu0 0.0
        %2632 = vmatprep.subr.mxu0 0.0
        %2633 = vmatpush1.msra.mxu0 0.0
        %2634 = vmatprep.subr.mxu0 0.0
        %2635 = vmatpush1.msra.mxu0 0.0
        %2636 = vmatprep.subr.mxu0 0.0
        %2637 = vmatpush1.msra.mxu0 0.0
        %2638 = vmatprep.subr.mxu0 0.0
        %2639 = vmatpush1.msra.mxu0 0.0
        %2640 = vmatprep.subr.mxu0 0.0
        %2641 = vmatpush1.msra.mxu0 0.0
        %2642 = vmatprep.subr.mxu0 0.0
        %2643 = vmatpush1.msra.mxu0 0.0
        %2644 = vmatprep.subr.mxu0 0.0
        %2645 = vmatpush1.msra.mxu0 0.0
        %2646 = vmatprep.subr.mxu0 0.0
        %2647 = vmatpush1.msra.mxu0 0.0
        %2648 = vmatprep.subr.mxu0 0.0
        %2649 = vmatpush1.msra.mxu0 0.0
        %2650 = vmatprep.subr.mxu0 0.0
        %2651 = vmatpush1.msra.mxu0 0.0
        %2652 = vmatprep.subr.mxu0 0.0
        %2653 = vmatpush1.msra.mxu0 0.0
        %2654 = vmatprep.mubr.f32.mxu0 0.0
        %2655 = vmatmul.mubr.f32.gmra.mrb[0].mxu0 %v2588
        %v2656 = vpop.f32.mrb[0].mxu0
        %v2657 = vadd.f32 0.0, %v2656
        %v2658 = vpop.f32.mrb[0].mxu0
        %2659 = vdwg.mxu0
        %v2660 = vadd.f32 %v2364, %v2438
        %v2661 = vadd.f32 %v2365, %v2511
        %v2662 = vadd.f32 %v2366, %v2584
        %v2663 = vadd.f32 %v2367, %v2657
        %v2664 = vrcp.pop %v2360
        %v2665 = vmul.f32 %v2660, %v2664
        %v2666 = vrcp.pop %v2361
        %v2667 = vmul.f32 %v2661, %v2666
        %v2668 = vrcp.pop %v2362
        %v2669 = vmul.f32 %v2662, %v2668
        %v2670 = vrcp.pop %v2363
        %v2671 = vmul.f32 %v2663, %v2670
        %v2672 = vcombine.low %v2665, %v2669
        %v2673 = vcombine.high %v2665, %v2669
        %v2675 = vunpack.c.l.s4 1983009808
        %v2676 = vunpack.c.0.s8 %v2675
        %v2677 = vlaneseq
        %v2678 = vshrl.u32 %v2677, 7
        %v2679 = vsub.s32 %v2676, %v2678
        %v2680 = vrot.slane %v2672, %v2679
        %v2682 = vunpack.c.l.s4 1983009808
        %v2683 = vunpack.c.0.s8 %v2682
        %v2684 = vlaneseq
        %v2685 = vshrl.u32 %v2684, 7
        %v2686 = vsub.s32 %v2683, %v2685
        %v2687 = vrot.slane %v2673, %v2686
        %v2688 = vcombine.low %v2667, %v2671
        %v2689 = vcombine.high %v2667, %v2671
        %v2691 = vunpack.c.l.s4 1983009808
        %v2692 = vunpack.c.0.s8 %v2691
        %v2693 = vlaneseq
        %v2694 = vshrl.u32 %v2693, 7
        %v2695 = vsub.s32 %v2692, %v2694
        %v2696 = vrot.slane %v2688, %v2695
        %v2698 = vunpack.c.l.s4 1983009808
        %v2699 = vunpack.c.0.s8 %v2698
        %v2700 = vlaneseq
        %v2701 = vshrl.u32 %v2700, 7
        %v2702 = vsub.s32 %v2699, %v2701
        %v2703 = vrot.slane %v2689, %v2702
        %v2704 = vcombine.low %v2680, %v2696
        %v2705 = vcombine.high %v2680, %v2696
        %v2707 = vunpack.c.l.s4 1934713408
        %v2708 = vunpack.c.0.s8 %v2707
        %v2709 = vlaneseq
        %v2710 = vshrl.u32 %v2709, 7
        %v2711 = vsub.s32 %v2708, %v2710
        %v2712 = vrot.slane %v2704, %v2711
        %v2714 = vunpack.c.l.s4 1934713408
        %v2715 = vunpack.c.0.s8 %v2714
        %v2716 = vlaneseq
        %v2717 = vshrl.u32 %v2716, 7
        %v2718 = vsub.s32 %v2715, %v2717
        %v2719 = vrot.slane %v2705, %v2718
        %v2720 = vcombine.low %v2687, %v2703
        %v2721 = vcombine.high %v2687, %v2703
        %v2723 = vunpack.c.l.s4 1934713408
        %v2724 = vunpack.c.0.s8 %v2723
        %v2725 = vlaneseq
        %v2726 = vshrl.u32 %v2725, 7
        %v2727 = vsub.s32 %v2724, %v2726
        %v2728 = vrot.slane %v2720, %v2727
        %v2730 = vunpack.c.l.s4 1934713408
        %v2731 = vunpack.c.0.s8 %v2730
        %v2732 = vlaneseq
        %v2733 = vshrl.u32 %v2732, 7
        %v2734 = vsub.s32 %v2731, %v2733
        %v2735 = vrot.slane %v2721, %v2734
        %v2736 = vcombine.high %v2712, 0.0
        %v2737 = vcombine.high %v2719, 0.0
        %v2738 = vcombine.high %v2728, 0.0
        %v2739 = vcombine.high %v2735, 0.0
        %v2740 = vcombine.low %v2712, %v2719
        %v2742 = vunpack.c.l.s4 1983009808
        %v2743 = vunpack.c.0.s8 %v2742
        %v2744 = vlaneseq
        %v2745 = vshrl.u32 %v2744, 7
        %v2746 = vsub.s32 %v2743, %v2745
        %v2747 = vrot.slane %v2740, %v2746
        %v2748 = vcombine.low %v2736, %v2737
        %v2750 = vunpack.c.l.s4 1983009808
        %v2751 = vunpack.c.0.s8 %v2750
        %v2752 = vlaneseq
        %v2753 = vshrl.u32 %v2752, 7
        %v2754 = vsub.s32 %v2751, %v2753
        %v2755 = vrot.slane %v2748, %v2754
        %v2756 = vcombine.low %v2728, %v2735
        %v2758 = vunpack.c.l.s4 1983009808
        %v2759 = vunpack.c.0.s8 %v2758
        %v2760 = vlaneseq
        %v2761 = vshrl.u32 %v2760, 7
        %v2762 = vsub.s32 %v2759, %v2761
        %v2763 = vrot.slane %v2756, %v2762
        %v2764 = vcombine.low %v2738, %v2739
        %v2766 = vunpack.c.l.s4 1983009808
        %v2767 = vunpack.c.0.s8 %v2766
        %v2768 = vlaneseq
        %v2769 = vshrl.u32 %v2768, 7
        %v2770 = vsub.s32 %v2767, %v2769
        %v2771 = vrot.slane %v2764, %v2770
        %v2772 = vcombine.low %v2747, %v2755
        %v2773 = vcombine.high %v2747, %v2755
        %v2775 = vunpack.c.l.s4 1934713408
        %v2776 = vunpack.c.0.s8 %v2775
        %v2777 = vlaneseq
        %v2778 = vshrl.u32 %v2777, 7
        %v2779 = vsub.s32 %v2776, %v2778
        %v2780 = vrot.slane %v2772, %v2779
        %v2782 = vunpack.c.l.s4 1934713408
        %v2783 = vunpack.c.0.s8 %v2782
        %v2784 = vlaneseq
        %v2785 = vshrl.u32 %v2784, 7
        %v2786 = vsub.s32 %v2783, %v2785
        %v2787 = vrot.slane %v2773, %v2786
        %v2788 = vcombine.low %v2763, %v2771
        %v2789 = vcombine.high %v2763, %v2771
        %v2791 = vunpack.c.l.s4 1934713408
        %v2792 = vunpack.c.0.s8 %v2791
        %v2793 = vlaneseq
        %v2794 = vshrl.u32 %v2793, 7
        %v2795 = vsub.s32 %v2792, %v2794
        %v2796 = vrot.slane %v2788, %v2795
        %v2798 = vunpack.c.l.s4 1934713408
        %v2799 = vunpack.c.0.s8 %v2798
        %v2800 = vlaneseq
        %v2801 = vshrl.u32 %v2800, 7
        %v2802 = vsub.s32 %v2799, %v2801
        %v2803 = vrot.slane %v2789, %v2802
        %v2804 = vcombine.low %v2780, %v2796
        %v2805 = vcombine.high %v2780, %v2796
        %v2806 = vcombine.low %v2787, %v2803
        %v2807 = vcombine.high %v2787, %v2803
        %2809 = vrot.lane.b32.xlu0 %v2805, 8
        %v2810 = vpop.permute.xlu0 %2809
        %2813 = vrot.lane.b32.xlu0 %v2806, 16
        %v2814 = vpop.permute.xlu0 %2813
        %2817 = vrot.lane.b32.xlu0 %v2807, 24
        %v2818 = vpop.permute.xlu0 %2817
        %v2820 = vsel %vm1993, %v2804, %v2810
        %vm2821 = vcmask 130048
        %v2822 = vsel %vm2821, %v2820, %v2814
        %vm2823 = vcmask 195584
        %v2824 = vsel %vm2823, %v2822, %v2818
        %v2825 = vld [vmem:[#allocation7] sm:$0xff]
        %v2826 = vld [vmem:[#allocation7 + $0x8] sm:$0xff]
        %v2827 = vld [vmem:[#allocation7 + $0x10] sm:$0xff]
        %v2828 = vld [vmem:[#allocation7 + $0x18] sm:$0xff]
        %v2830 = vsel %vm1032, %v2824, 0
        %2832 = vmatprep.subr.mxu0 0.0
        %2833 = vmatpush1.msra.mxu0 %v2825
        %2834 = vmatprep.subr.mxu0 0.0
        %2835 = vmatpush1.msra.mxu0 %v2826
        %2836 = vmatprep.subr.mxu0 0.0
        %2837 = vmatpush1.msra.mxu0 %v2827
        %2838 = vmatprep.subr.mxu0 0.0
        %2839 = vmatpush1.msra.mxu0 %v2828
        %2840 = vmatprep.subr.mxu0 0.0
        %2841 = vmatpush1.msra.mxu0 0.0
        %2842 = vmatprep.subr.mxu0 0.0
        %2843 = vmatpush1.msra.mxu0 0.0
        %2844 = vmatprep.subr.mxu0 0.0
        %2845 = vmatpush1.msra.mxu0 0.0
        %2846 = vmatprep.subr.mxu0 0.0
        %2847 = vmatpush1.msra.mxu0 0.0
        %2848 = vmatprep.subr.mxu0 0.0
        %2849 = vmatpush1.msra.mxu0 0.0
        %2850 = vmatprep.subr.mxu0 0.0
        %2851 = vmatpush1.msra.mxu0 0.0
        %2852 = vmatprep.subr.mxu0 0.0
        %2853 = vmatpush1.msra.mxu0 0.0
        %2854 = vmatprep.subr.mxu0 0.0
        %2855 = vmatpush1.msra.mxu0 0.0
        %2856 = vmatprep.subr.mxu0 0.0
        %2857 = vmatpush1.msra.mxu0 0.0
        %2858 = vmatprep.subr.mxu0 0.0
        %2859 = vmatpush1.msra.mxu0 0.0
        %2860 = vmatprep.subr.mxu0 0.0
        %2861 = vmatpush1.msra.mxu0 0.0
        %2862 = vmatprep.subr.mxu0 0.0
        %2863 = vmatpush1.msra.mxu0 0.0
        %2864 = vmatprep.subr.mxu0 0.0
        %2865 = vmatpush1.msra.mxu0 0.0
        %2866 = vmatprep.subr.mxu0 0.0
        %2867 = vmatpush1.msra.mxu0 0.0
        %2868 = vmatprep.subr.mxu0 0.0
        %2869 = vmatpush1.msra.mxu0 0.0
        %2870 = vmatprep.subr.mxu0 0.0
        %2871 = vmatpush1.msra.mxu0 0.0
        %2872 = vmatprep.subr.mxu0 0.0
        %2873 = vmatpush1.msra.mxu0 0.0
        %2874 = vmatprep.subr.mxu0 0.0
        %2875 = vmatpush1.msra.mxu0 0.0
        %2876 = vmatprep.subr.mxu0 0.0
        %2877 = vmatpush1.msra.mxu0 0.0
        %2878 = vmatprep.subr.mxu0 0.0
        %2879 = vmatpush1.msra.mxu0 0.0
        %2880 = vmatprep.subr.mxu0 0.0
        %2881 = vmatpush1.msra.mxu0 0.0
        %2882 = vmatprep.subr.mxu0 0.0
        %2883 = vmatpush1.msra.mxu0 0.0
        %2884 = vmatprep.subr.mxu0 0.0
        %2885 = vmatpush1.msra.mxu0 0.0
        %2886 = vmatprep.subr.mxu0 0.0
        %2887 = vmatpush1.msra.mxu0 0.0
        %2888 = vmatprep.subr.mxu0 0.0
        %2889 = vmatpush1.msra.mxu0 0.0
        %2890 = vmatprep.subr.mxu0 0.0
        %2891 = vmatpush1.msra.mxu0 0.0
        %2892 = vmatprep.subr.mxu0 0.0
        %2893 = vmatpush1.msra.mxu0 0.0
        %2894 = vmatprep.subr.mxu0 0.0
        %2895 = vmatpush1.msra.mxu0 0.0
        %2896 = vmatprep.mubr.f32.mxu0 0.0
        %2897 = vmatmul.mubr.f32.gmra.mrb[0].mxu0 %v2830
        %v2898 = vpop.f32.mrb[0].mxu0
        %v2899 = vadd.f32 0.0, %v2898
        %v2900 = vpop.f32.mrb[0].mxu0
        %2901 = vdwg.mxu0
        %v2902 = vld [vmem:[%s3] sm:$0x1]
        %v2903 = vld [vmem:[%s4] sm:$0x1]
        %v2904 = vsel %vm1032, %v2899, 0.0
        %2905 = vadd.xlane.f32.xlu0 %v2904
        %v2906 = vpop.xlane.xlu0 %2905
        %v2907 = vmul.f32 %v2906, %v1036
        %v2908 = vsub.f32 %v2899, %v2907
        %v2909 = vmul.f32 %v2908, %v2908
        %v2910 = vsel %vm1032, %v2909, 0.0
        %2911 = vadd.xlane.f32.xlu0 %v2910
        %v2912 = vpop.xlane.xlu0 %2911
        %v2913 = vmul.f32 %v2912, %v1036
        %v2914 = vadd.f32 %v2913, 1e-05
        %v2915 = vrsqrt.pop %v2914
        %v2916 = vmul.f32 %v2908, %v2915
        %v2918 = vlaneseq
        %v2919 = vshrl.u32 %v2918, 7
        %v2920 = vsub.s32 0, %v2919
        %v2921 = vrot.slane %v2902, %v2920
        %v2923 = vmul.f32 %v2916, %v2921
        %v2925 = vlaneseq
        %v2926 = vshrl.u32 %v2925, 7
        %v2927 = vsub.s32 0, %v2926
        %v2928 = vrot.slane %v2903, %v2927
        %v2930 = vadd.f32 %v2923, %v2928
        %v2931 = vadd.f32 %v1029, %v2930
        %v2932 = vld [vmem:[%s5] sm:$0x1]
        %v2933 = vld [vmem:[%s6] sm:$0x1]
        %v2934 = vsel %vm1032, %v2931, 0.0
        %2935 = vadd.xlane.f32.xlu0 %v2934
        %v2936 = vpop.xlane.xlu0 %2935
        %v2937 = vmul.f32 %v2936, %v1036
        %v2938 = vsub.f32 %v2931, %v2937
        %v2939 = vmul.f32 %v2938, %v2938
        %v2940 = vsel %vm1032, %v2939, 0.0
        %2941 = vadd.xlane.f32.xlu0 %v2940
        %v2942 = vpop.xlane.xlu0 %2941
        %v2943 = vmul.f32 %v2942, %v1036
        %v2944 = vadd.f32 %v2943, 1e-05
        %v2945 = vrsqrt.pop %v2944
        %v2946 = vmul.f32 %v2938, %v2945
        %v2948 = vlaneseq
        %v2949 = vshrl.u32 %v2948, 7
        %v2950 = vsub.s32 0, %v2949
        %v2951 = vrot.slane %v2932, %v2950
        %v2953 = vmul.f32 %v2946, %v2951
        %v2955 = vlaneseq
        %v2956 = vshrl.u32 %v2955, 7
        %v2957 = vsub.s32 0, %v2956
        %v2958 = vrot.slane %v2933, %v2957
        %v2960 = vadd.f32 %v2953, %v2958
        %v2961 = vld [vmem:[%s13] sm:$0xff]
        %v2962 = vld [vmem:[%s13 + $0x8] sm:$0xff]
        %v2963 = vld [vmem:[%s13 + $0x10] sm:$0xff]
        %v2964 = vld [vmem:[%s13 + $0x18] sm:$0xff]
        %v2965 = vld [vmem:[%s13 + $0x20] sm:$0xff]
        %v2966 = vld [vmem:[%s13 + $0x28] sm:$0xff]
        %v2967 = vld [vmem:[%s13 + $0x30] sm:$0xff]
        %v2968 = vld [vmem:[%s13 + $0x38] sm:$0xff]
        %v2970 = vsel %vm1032, %v2960, 0
        %2972 = vmatprep.subr.mxu0 %v2962
        %2973 = vmatpush1.msra.mxu0 %v2961
        %2974 = vmatprep.subr.mxu0 %v2964
        %2975 = vmatpush1.msra.mxu0 %v2963
        %2976 = vmatprep.subr.mxu0 %v2966
        %2977 = vmatpush1.msra.mxu0 %v2965
        %2978 = vmatprep.subr.mxu0 %v2968
        %2979 = vmatpush1.msra.mxu0 %v2967
        %2980 = vmatprep.subr.mxu0 0.0
        %2981 = vmatpush1.msra.mxu0 0.0
        %2982 = vmatprep.subr.mxu0 0.0
        %2983 = vmatpush1.msra.mxu0 0.0
        %2984 = vmatprep.subr.mxu0 0.0
        %2985 = vmatpush1.msra.mxu0 0.0
        %2986 = vmatprep.subr.mxu0 0.0
        %2987 = vmatpush1.msra.mxu0 0.0
        %2988 = vmatprep.subr.mxu0 0.0
        %2989 = vmatpush1.msra.mxu0 0.0
        %2990 = vmatprep.subr.mxu0 0.0
        %2991 = vmatpush1.msra.mxu0 0.0
        %2992 = vmatprep.subr.mxu0 0.0
        %2993 = vmatpush1.msra.mxu0 0.0
        %2994 = vmatprep.subr.mxu0 0.0
        %2995 = vmatpush1.msra.mxu0 0.0
        %2996 = vmatprep.subr.mxu0 0.0
        %2997 = vmatpush1.msra.mxu0 0.0
        %2998 = vmatprep.subr.mxu0 0.0
        %2999 = vmatpush1.msra.mxu0 0.0
        %3000 = vmatprep.subr.mxu0 0.0
        %3001 = vmatpush1.msra.mxu0 0.0
        %3002 = vmatprep.subr.mxu0 0.0
        %3003 = vmatpush1.msra.mxu0 0.0
        %3004 = vmatprep.subr.mxu0 0.0
        %3005 = vmatpush1.msra.mxu0 0.0
        %3006 = vmatprep.subr.mxu0 0.0
        %3007 = vmatpush1.msra.mxu0 0.0
        %3008 = vmatprep.subr.mxu0 0.0
        %3009 = vmatpush1.msra.mxu0 0.0
        %3010 = vmatprep.subr.mxu0 0.0
        %3011 = vmatpush1.msra.mxu0 0.0
        %3012 = vmatprep.subr.mxu0 0.0
        %3013 = vmatpush1.msra.mxu0 0.0
        %3014 = vmatprep.subr.mxu0 0.0
        %3015 = vmatpush1.msra.mxu0 0.0
        %3016 = vmatprep.subr.mxu0 0.0
        %3017 = vmatpush1.msra.mxu0 0.0
        %3018 = vmatprep.subr.mxu0 0.0
        %3019 = vmatpush1.msra.mxu0 0.0
        %3020 = vmatprep.subr.mxu0 0.0
        %3021 = vmatpush1.msra.mxu0 0.0
        %3022 = vmatprep.subr.mxu0 0.0
        %3023 = vmatpush1.msra.mxu0 0.0
        %3024 = vmatprep.subr.mxu0 0.0
        %3025 = vmatpush1.msra.mxu0 0.0
        %3026 = vmatprep.subr.mxu0 0.0
        %3027 = vmatpush1.msra.mxu0 0.0
        %3028 = vmatprep.subr.mxu0 0.0
        %3029 = vmatpush1.msra.mxu0 0.0
        %3030 = vmatprep.subr.mxu0 0.0
        %3031 = vmatpush1.msra.mxu0 0.0
        %3032 = vmatprep.subr.mxu0 0.0
        %3033 = vmatpush1.msra.mxu0 0.0
        %3034 = vmatprep.subr.mxu0 0.0
        %3035 = vmatpush1.msra.mxu0 0.0
        %3036 = vmatprep.mubr.f32.mxu0 0.0
        %3037 = vmatmul.mubr.f32.gmra.mrb[0].mxu0 %v2970
        %v3038 = vpop.f32.mrb[0].mxu0
        %v3039 = vadd.f32 0.0, %v3038
        %v3040 = vpop.f32.mrb[0].mxu0
        %v3041 = vadd.f32 0.0, %v3040
        %3042 = vdwg.mxu0
        %v3043 = vxor.u32 %v3041, 2147483648
        %v3044 = vmul.f32 %v3043, 1.442695
        %v3045 = vpow.pop %v3044
        %v3046 = vadd.f32 %v3045, 1.0
        %v3047 = vrcp.pop %v3046
        %v3048 = vmul.f32 1.0, %v3047
        %v3049 = vmul.f32 %v3041, %v3048
        %v3050 = vmul.f32 %v3049, %v3039
        %v3051 = vld [vmem:[%s7] sm:$0x1]
        %v3052 = vld [vmem:[%s8] sm:$0x1]
        %3053 = vadd.xlane.f32.xlu0 %v3050
        %v3054 = vpop.xlane.xlu0 %3053
        %v3055 = vrcp.pop 128.0
        %v3056 = vmul.f32 %v3054, %v3055
        %v3057 = vsub.f32 %v3050, %v3056
        %v3058 = vmul.f32 %v3057, %v3057
        %3059 = vadd.xlane.f32.xlu0 %v3058
        %v3060 = vpop.xlane.xlu0 %3059
        %v3061 = vmul.f32 %v3060, %v3055
        %v3062 = vadd.f32 %v3061, 1e-05
        %v3063 = vrsqrt.pop %v3062
        %v3064 = vmul.f32 %v3057, %v3063
        %v3066 = vlaneseq
        %v3067 = vshrl.u32 %v3066, 7
        %v3068 = vsub.s32 0, %v3067
        %v3069 = vrot.slane %v3051, %v3068
        %v3071 = vmul.f32 %v3064, %v3069
        %v3073 = vlaneseq
        %v3074 = vshrl.u32 %v3073, 7
        %v3075 = vsub.s32 0, %v3074
        %v3076 = vrot.slane %v3052, %v3075
        %v3078 = vadd.f32 %v3071, %v3076
        %v3079 = vld [vmem:[%s14] sm:$0xff]
        %v3080 = vld [vmem:[%s14 + $0x8] sm:$0xff]
        %v3081 = vld [vmem:[%s14 + $0x10] sm:$0xff]
        %v3082 = vld [vmem:[%s14 + $0x18] sm:$0xff]
        %v3083 = vld [vmem:[%s14 + $0x20] sm:$0xff]
        %v3084 = vld [vmem:[%s14 + $0x28] sm:$0xff]
        %v3085 = vld [vmem:[%s14 + $0x30] sm:$0xff]
        %v3086 = vld [vmem:[%s14 + $0x38] sm:$0xff]
        %v3087 = vld [vmem:[%s14 + $0x40] sm:$0xff]
        %v3088 = vld [vmem:[%s14 + $0x48] sm:$0xff]
        %v3089 = vld [vmem:[%s14 + $0x50] sm:$0xff]
        %v3090 = vld [vmem:[%s14 + $0x58] sm:$0xff]
        %v3091 = vld [vmem:[%s14 + $0x60] sm:$0xff]
        %v3092 = vld [vmem:[%s14 + $0x68] sm:$0xff]
        %v3093 = vld [vmem:[%s14 + $0x70] sm:$0xff]
        %v3094 = vld [vmem:[%s14 + $0x78] sm:$0xff]
        %3095 = vmatprep.subr.mxu0 0.0
        %3096 = vmatpush1.msra.mxu0 %v3079
        %3097 = vmatprep.subr.mxu0 0.0
        %3098 = vmatpush1.msra.mxu0 %v3080
        %3099 = vmatprep.subr.mxu0 0.0
        %3100 = vmatpush1.msra.mxu0 %v3081
        %3101 = vmatprep.subr.mxu0 0.0
        %3102 = vmatpush1.msra.mxu0 %v3082
        %3103 = vmatprep.subr.mxu0 0.0
        %3104 = vmatpush1.msra.mxu0 %v3083
        %3105 = vmatprep.subr.mxu0 0.0
        %3106 = vmatpush1.msra.mxu0 %v3084
        %3107 = vmatprep.subr.mxu0 0.0
        %3108 = vmatpush1.msra.mxu0 %v3085
        %3109 = vmatprep.subr.mxu0 0.0
        %3110 = vmatpush1.msra.mxu0 %v3086
        %3111 = vmatprep.subr.mxu0 0.0
        %3112 = vmatpush1.msra.mxu0 %v3087
        %3113 = vmatprep.subr.mxu0 0.0
        %3114 = vmatpush1.msra.mxu0 %v3088
        %3115 = vmatprep.subr.mxu0 0.0
        %3116 = vmatpush1.msra.mxu0 %v3089
        %3117 = vmatprep.subr.mxu0 0.0
        %3118 = vmatpush1.msra.mxu0 %v3090
        %3119 = vmatprep.subr.mxu0 0.0
        %3120 = vmatpush1.msra.mxu0 %v3091
        %3121 = vmatprep.subr.mxu0 0.0
        %3122 = vmatpush1.msra.mxu0 %v3092
        %3123 = vmatprep.subr.mxu0 0.0
        %3124 = vmatpush1.msra.mxu0 %v3093
        %3125 = vmatprep.subr.mxu0 0.0
        %3126 = vmatpush1.msra.mxu0 %v3094
        %3127 = vmatprep.subr.mxu0 0.0
        %3128 = vmatpush1.msra.mxu0 0.0
        %3129 = vmatprep.subr.mxu0 0.0
        %3130 = vmatpush1.msra.mxu0 0.0
        %3131 = vmatprep.subr.mxu0 0.0
        %3132 = vmatpush1.msra.mxu0 0.0
        %3133 = vmatprep.subr.mxu0 0.0
        %3134 = vmatpush1.msra.mxu0 0.0
        %3135 = vmatprep.subr.mxu0 0.0
        %3136 = vmatpush1.msra.mxu0 0.0
        %3137 = vmatprep.subr.mxu0 0.0
        %3138 = vmatpush1.msra.mxu0 0.0
        %3139 = vmatprep.subr.mxu0 0.0
        %3140 = vmatpush1.msra.mxu0 0.0
        %3141 = vmatprep.subr.mxu0 0.0
        %3142 = vmatpush1.msra.mxu0 0.0
        %3143 = vmatprep.subr.mxu0 0.0
        %3144 = vmatpush1.msra.mxu0 0.0
        %3145 = vmatprep.subr.mxu0 0.0
        %3146 = vmatpush1.msra.mxu0 0.0
        %3147 = vmatprep.subr.mxu0 0.0
        %3148 = vmatpush1.msra.mxu0 0.0
        %3149 = vmatprep.subr.mxu0 0.0
        %3150 = vmatpush1.msra.mxu0 0.0
        %3151 = vmatprep.subr.mxu0 0.0
        %3152 = vmatpush1.msra.mxu0 0.0
        %3153 = vmatprep.subr.mxu0 0.0
        %3154 = vmatpush1.msra.mxu0 0.0
        %3155 = vmatprep.subr.mxu0 0.0
        %3156 = vmatpush1.msra.mxu0 0.0
        %3157 = vmatprep.subr.mxu0 0.0
        %3158 = vmatpush1.msra.mxu0 0.0
        %3159 = vmatprep.mubr.f32.mxu0 0.0
        %3160 = vmatmul.mubr.f32.gmra.mrb[0].mxu0 %v3078
        %v3161 = vpop.f32.mrb[0].mxu0
        %v3162 = vadd.f32 0.0, %v3161
        %v3163 = vpop.f32.mrb[0].mxu0
        %3164 = vdwg.mxu0
        %v3165 = vadd.f32 %v2931, %v3162
        %3166 = vst.msk [vmem:[%s538] sm:$0xff] %vm1032, %v3165
        %s3167 = sand.u32 %s375, 1
        %s3168 = scalar_lea.sflag [#allocation6], %s3167
        %s3169 = sand.u32 %s375, 1
        %s3170 = smul.addr %s3169, 8
        %s3171 = scalar_lea.vmem [#allocation9], %s3170
        // Predicated region
        $region100: #{tpu_custom_call.1} parent=79 // pred_check
          %p3172 = pneg %p385
        $region101: #{tpu_custom_call.1} parent=79 // pred_check_branch
          %3174 = sbr.rel (%p3172) target = $region103
        $region102: #{tpu_custom_call.1} parent=79 // pred_region
          %s3176 = ssub.s32 128, 128
          %3177 = vsyncadd %s3168, %s3176
          %s3178 = sadd.s32 %s38, %s37
          %s3179 = smul.addr %s3178, 128
          %s3180 = scalar_lea.hbm %s15, %s3179
          %s3182 = sshll.u32 %s3171, 4
          %s3183 = int_to_ptr.vmem [resolvable:$true] %s3182
          %3185 = dma.vmem_to_hbm [thread:$0]  %s3183, 128, %s3180, %s3168
        $region103: #{tpu_custom_call.1} parent=79 // pred_fallthru
          _
      $region80: #{tpu_custom_call.1} parent=5 // pred_fallthru
        _
      %p3186 = scmp.le.s32.totalorder 2, %s28
      // Predicated region
      $region104: #{tpu_custom_call.1} parent=5 // pred_check
        %p3187 = pneg %p3186
      $region105: #{tpu_custom_call.1} parent=5 // pred_check_branch
        %3189 = sbr.rel (%p3187) target = $region107
      $region106: #{tpu_custom_call.1} parent=5 // pred_region
        %s3190 = ssub.s32 %s28, 2
        // Predicated region
        $region108: #{tpu_custom_call.1} parent=106 // pred_check
          %p3191 = pneg %p391
        $region109: #{tpu_custom_call.1} parent=106 // pred_check_branch
          %3193 = sbr.rel (%p3191) target = $region111
        $region110: #{tpu_custom_call.1} parent=106 // pred_region
          %s3194 = sand.u32 %s376, 1
          %s3195 = scalar_lea.sflag [#allocation6], %s3194
          %s3196 = sand.u32 %s376, 1
          %s3197 = smul.addr %s3196, 8
          %s3198 = scalar_lea.vmem [#allocation9], %s3197
          %3199 = dma.done %s3195, 128
        $region111: #{tpu_custom_call.1} parent=106 // pred_fallthru
          _
      $region107: #{tpu_custom_call.1} parent=5 // pred_fallthru
        _
    $region6: #{tpu_custom_call.1} parent=1 // loop_footer
      %s32 = sadd.s32 1, %s28
    $region7: #{tpu_custom_call.1} parent=1 // loop_footer_branch
      %27 = sbr.rel target = $region3
    $region8: #{tpu_custom_call.1} parent=1 // loop_exit
      _
    %3200 = vsyncpa [#allocation5], 1
    %s3201 = scalar_lea.sflag [#allocation5], 1
    %3202 = vsyncpa %s3201, 1
    %3203 = vsyncpa [#allocation8], 1
    %3204 = vsyncpa [#allocation6], 1
    %s3205 = scalar_lea.sflag [#allocation6], 1
    %3206 = vsyncpa %s3205, 1

</llo_original>
